<compile_context>
chip_gen: v7x
topology: tpu7x:2x2x1
jax: 0.10.0
libtpu: 0.0.40
codegen_flags: <defaults>
</compile_context>

<pallas_src>
import functools

import jax
import jax.numpy as jnp
from jax.experimental import pallas as pl
from jax.experimental.pallas import tpu as pltpu


def _round_up(x, m):
    return (x + m - 1) // m * m


def _cdiv(a, b):
    return -(-a // b)


def _vmem_block_bytes(shape, itemsize):
    """Rough VMEM footprint of one block (sublane-pad dim -2 to 8, lane-pad dim -1 to 128)."""
    s = list(shape)
    s[-1] = _round_up(s[-1], 128)
    if len(s) >= 2:
        s[-2] = _round_up(s[-2], 8)
    n = 1
    for d in s:
        n *= d
    return n * itemsize


def _plan_vmem_bytes(tile_h, Wp, Cin, cout_tile, KH, KW, in_item, out_item):
    """Estimate the per-generation VMEM need for a given H-tile size."""
    out_rows = tile_h * Wp
    slab_rows = (tile_h + KH - 1) * Wp + (KW - 1)
    return (2 * _vmem_block_bytes((slab_rows, Cin), in_item)            # slab (double-buffered)
            + 2 * _vmem_block_bytes((KH * KW, Cin, cout_tile), in_item)  # weights
            + 2 * _vmem_block_bytes((1, cout_tile), 4)                   # bias
            + 2 * _vmem_block_bytes((out_rows, cout_tile), out_item)     # output
            + _vmem_block_bytes((out_rows, cout_tile), 4)                # f32 accumulator
            + KH * KW * _vmem_block_bytes((out_rows, Cin), in_item))     # shifted tap copies


def _make_conv_kernel(KH, KW, Wp, out_rows, cout_tile):
    """Per-(cout-block, row-tile) kernel.

    Refs:
      slab_ref: (1, slab_rows, Cin)       padded-input slab, rows = h*Wp + w
      w_ref:    (KH*KW, Cin, cout_tile)   per-tap weights
      b_ref:    (1, cout_tile)            bias (f32)
      o_ref:    (1, out_rows, cout_tile)  output tile (lane-dense store)

    Tap (kh, kw) is the static slice slab[kh*Wp+kw : kh*Wp+kw + out_rows]
    (positions j >= W inside each padded row are garbage columns computed for
    layout regularity and trimmed in the wrapper).
    """
    def kernel(slab_ref, w_ref, b_ref, o_ref):
        x2d = slab_ref[0]                       # (slab_rows, Cin)
        w = w_ref[...]                          # (KH*KW, Cin, cout_tile)
        acc = jnp.zeros((out_rows, cout_tile), jnp.float32)
        for kh in range(KH):
            for kw in range(KW):
                off = kh * Wp + kw              # static sublane offset
                tap = x2d[off:off + out_rows, :]
                acc = acc + jnp.dot(tap, w[kh * KW + kw],
                                    preferred_element_type=jnp.float32)
        acc = acc + b_ref[...]                  # bias broadcast over rows (f32)
        o_ref[0] = jnp.maximum(acc, 0.0).astype(o_ref.dtype)   # ReLU
    return kernel


@functools.partial(
    jax.jit,
    static_argnames=("kernel_size", "stride", "matmul_dtype",
                     "target_rows", "vmem_budget_bytes"))
def _block_forward_nhwc(x_nhwc, weight_oihw, bias, *, kernel_size, stride,
                        matmul_dtype, target_rows, vmem_budget_bytes):
    assert stride == 1, "only stride=1 implemented (module default)"
    assert kernel_size % 2 == 1, "odd kernel_size only"
    padding = (1 * (kernel_size - 1) + 1 - stride) // 2

    N, H, W, Cin = x_nhwc.shape
    Cout = weight_oihw.shape[0]
    KH = KW = kernel_size
    out_dtype = x_nhwc.dtype
    in_item = jnp.dtype(matmul_dtype).itemsize
    out_item = jnp.dtype(out_dtype).itemsize
    Wp = W + 2 * padding

    # ---- Cout (lane) tiling: cout_tile is a multiple of 128 -----------------
    Cout_pad = _round_up(Cout, 128)
    if Cout_pad <= 256:
        cout_tile = Cout_pad
    elif Cout_pad % 256 == 0:
        cout_tile = 256
    else:
        cout_tile = 128
    n_co = Cout_pad // cout_tile

    # ---- H (row) tiling: big tiles amortize per-step overhead but must fit --
    # ---- the per-generation VMEM budget (64 MiB total on v7x). --------------
    tile_h = max(1, min(H, target_rows // Wp))
    if N == 1 and H > 1:
        tile_h = min(tile_h, _cdiv(H, 2))        # keep >=2 parallel tiles (v7x megacore)
    while tile_h > 1 and _plan_vmem_bytes(tile_h, Wp, Cin, cout_tile, KH, KW,
                                          in_item, out_item) > vmem_budget_bytes:
        tile_h = max(1, (tile_h + 1) // 2)
    n_h = _cdiv(H, tile_h)
    H_fit = n_h * tile_h

    out_rows = tile_h * Wp
    slab_h = tile_h + (KH - 1)
    slab_rows = slab_h * Wp + (KW - 1)           # +KW-1 tail: wrap-reads of the
                                                 # discarded pad columns stay in-bounds

    # ---- wrapper glue (plain JAX, fused under jit) ---------------------------
    # Cast BEFORE any relayout so the slab pass moves bf16, not f32.
    x = x_nhwc.astype(matmul_dtype)
    x_pad = jnp.pad(x, ((0, 0),
                        (padding, padding + (H_fit - H)),
                        (padding, padding),
                        (0, 0)))

    # Halo-duplicated H slabs: input inflation only (tile_h+KH-1)/tile_h.
    slabs = jnp.stack(
        [x_pad[:, t * tile_h:t * tile_h + slab_h] for t in range(n_h)], axis=1)
    T = N * n_h
    slabs = slabs.reshape(T, slab_h * Wp, Cin)
    slabs = jnp.pad(slabs, ((0, 0), (0, KW - 1), (0, 0)))

    # OIHW -> (KH*KW, Cin, Cout_pad): one (Cin, Cout) slab per tap.
    w_taps = jnp.transpose(weight_oihw, (2, 3, 1, 0)).reshape(KH * KW, Cin, Cout)
    w_taps = jnp.pad(w_taps, ((0, 0), (0, 0), (0, Cout_pad - Cout))).astype(matmul_dtype)
    b_p = jnp.pad(bias.astype(jnp.float32), (0, Cout_pad - Cout)).reshape(1, Cout_pad)

    need = _plan_vmem_bytes(tile_h, Wp, Cin, cout_tile, KH, KW, in_item, out_item)
    vmem_limit = int(min(max(need + (8 << 20), 32 << 20), 100 << 20))
    vmem_limit = max(vmem_limit, need + (4 << 20))   # never clamp below true need

    kernel = _make_conv_kernel(KH, KW, Wp, out_rows, cout_tile)

    flops = 2 * T * out_rows * KH * KW * Cin * Cout_pad
    bytes_accessed = (slabs.size * in_item + w_taps.size * in_item
                      + b_p.size * 4 + T * out_rows * Cout_pad * out_item)

    out_flat = pl.pallas_call(
        kernel,
        out_shape=jax.ShapeDtypeStruct((T, out_rows, Cout_pad), out_dtype),
        grid_spec=pltpu.PrefetchScalarGridSpec(
            num_scalar_prefetch=0,
            grid=(n_co, T),   # cout blocks outer -> weight block constant over inner loop
            in_specs=[
                pl.BlockSpec((1, slab_rows, Cin), lambda co, t: (t, 0, 0)),
                # TODO(synk): pipeline_mode=pl.Buffered(1) on the two constant-index
                #             blocks below would halve their resident VMEM footprint.
                pl.BlockSpec((KH * KW, Cin, cout_tile), lambda co, t: (0, 0, co)),
                pl.BlockSpec((1, cout_tile), lambda co, t: (0, co)),
            ],
            out_specs=pl.BlockSpec((1, out_rows, cout_tile), lambda co, t: (t, 0, co)),
        ),
        compiler_params=pltpu.CompilerParams(
            dimension_semantics=("parallel", "parallel"),
            vmem_limit_bytes=vmem_limit,
        ),
        cost_estimate=pl.CostEstimate(
            flops=flops, transcendentals=0, bytes_accessed=bytes_accessed),
    )(slabs, w_taps, b_p)

    # Trim garbage pad columns / Cout pad lanes / H pad rows.
    out = out_flat.reshape(N, n_h, tile_h, Wp, Cout_pad)[:, :, :, :W, :Cout]
    out = out.reshape(N, H_fit, W, Cout)[:, :H]
    return out


def block_forward(x_nchw, weight_oihw, bias, *, kernel_size=3, stride=1,
                  matmul_dtype=jnp.bfloat16, target_rows=1024,
                  vmem_budget_bytes=40 << 20):
    """Pallas equivalent of Block.forward for the default config
    (bn=False, bias=True, act='relu', stride=1).  NCHW interface."""
    x_nhwc = jnp.transpose(x_nchw, (0, 2, 3, 1))
    out_nhwc = _block_forward_nhwc(
        x_nhwc, weight_oihw, bias, kernel_size=kernel_size, stride=stride,
        matmul_dtype=matmul_dtype, target_rows=target_rows,
        vmem_budget_bytes=vmem_budget_bytes)
    return jnp.transpose(out_nhwc, (0, 3, 1, 2))


def _reference_forward(x_nchw, weight_oihw, bias, *, compute_dtype=jnp.float32):
    """Pure-JAX reference (same semantics as the PyTorch module); optional
    bf16-input variant for checking the bf16 MXU fast path."""
    out = jax.lax.conv_general_dilated(
        x_nchw.astype(compute_dtype), weight_oihw.astype(compute_dtype),
        window_strides=(1, 1), padding=((1, 1), (1, 1)),
        dimension_numbers=("NCHW", "OIHW", "NCHW"),
        preferred_element_type=jnp.float32,
    )
    out = out + bias.reshape(1, -1, 1, 1).astype(jnp.float32)
    return jnp.maximum(out, 0.0).astype(x_nchw.dtype)


if __name__ == "__main__":
    # Small shapes consistent with Block(in_dim=4, out_dim=8, kernel_size=3)
    N, Cin, Cout, H, W = 2, 4, 8, 16, 16
    K = 3

    key = jax.random.PRNGKey(0)
    kx, kw, kb = jax.random.split(key, 3)

    x = jax.random.normal(kx, (N, Cin, H, W), dtype=jnp.float32)

    # Deterministic init mimicking PyTorch Conv2d defaults (uniform in +-1/sqrt(fan_in)).
    fan_in = Cin * K * K
    bound = 1.0 / (fan_in ** 0.5)
    weight = jax.random.uniform(kw, (Cout, Cin, K, K), jnp.float32, -bound, bound)
    bias = jax.random.uniform(kb, (Cout,), jnp.float32, -bound, bound)

    # 1) Exact-semantics check: f32 matmul path vs f32 reference conv.
    out_f32 = jax.block_until_ready(
        block_forward(x, weight, bias, matmul_dtype=jnp.float32))
    ref_f32 = jax.block_until_ready(_reference_forward(x, weight, bias))
    assert out_f32.shape == (N, Cout, H, W)
    assert jnp.allclose(out_f32, ref_f32, atol=1e-5, rtol=1e-5), \
        "f32 path mismatch vs reference conv"

    # 2) Fast path: bf16 MXU inputs + f32 accumulation, checked against a
    #    reference that also rounds inputs to bf16 (same math, tight match).
    out_bf16 = jax.block_until_ready(block_forward(x, weight, bias))
    ref_bf16 = jax.block_until_ready(
        _reference_forward(x, weight, bias, compute_dtype=jnp.bfloat16))
    assert out_bf16.shape == (N, Cout, H, W)
    assert jnp.allclose(out_bf16, ref_bf16, atol=1e-2, rtol=1e-2), \
        "bf16 path mismatch vs bf16 reference conv"

    print("KERNEL_OK")
</pallas_src>

<mosaic_0001>
module attributes {stable_mosaic.version = 11 : i64} {
  func.func @kernel(%arg0: i32, %arg1: i32, %arg2: memref<1x326x4xf32, #tpu.memory_space<vmem>>, %arg3: memref<9x4x128xf32, #tpu.memory_space<vmem>>, %arg4: memref<1x128xf32, #tpu.memory_space<vmem>>, %arg5: memref<1x288x128xf32, #tpu.memory_space<vmem>>) attributes {dimension_semantics = [#tpu.dimension_semantics<parallel>, #tpu.dimension_semantics<parallel>], iteration_bounds = array<i64: 1, 2>, scalar_prefetch = 0 : i64, scratch_operands = 0 : i64, tpu.core_type = #tpu.core_type<tc>, window_params = [{transform_indices = @transform_0, window_bounds = array<i64: 1, 326, 4>}, {transform_indices = @transform_1, window_bounds = array<i64: 9, 4, 128>}, {transform_indices = @transform_2, window_bounds = array<i64: 1, 128>}, {transform_indices = @transform_3, window_bounds = array<i64: 1, 288, 128>}]} {
    %c0 = arith.constant 0 : index
    %c0_0 = arith.constant 0 : index
    %c0_1 = arith.constant 0 : index
    %0 = vector.load %arg2[%c0, %c0_0, %c0_1] : memref<1x326x4xf32, #tpu.memory_space<vmem>>, vector<1x326x4xf32>
    %1 = vector.shape_cast %0 : vector<1x326x4xf32> to vector<326x4xf32>
    %c0_2 = arith.constant 0 : index
    %c0_3 = arith.constant 0 : index
    %c0_4 = arith.constant 0 : index
    %2 = vector.load %arg3[%c0_2, %c0_3, %c0_4] : memref<9x4x128xf32, #tpu.memory_space<vmem>>, vector<9x4x128xf32>
    %cst = arith.constant 0.000000e+00 : f32
    %3 = vector.broadcast %cst : f32 to vector<288x128xf32>
    %4 = vector.extract_strided_slice %1 {offsets = [0, 0], sizes = [288, 4], strides = [1, 1]} : vector<326x4xf32> to vector<288x4xf32>
    %5 = vector.extract_strided_slice %2 {offsets = [0, 0, 0], sizes = [1, 4, 128], strides = [1, 1, 1]} : vector<9x4x128xf32> to vector<1x4x128xf32>
    %6 = vector.shape_cast %5 : vector<1x4x128xf32> to vector<4x128xf32>
    %cst_5 = arith.constant dense<0.000000e+00> : vector<288x128xf32>
    %7 = tpu.matmul %4, %6, %cst_5 {dimension_numbers = #tpu.dot_dimension_numbers<[1], [0], [0], [1], [0, 0, 1, 1], [], []>} : vector<288x4xf32>, vector<4x128xf32>, vector<288x128xf32> -> vector<288x128xf32>
    %8 = arith.addf %3, %7 : vector<288x128xf32>
    %9 = vector.extract_strided_slice %1 {offsets = [1, 0], sizes = [288, 4], strides = [1, 1]} : vector<326x4xf32> to vector<288x4xf32>
    %10 = vector.extract_strided_slice %2 {offsets = [1, 0, 0], sizes = [1, 4, 128], strides = [1, 1, 1]} : vector<9x4x128xf32> to vector<1x4x128xf32>
    %11 = vector.shape_cast %10 : vector<1x4x128xf32> to vector<4x128xf32>
    %cst_6 = arith.constant dense<0.000000e+00> : vector<288x128xf32>
    %12 = tpu.matmul %9, %11, %cst_6 {dimension_numbers = #tpu.dot_dimension_numbers<[1], [0], [0], [1], [0, 0, 1, 1], [], []>} : vector<288x4xf32>, vector<4x128xf32>, vector<288x128xf32> -> vector<288x128xf32>
    %13 = arith.addf %8, %12 : vector<288x128xf32>
    %14 = vector.extract_strided_slice %1 {offsets = [2, 0], sizes = [288, 4], strides = [1, 1]} : vector<326x4xf32> to vector<288x4xf32>
    %15 = vector.extract_strided_slice %2 {offsets = [2, 0, 0], sizes = [1, 4, 128], strides = [1, 1, 1]} : vector<9x4x128xf32> to vector<1x4x128xf32>
    %16 = vector.shape_cast %15 : vector<1x4x128xf32> to vector<4x128xf32>
    %cst_7 = arith.constant dense<0.000000e+00> : vector<288x128xf32>
    %17 = tpu.matmul %14, %16, %cst_7 {dimension_numbers = #tpu.dot_dimension_numbers<[1], [0], [0], [1], [0, 0, 1, 1], [], []>} : vector<288x4xf32>, vector<4x128xf32>, vector<288x128xf32> -> vector<288x128xf32>
    %18 = arith.addf %13, %17 : vector<288x128xf32>
    %19 = vector.extract_strided_slice %1 {offsets = [18, 0], sizes = [288, 4], strides = [1, 1]} : vector<326x4xf32> to vector<288x4xf32>
    %20 = vector.extract_strided_slice %2 {offsets = [3, 0, 0], sizes = [1, 4, 128], strides = [1, 1, 1]} : vector<9x4x128xf32> to vector<1x4x128xf32>
    %21 = vector.shape_cast %20 : vector<1x4x128xf32> to vector<4x128xf32>
    %cst_8 = arith.constant dense<0.000000e+00> : vector<288x128xf32>
    %22 = tpu.matmul %19, %21, %cst_8 {dimension_numbers = #tpu.dot_dimension_numbers<[1], [0], [0], [1], [0, 0, 1, 1], [], []>} : vector<288x4xf32>, vector<4x128xf32>, vector<288x128xf32> -> vector<288x128xf32>
    %23 = arith.addf %18, %22 : vector<288x128xf32>
    %24 = vector.extract_strided_slice %1 {offsets = [19, 0], sizes = [288, 4], strides = [1, 1]} : vector<326x4xf32> to vector<288x4xf32>
    %25 = vector.extract_strided_slice %2 {offsets = [4, 0, 0], sizes = [1, 4, 128], strides = [1, 1, 1]} : vector<9x4x128xf32> to vector<1x4x128xf32>
    %26 = vector.shape_cast %25 : vector<1x4x128xf32> to vector<4x128xf32>
    %cst_9 = arith.constant dense<0.000000e+00> : vector<288x128xf32>
    %27 = tpu.matmul %24, %26, %cst_9 {dimension_numbers = #tpu.dot_dimension_numbers<[1], [0], [0], [1], [0, 0, 1, 1], [], []>} : vector<288x4xf32>, vector<4x128xf32>, vector<288x128xf32> -> vector<288x128xf32>
    %28 = arith.addf %23, %27 : vector<288x128xf32>
    %29 = vector.extract_strided_slice %1 {offsets = [20, 0], sizes = [288, 4], strides = [1, 1]} : vector<326x4xf32> to vector<288x4xf32>
    %30 = vector.extract_strided_slice %2 {offsets = [5, 0, 0], sizes = [1, 4, 128], strides = [1, 1, 1]} : vector<9x4x128xf32> to vector<1x4x128xf32>
    %31 = vector.shape_cast %30 : vector<1x4x128xf32> to vector<4x128xf32>
    %cst_10 = arith.constant dense<0.000000e+00> : vector<288x128xf32>
    %32 = tpu.matmul %29, %31, %cst_10 {dimension_numbers = #tpu.dot_dimension_numbers<[1], [0], [0], [1], [0, 0, 1, 1], [], []>} : vector<288x4xf32>, vector<4x128xf32>, vector<288x128xf32> -> vector<288x128xf32>
    %33 = arith.addf %28, %32 : vector<288x128xf32>
    %34 = vector.extract_strided_slice %1 {offsets = [36, 0], sizes = [288, 4], strides = [1, 1]} : vector<326x4xf32> to vector<288x4xf32>
    %35 = vector.extract_strided_slice %2 {offsets = [6, 0, 0], sizes = [1, 4, 128], strides = [1, 1, 1]} : vector<9x4x128xf32> to vector<1x4x128xf32>
    %36 = vector.shape_cast %35 : vector<1x4x128xf32> to vector<4x128xf32>
    %cst_11 = arith.constant dense<0.000000e+00> : vector<288x128xf32>
    %37 = tpu.matmul %34, %36, %cst_11 {dimension_numbers = #tpu.dot_dimension_numbers<[1], [0], [0], [1], [0, 0, 1, 1], [], []>} : vector<288x4xf32>, vector<4x128xf32>, vector<288x128xf32> -> vector<288x128xf32>
    %38 = arith.addf %33, %37 : vector<288x128xf32>
    %39 = vector.extract_strided_slice %1 {offsets = [37, 0], sizes = [288, 4], strides = [1, 1]} : vector<326x4xf32> to vector<288x4xf32>
    %40 = vector.extract_strided_slice %2 {offsets = [7, 0, 0], sizes = [1, 4, 128], strides = [1, 1, 1]} : vector<9x4x128xf32> to vector<1x4x128xf32>
    %41 = vector.shape_cast %40 : vector<1x4x128xf32> to vector<4x128xf32>
    %cst_12 = arith.constant dense<0.000000e+00> : vector<288x128xf32>
    %42 = tpu.matmul %39, %41, %cst_12 {dimension_numbers = #tpu.dot_dimension_numbers<[1], [0], [0], [1], [0, 0, 1, 1], [], []>} : vector<288x4xf32>, vector<4x128xf32>, vector<288x128xf32> -> vector<288x128xf32>
    %43 = arith.addf %38, %42 : vector<288x128xf32>
    %44 = vector.extract_strided_slice %1 {offsets = [38, 0], sizes = [288, 4], strides = [1, 1]} : vector<326x4xf32> to vector<288x4xf32>
    %45 = vector.extract_strided_slice %2 {offsets = [8, 0, 0], sizes = [1, 4, 128], strides = [1, 1, 1]} : vector<9x4x128xf32> to vector<1x4x128xf32>
    %46 = vector.shape_cast %45 : vector<1x4x128xf32> to vector<4x128xf32>
    %cst_13 = arith.constant dense<0.000000e+00> : vector<288x128xf32>
    %47 = tpu.matmul %44, %46, %cst_13 {dimension_numbers = #tpu.dot_dimension_numbers<[1], [0], [0], [1], [0, 0, 1, 1], [], []>} : vector<288x4xf32>, vector<4x128xf32>, vector<288x128xf32> -> vector<288x128xf32>
    %48 = arith.addf %43, %47 : vector<288x128xf32>
    %c0_14 = arith.constant 0 : index
    %c0_15 = arith.constant 0 : index
    %49 = vector.load %arg4[%c0_14, %c0_15] : memref<1x128xf32, #tpu.memory_space<vmem>>, vector<1x128xf32>
    %50 = vector.broadcast %49 : vector<1x128xf32> to vector<288x128xf32>
    %51 = arith.addf %48, %50 : vector<288x128xf32>
    %cst_16 = arith.constant 0.000000e+00 : f32
    %52 = vector.broadcast %cst_16 : f32 to vector<288x128xf32>
    %53 = arith.maximumf %51, %52 : vector<288x128xf32>
    %c0_17 = arith.constant 0 : index
    %c0_18 = arith.constant 0 : index
    %c0_19 = arith.constant 0 : index
    %54 = vector.load %arg5[%c0_17, %c0_18, %c0_19] : memref<1x288x128xf32, #tpu.memory_space<vmem>>, vector<1x288x128xf32>
    %55 = vector.shape_cast %54 : vector<1x288x128xf32> to vector<288x128xf32>
    %56 = vector.shape_cast %53 : vector<288x128xf32> to vector<1x288x128xf32>
    tpu.vector_store %arg5[%c0_17, %c0_18, %c0_19], %56 {strides = array<i32>} : memref<1x288x128xf32, #tpu.memory_space<vmem>>, vector<1x288x128xf32>,
    return
  }
  func.func @transform_0(%arg0: i32, %arg1: i32) -> (i32, i32, i32) {
    %c0_i32 = arith.constant 0 : i32
    %c0_i32_0 = arith.constant 0 : i32
    %c0_i32_1 = arith.constant 0 : i32
    return %arg1, %c0_i32, %c0_i32_0 : i32, i32, i32
  }
  func.func @transform_1(%arg0: i32, %arg1: i32) -> (i32, i32, i32) {
    %c0_i32 = arith.constant 0 : i32
    %c0_i32_0 = arith.constant 0 : i32
    %c0_i32_1 = arith.constant 0 : i32
    return %c0_i32, %c0_i32_0, %arg0 : i32, i32, i32
  }
  func.func @transform_2(%arg0: i32, %arg1: i32) -> (i32, i32) {
    %c0_i32 = arith.constant 0 : i32
    %c0_i32_0 = arith.constant 0 : i32
    return %c0_i32, %arg0 : i32, i32
  }
  func.func @transform_3(%arg0: i32, %arg1: i32) -> (i32, i32, i32) {
    %c0_i32 = arith.constant 0 : i32
    %c0_i32_0 = arith.constant 0 : i32
    return %arg1, %c0_i32, %arg0 : i32, i32, i32
  }
}

</mosaic_0001>

<llo_original>
// kernel: _block_forward_nhwc.1
$region0: #{_block_forward_nhwc.1}
  #allocation0 [shape = 'u32[]', space=smem, size = 0x4, offset = 0x4, fixed_abs, tag = 'smem constant byte address 0x4 - core index']
  #allocation1 [shape = 'u32[144,128]{1,0:T(1,128)}', space=vmem, size = 0x12000, scoped, tag = 'internal scratch']
  %s0 = inlined_call_operand.vmem [shape: f32[2,326,4], index: 0, kind: input, shape index: {}]
  %s1 = inlined_call_operand.vmem [shape: f32[9,4,128], index: 1, kind: input, shape index: {}]
  %s2 = inlined_call_operand.vmem [shape: f32[1,128], index: 2, kind: input, shape index: {}]
  %s3 = inlined_call_operand.vmem [shape: f32[2,288,128], index: 3, kind: output, shape index: {}]
  %s4 = sld [smem:[#allocation0]]
  $region45: #{_block_forward_nhwc.1} parent=0
    _
  %s6 = ssub.s32 1, %s4
  %s7 = scalar_select 0, %s6, %s4
  loop: start=0, step=1, limit=4
  $region2: #{_block_forward_nhwc.1} parent=0 // loop_pre_header
    _
  $region3: #{_block_forward_nhwc.1} parent=0 // loop_header
    %s9 = sphi 0, %s13
    %p10 = scmp.ge.s32.totalorder %s9, 4
    %s16 = sphi 0, %s28
    %s17 = sphi 0, %s24
    %s18 = sphi 0, %s16
    %s19 = sphi 0, %s17
    %s20 = sphi 0, %s18
    %s21 = sphi 0, %s19
    %s31 = sphi 0, %s33
    %s34 = sphi 0, %s31
    %s35 = sphi 0, %s34
    %s51 = sphi 0, %s35
    %s57 = sphi 0, %s59
    %s60 = sphi 0, %s57
    %s61 = sphi 0, %s60
    %s77 = sphi 0, %s61
    %s83 = sphi 0, %s85
    %s86 = sphi 0, %s83
    %s87 = sphi 0, %s86
    %s103 = sphi 0, %s87
    %s111 = sphi 0, %s113
    %s114 = sphi 0, %s111
    %s115 = sphi 0, %s114
    %s131 = sphi 0, %s115
  $region4: #{_block_forward_nhwc.1} parent=0 // loop_header_branch
    %12 = sbr.rel (%p10) target = $region8
  $region5: #{_block_forward_nhwc.1} parent=0 // loop_body
    %s14 = ssub.s32 %s9, 1
    %s15 = ssub.s32 %s9, 2
    %s22 = sadd.s32 1, %s17
    %p23 = scmp.ge.s32.totalorder %s22, 2
    %s24 = scalar_select %p23, 0, %s22
    %s25 = sadd.s32 1, %s16
    %s26 = scalar_select %p23, %s25, %s16
    %p27 = scmp.ge.s32.totalorder %s26, 1
    %s28 = scalar_select %p27, 0, %s26
    %s29 = ssub.s32 %s17, %s24
    %p30 = scmp.eq.s32.totalorder %s29, 0
    %s32 = sadd.s32 %s31, 1
    %s33 = scalar_select %p30, %s31, %s32
    %p36 = pneg %p30
    %p37 = scmp.eq.s32.totalorder %s9, 1
    %p38 = por %p36, %p37
    %p39 = scmp.ne.s32.totalorder %s31, %s34
    %p40 = scmp.eq.s32.totalorder %s9, 0
    %p41 = por %p39, %p40
    %p42 = scmp.ne.s32.totalorder %s31, %s34
    %p43 = scmp.eq.s32.totalorder %s14, 1
    %p44 = por %p42, %p43
    %p45 = scmp.ne.s32.totalorder %s34, %s35
    %p46 = scmp.eq.s32.totalorder %s14, 0
    %p47 = por %p45, %p46
    %p48 = scmp.ne.s32.totalorder %s34, %s35
    %p49 = scmp.eq.s32.totalorder %s15, 1
    %p50 = por %p48, %p49
    %p52 = scmp.ne.s32.totalorder %s35, %s51
    %p53 = scmp.eq.s32.totalorder %s15, 0
    %p54 = por %p52, %p53
    %s55 = ssub.s32 %s16, %s28
    %p56 = scmp.eq.s32.totalorder %s55, 0
    %s58 = sadd.s32 %s57, 1
    %s59 = scalar_select %p56, %s57, %s58
    %p62 = pneg %p56
    %p63 = scmp.eq.s32.totalorder %s9, 1
    %p64 = por %p62, %p63
    %p65 = scmp.ne.s32.totalorder %s57, %s60
    %p66 = scmp.eq.s32.totalorder %s9, 0
    %p67 = por %p65, %p66
    %p68 = scmp.ne.s32.totalorder %s57, %s60
    %p69 = scmp.eq.s32.totalorder %s14, 1
    %p70 = por %p68, %p69
    %p71 = scmp.ne.s32.totalorder %s60, %s61
    %p72 = scmp.eq.s32.totalorder %s14, 0
    %p73 = por %p71, %p72
    %p74 = scmp.ne.s32.totalorder %s60, %s61
    %p75 = scmp.eq.s32.totalorder %s15, 1
    %p76 = por %p74, %p75
    %p78 = scmp.ne.s32.totalorder %s61, %s77
    %p79 = scmp.eq.s32.totalorder %s15, 0
    %p80 = por %p78, %p79
    %s81 = ssub.s32 %s16, %s28
    %p82 = scmp.eq.s32.totalorder %s81, 0
    %s84 = sadd.s32 %s83, 1
    %s85 = scalar_select %p82, %s83, %s84
    %p88 = pneg %p82
    %p89 = scmp.eq.s32.totalorder %s9, 1
    %p90 = por %p88, %p89
    %p91 = scmp.ne.s32.totalorder %s83, %s86
    %p92 = scmp.eq.s32.totalorder %s9, 0
    %p93 = por %p91, %p92
    %p94 = scmp.ne.s32.totalorder %s83, %s86
    %p95 = scmp.eq.s32.totalorder %s14, 1
    %p96 = por %p94, %p95
    %p97 = scmp.ne.s32.totalorder %s86, %s87
    %p98 = scmp.eq.s32.totalorder %s14, 0
    %p99 = por %p97, %p98
    %p100 = scmp.ne.s32.totalorder %s86, %s87
    %p101 = scmp.eq.s32.totalorder %s15, 1
    %p102 = por %p100, %p101
    %p104 = scmp.ne.s32.totalorder %s87, %s103
    %p105 = scmp.eq.s32.totalorder %s15, 0
    %p106 = por %p104, %p105
    %s107 = ssub.s32 %s17, %s24
    %s108 = ssub.s32 %s16, %s28
    %s109 = sor.u32 %s107, %s108
    %p110 = scmp.eq.s32.totalorder %s109, 0
    %s112 = sadd.s32 %s111, 1
    %s113 = scalar_select %p110, %s111, %s112
    %p116 = pneg %p110
    %p117 = scmp.eq.s32.totalorder %s9, 1
    %p118 = por %p116, %p117
    %p119 = scmp.ne.s32.totalorder %s111, %s114
    %p120 = scmp.eq.s32.totalorder %s9, 0
    %p121 = por %p119, %p120
    %p122 = scmp.ne.s32.totalorder %s111, %s114
    %p123 = scmp.eq.s32.totalorder %s14, 1
    %p124 = por %p122, %p123
    %p125 = scmp.ne.s32.totalorder %s114, %s115
    %p126 = scmp.eq.s32.totalorder %s14, 0
    %p127 = por %p125, %p126
    %p128 = scmp.ne.s32.totalorder %s114, %s115
    %p129 = scmp.eq.s32.totalorder %s15, 1
    %p130 = por %p128, %p129
    %p132 = scmp.ne.s32.totalorder %s115, %s131
    %p133 = scmp.eq.s32.totalorder %s15, 0
    %p134 = por %p132, %p133
    %p135 = scmp.le.s32.totalorder 1, %s9
    %p136 = scmp.lt.s32.totalorder %s9, 3
    %p137 = pnand %p135, %p136
    %p138 = pneg %p137
    // Predicated region
    $region9: #{_block_forward_nhwc.1} parent=5 // pred_check
      _
    $region10: #{_block_forward_nhwc.1} parent=5 // pred_check_branch
      %140 = sbr.rel (%p137) target = $region12
    $region11: #{_block_forward_nhwc.1} parent=5 // pred_region
      %s141 = ssub.s32 %s9, 1
      // Predicated region
      $region13: #{_block_forward_nhwc.1} parent=11 // pred_check
        %p142 = pneg %p73
      $region14: #{_block_forward_nhwc.1} parent=11 // pred_check_branch
        %144 = sbr.rel (%p142) target = $region16
      $region15: #{_block_forward_nhwc.1} parent=11 // pred_region
        %p145 = scmp.lt.s32.totalorder %s18, 0
        %s146 = scalar_select %p145, %s18, 0
        %s147 = smul.addr %s146, 4
        %s148 = scalar_lea.vmem %s1, %s147
      $region16: #{_block_forward_nhwc.1} parent=11 // pred_fallthru
        _
      // Predicated region
      $region17: #{_block_forward_nhwc.1} parent=11 // pred_check
        %p149 = pneg %p99
      $region18: #{_block_forward_nhwc.1} parent=11 // pred_check_branch
        %151 = sbr.rel (%p149) target = $region20
      $region19: #{_block_forward_nhwc.1} parent=11 // pred_region
        %p152 = scmp.lt.s32.totalorder %s18, 0
        %s153 = scalar_select %p152, %s18, 0
        %s154 = scalar_lea.vmem %s2, %s153
      $region20: #{_block_forward_nhwc.1} parent=11 // pred_fallthru
        _
    $region12: #{_block_forward_nhwc.1} parent=5 // pred_fallthru
      _
    %p155 = scmp.lt.s32.totalorder %s9, 2
    // Predicated region
    $region21: #{_block_forward_nhwc.1} parent=5 // pred_check
      %p156 = pneg %p155
    $region22: #{_block_forward_nhwc.1} parent=5 // pred_check_branch
      %158 = sbr.rel (%p156) target = $region24
    $region23: #{_block_forward_nhwc.1} parent=5 // pred_region
      // Predicated region
      $region25: #{_block_forward_nhwc.1} parent=23 // pred_check
        %p159 = pneg %p41
      $region26: #{_block_forward_nhwc.1} parent=23 // pred_check_branch
        %161 = sbr.rel (%p159) target = $region28
      $region27: #{_block_forward_nhwc.1} parent=23 // pred_region
        %p162 = scmp.lt.s32.totalorder %s17, 1
        %s163 = scalar_select %p162, %s17, 1
        %s164 = smul.addr %s163, 41
        %s165 = smul.addr %s164, 8
        %s166 = scalar_lea.vmem %s0, %s165
      $region28: #{_block_forward_nhwc.1} parent=23 // pred_fallthru
        _
    $region24: #{_block_forward_nhwc.1} parent=5 // pred_fallthru
      _
    %p167 = scmp.le.s32.totalorder 1, %s9
    %p168 = scmp.lt.s32.totalorder %s9, 3
    %p169 = pnand %p167, %p168
    %p170 = pneg %p169
    // Predicated region
    $region29: #{_block_forward_nhwc.1} parent=5 // pred_check
      _
    $region30: #{_block_forward_nhwc.1} parent=5 // pred_check_branch
      %172 = sbr.rel (%p169) target = $region32
    $region31: #{_block_forward_nhwc.1} parent=5 // pred_region
      %s173 = ssub.s32 %s9, 1
      %p174 = scmp.lt.s32.totalorder %s19, 1
      %s175 = scalar_select %p174, %s19, 1
      %s176 = smul.addr %s175, 41
      %s177 = smul.addr %s176, 8
      %s178 = scalar_lea.vmem %s0, %s177
      %p179 = pneg %p47
      %p180 = pneg %p44
      %p181 = scmp.lt.s32.totalorder %s18, 0
      %s182 = scalar_select %p181, %s18, 0
      %s183 = smul.addr %s182, 4
      %s184 = scalar_lea.vmem %s1, %s183
      %p185 = pneg %p73
      %p186 = pneg %p70
      %p187 = scmp.lt.s32.totalorder %s18, 0
      %s188 = scalar_select %p187, %s18, 0
      %s189 = scalar_lea.vmem %s2, %s188
      %p190 = pneg %p99
      %p191 = pneg %p96
      %p192 = pneg %p127
      %p193 = pneg %p124
      %p194 = scmp.lt.s32.totalorder %s19, 1
      %s195 = scalar_select %p194, %s19, 1
      %p196 = scmp.lt.s32.totalorder %s18, 0
      %s197 = scalar_select %p196, %s18, 0
      %s198 = smul.addr %s195, 36
      %s199 = sadd.s32 %s197, %s198
      %s200 = smul.addr %s199, 8
      %s201 = scalar_lea.vmem %s3, %s200
      %p202 = scmp.lt.s32.totalorder %s19, 1
      %s203 = scalar_select %p202, %s19, 1
      %s204 = smul.addr %s203, 41
      %s205 = smul.addr %s204, 8
      %s206 = scalar_lea.vmem %s0, %s205
      %p207 = scmp.lt.s32.totalorder %s18, 0
      %s208 = scalar_select %p207, %s18, 0
      %s209 = smul.addr %s208, 4
      %s210 = scalar_lea.vmem %s1, %s209
      %p211 = scmp.lt.s32.totalorder %s18, 0
      %s212 = scalar_select %p211, %s18, 0
      %s213 = scalar_lea.vmem %s2, %s212
      %p214 = scmp.lt.s32.totalorder %s19, 1
      %s215 = scalar_select %p214, %s19, 1
      %p216 = scmp.lt.s32.totalorder %s18, 0
      %s217 = scalar_select %p216, %s18, 0
      %s218 = smul.addr %s215, 36
      %s219 = sadd.s32 %s217, %s218
      %s220 = smul.addr %s219, 8
      %s221 = scalar_lea.vmem %s3, %s220
      %v222 = vld [vmem:[%s206] sm:$0xff]
      %v223 = vld [vmem:[%s206 + $0x8] sm:$0xff]
      %v224 = vld [vmem:[%s206 + $0x10] sm:$0xff]
      %v225 = vld [vmem:[%s206 + $0x18] sm:$0xff]
      %v226 = vld [vmem:[%s206 + $0x20] sm:$0xff]
      %v227 = vld [vmem:[%s206 + $0x28] sm:$0xff]
      %v228 = vld [vmem:[%s206 + $0x30] sm:$0xff]
      %v229 = vld [vmem:[%s206 + $0x38] sm:$0xff]
      %v230 = vld [vmem:[%s206 + $0x40] sm:$0xff]
      %v231 = vld [vmem:[%s206 + $0x48] sm:$0xff]
      %v232 = vld [vmem:[%s206 + $0x50] sm:$0xff]
      %v233 = vld [vmem:[%s206 + $0x58] sm:$0xff]
      %v234 = vld [vmem:[%s206 + $0x60] sm:$0xff]
      %v235 = vld [vmem:[%s206 + $0x68] sm:$0xff]
      %v236 = vld [vmem:[%s206 + $0x70] sm:$0xff]
      %v237 = vld [vmem:[%s206 + $0x78] sm:$0xff]
      %v238 = vld [vmem:[%s206 + $0x80] sm:$0xff]
      %v239 = vld [vmem:[%s206 + $0x88] sm:$0xff]
      %v240 = vld [vmem:[%s206 + $0x90] sm:$0xff]
      %v241 = vld [vmem:[%s206 + $0x98] sm:$0xff]
      %v242 = vld [vmem:[%s206 + $0xa0] sm:$0xff]
      %v243 = vld [vmem:[%s206 + $0xa8] sm:$0xff]
      %v244 = vld [vmem:[%s206 + $0xb0] sm:$0xff]
      %v245 = vld [vmem:[%s206 + $0xb8] sm:$0xff]
      %v246 = vld [vmem:[%s206 + $0xc0] sm:$0xff]
      %v247 = vld [vmem:[%s206 + $0xc8] sm:$0xff]
      %v248 = vld [vmem:[%s206 + $0xd0] sm:$0xff]
      %v249 = vld [vmem:[%s206 + $0xd8] sm:$0xff]
      %v250 = vld [vmem:[%s206 + $0xe0] sm:$0xff]
      %v251 = vld [vmem:[%s206 + $0xe8] sm:$0xff]
      %v252 = vld [vmem:[%s206 + $0xf0] sm:$0xff]
      %v253 = vld [vmem:[%s206 + $0xf8] sm:$0xff]
      %v254 = vld [vmem:[%s206 + $0x100] sm:$0xff]
      %v255 = vld [vmem:[%s206 + $0x108] sm:$0xff]
      %v256 = vld [vmem:[%s206 + $0x110] sm:$0xff]
      %v257 = vld [vmem:[%s206 + $0x118] sm:$0xff]
      %v258 = vld [vmem:[%s206 + $0x120] sm:$0xff]
      %v259 = vld [vmem:[%s206 + $0x128] sm:$0xff]
      %v260 = vld [vmem:[%s206 + $0x130] sm:$0xff]
      %v261 = vld [vmem:[%s206 + $0x138] sm:$0xff]
      %v262 = vld [vmem:[%s206 + $0x140] sm:$0x3f]
      %v263 = vld [vmem:[%s210] sm:$0xf]
      %v264 = vld [vmem:[%s210 + $0x4] sm:$0xf]
      %v265 = vld [vmem:[%s210 + $0x8] sm:$0xf]
      %v266 = vld [vmem:[%s210 + $0xc] sm:$0xf]
      %v267 = vld [vmem:[%s210 + $0x10] sm:$0xf]
      %v268 = vld [vmem:[%s210 + $0x14] sm:$0xf]
      %v269 = vld [vmem:[%s210 + $0x18] sm:$0xf]
      %v270 = vld [vmem:[%s210 + $0x1c] sm:$0xf]
      %v271 = vld [vmem:[%s210 + $0x20] sm:$0xf]
      %vm309 = vcmask 1046528
      %v310 = vrot.slane %v222, 1
      %v311 = vrot.slane %v223, 1
      %v312 = vsel %vm309, %v310, %v311
      %v313 = vrot.slane %v224, 1
      %v314 = vsel %vm309, %v311, %v313
      %v315 = vrot.slane %v225, 1
      %v316 = vsel %vm309, %v313, %v315
      %v317 = vrot.slane %v226, 1
      %v318 = vsel %vm309, %v315, %v317
      %v319 = vrot.slane %v227, 1
      %v320 = vsel %vm309, %v317, %v319
      %v321 = vrot.slane %v228, 1
      %v322 = vsel %vm309, %v319, %v321
      %v323 = vrot.slane %v229, 1
      %v324 = vsel %vm309, %v321, %v323
      %v325 = vrot.slane %v230, 1
      %v326 = vsel %vm309, %v323, %v325
      %v327 = vrot.slane %v231, 1
      %v328 = vsel %vm309, %v325, %v327
      %v329 = vrot.slane %v232, 1
      %v330 = vsel %vm309, %v327, %v329
      %v331 = vrot.slane %v233, 1
      %v332 = vsel %vm309, %v329, %v331
      %v333 = vrot.slane %v234, 1
      %v334 = vsel %vm309, %v331, %v333
      %v335 = vrot.slane %v235, 1
      %v336 = vsel %vm309, %v333, %v335
      %v337 = vrot.slane %v236, 1
      %v338 = vsel %vm309, %v335, %v337
      %v339 = vrot.slane %v237, 1
      %v340 = vsel %vm309, %v337, %v339
      %v341 = vrot.slane %v238, 1
      %v342 = vsel %vm309, %v339, %v341
      %v343 = vrot.slane %v239, 1
      %v344 = vsel %vm309, %v341, %v343
      %v345 = vrot.slane %v240, 1
      %v346 = vsel %vm309, %v343, %v345
      %v347 = vrot.slane %v241, 1
      %v348 = vsel %vm309, %v345, %v347
      %v349 = vrot.slane %v242, 1
      %v350 = vsel %vm309, %v347, %v349
      %v351 = vrot.slane %v243, 1
      %v352 = vsel %vm309, %v349, %v351
      %v353 = vrot.slane %v244, 1
      %v354 = vsel %vm309, %v351, %v353
      %v355 = vrot.slane %v245, 1
      %v356 = vsel %vm309, %v353, %v355
      %v357 = vrot.slane %v246, 1
      %v358 = vsel %vm309, %v355, %v357
      %v359 = vrot.slane %v247, 1
      %v360 = vsel %vm309, %v357, %v359
      %v361 = vrot.slane %v248, 1
      %v362 = vsel %vm309, %v359, %v361
      %v363 = vrot.slane %v249, 1
      %v364 = vsel %vm309, %v361, %v363
      %v365 = vrot.slane %v250, 1
      %v366 = vsel %vm309, %v363, %v365
      %v367 = vrot.slane %v251, 1
      %v368 = vsel %vm309, %v365, %v367
      %v369 = vrot.slane %v252, 1
      %v370 = vsel %vm309, %v367, %v369
      %v371 = vrot.slane %v253, 1
      %v372 = vsel %vm309, %v369, %v371
      %v373 = vrot.slane %v254, 1
      %v374 = vsel %vm309, %v371, %v373
      %v375 = vrot.slane %v255, 1
      %v376 = vsel %vm309, %v373, %v375
      %v377 = vrot.slane %v256, 1
      %v378 = vsel %vm309, %v375, %v377
      %v379 = vrot.slane %v257, 1
      %v380 = vsel %vm309, %v377, %v379
      %v381 = vrot.slane %v258, 1
      %v382 = vsel %vm309, %v379, %v381
      %vm383 = vcmask 31744
      %v384 = vsel %vm383, %v312, 0
      %v386 = vsel %vm383, %v314, 0
      %v388 = vsel %vm383, %v316, 0
      %v390 = vsel %vm383, %v318, 0
      %v392 = vsel %vm383, %v320, 0
      %v394 = vsel %vm383, %v322, 0
      %v396 = vsel %vm383, %v324, 0
      %v398 = vsel %vm383, %v326, 0
      %v400 = vsel %vm383, %v328, 0
      %v402 = vsel %vm383, %v330, 0
      %v404 = vsel %vm383, %v332, 0
      %v406 = vsel %vm383, %v334, 0
      %v408 = vsel %vm383, %v336, 0
      %v410 = vsel %vm383, %v338, 0
      %v412 = vsel %vm383, %v340, 0
      %v414 = vsel %vm383, %v342, 0
      %v416 = vsel %vm383, %v344, 0
      %v418 = vsel %vm383, %v346, 0
      %v420 = vsel %vm383, %v348, 0
      %v422 = vsel %vm383, %v350, 0
      %v424 = vsel %vm383, %v352, 0
      %v426 = vsel %vm383, %v354, 0
      %v428 = vsel %vm383, %v356, 0
      %v430 = vsel %vm383, %v358, 0
      %v432 = vsel %vm383, %v360, 0
      %v434 = vsel %vm383, %v362, 0
      %v436 = vsel %vm383, %v364, 0
      %v438 = vsel %vm383, %v366, 0
      %v440 = vsel %vm383, %v368, 0
      %v442 = vsel %vm383, %v370, 0
      %v444 = vsel %vm383, %v372, 0
      %v446 = vsel %vm383, %v374, 0
      %v448 = vsel %vm383, %v376, 0
      %v450 = vsel %vm383, %v378, 0
      %v452 = vsel %vm383, %v380, 0
      %v454 = vsel %vm383, %v382, 0
      %vm456 = vcmask 1043456
      %v458 = vsel %vm456, %v264, 0
      %460 = vmatprep.subr.mxu0 0.0
      %461 = vmatpush1.msra.mxu0 %v458
      %462 = vmatprep.subr.mxu0 0.0
      %463 = vmatpush1.msra.mxu0 0.0
      %464 = vmatprep.subr.mxu0 0.0
      %465 = vmatpush1.msra.mxu0 0.0
      %466 = vmatprep.subr.mxu0 0.0
      %467 = vmatpush1.msra.mxu0 0.0
      %468 = vmatprep.subr.mxu0 0.0
      %469 = vmatpush1.msra.mxu0 0.0
      %470 = vmatprep.subr.mxu0 0.0
      %471 = vmatpush1.msra.mxu0 0.0
      %472 = vmatprep.subr.mxu0 0.0
      %473 = vmatpush1.msra.mxu0 0.0
      %474 = vmatprep.subr.mxu0 0.0
      %475 = vmatpush1.msra.mxu0 0.0
      %476 = vmatprep.subr.mxu0 0.0
      %477 = vmatpush1.msra.mxu0 0.0
      %478 = vmatprep.subr.mxu0 0.0
      %479 = vmatpush1.msra.mxu0 0.0
      %480 = vmatprep.subr.mxu0 0.0
      %481 = vmatpush1.msra.mxu0 0.0
      %482 = vmatprep.subr.mxu0 0.0
      %483 = vmatpush1.msra.mxu0 0.0
      %484 = vmatprep.subr.mxu0 0.0
      %485 = vmatpush1.msra.mxu0 0.0
      %486 = vmatprep.subr.mxu0 0.0
      %487 = vmatpush1.msra.mxu0 0.0
      %488 = vmatprep.subr.mxu0 0.0
      %489 = vmatpush1.msra.mxu0 0.0
      %490 = vmatprep.subr.mxu0 0.0
      %491 = vmatpush1.msra.mxu0 0.0
      %492 = vmatprep.subr.mxu0 0.0
      %493 = vmatpush1.msra.mxu0 0.0
      %494 = vmatprep.subr.mxu0 0.0
      %495 = vmatpush1.msra.mxu0 0.0
      %496 = vmatprep.subr.mxu0 0.0
      %497 = vmatpush1.msra.mxu0 0.0
      %498 = vmatprep.subr.mxu0 0.0
      %499 = vmatpush1.msra.mxu0 0.0
      %500 = vmatprep.subr.mxu0 0.0
      %501 = vmatpush1.msra.mxu0 0.0
      %502 = vmatprep.subr.mxu0 0.0
      %503 = vmatpush1.msra.mxu0 0.0
      %504 = vmatprep.subr.mxu0 0.0
      %505 = vmatpush1.msra.mxu0 0.0
      %506 = vmatprep.subr.mxu0 0.0
      %507 = vmatpush1.msra.mxu0 0.0
      %508 = vmatprep.subr.mxu0 0.0
      %509 = vmatpush1.msra.mxu0 0.0
      %510 = vmatprep.subr.mxu0 0.0
      %511 = vmatpush1.msra.mxu0 0.0
      %512 = vmatprep.subr.mxu0 0.0
      %513 = vmatpush1.msra.mxu0 0.0
      %514 = vmatprep.subr.mxu0 0.0
      %515 = vmatpush1.msra.mxu0 0.0
      %516 = vmatprep.subr.mxu0 0.0
      %517 = vmatpush1.msra.mxu0 0.0
      %518 = vmatprep.subr.mxu0 0.0
      %519 = vmatpush1.msra.mxu0 0.0
      %520 = vmatprep.subr.mxu0 0.0
      %521 = vmatpush1.msra.mxu0 0.0
      %522 = vmatprep.subr.mxu0 0.0
      %523 = vmatpush1.msra.mxu0 0.0
      %524 = vmatprep.mubr.f32.mxu0 0.0
      %525 = vmatmul.mubr.f32.gmra.mrb[0].mxu0 %v384
      %v526 = vpop.f32.mrb[0].mxu0
      %v527 = vadd.f32 0.0, %v526
      %v528 = vpop.f32.mrb[0].mxu0
      %529 = vmatprep.mubr.f32.mxu0 0.0
      %530 = vmatmul.mubr.f32.gmra.mrb[0].mxu0 %v386
      %v531 = vpop.f32.mrb[0].mxu0
      %v532 = vadd.f32 0.0, %v531
      %v533 = vpop.f32.mrb[0].mxu0
      %534 = vmatprep.mubr.f32.mxu0 0.0
      %535 = vmatmul.mubr.f32.gmra.mrb[0].mxu0 %v388
      %v536 = vpop.f32.mrb[0].mxu0
      %v537 = vadd.f32 0.0, %v536
      %v538 = vpop.f32.mrb[0].mxu0
      %539 = vmatprep.mubr.f32.mxu0 0.0
      %540 = vmatmul.mubr.f32.gmra.mrb[0].mxu0 %v390
      %v541 = vpop.f32.mrb[0].mxu0
      %v542 = vadd.f32 0.0, %v541
      %v543 = vpop.f32.mrb[0].mxu0
      %544 = vmatprep.mubr.f32.mxu0 0.0
      %545 = vmatmul.mubr.f32.gmra.mrb[0].mxu0 %v392
      %v546 = vpop.f32.mrb[0].mxu0
      %v547 = vadd.f32 0.0, %v546
      %v548 = vpop.f32.mrb[0].mxu0
      %549 = vmatprep.mubr.f32.mxu0 0.0
      %550 = vmatmul.mubr.f32.gmra.mrb[0].mxu0 %v394
      %v551 = vpop.f32.mrb[0].mxu0
      %v552 = vadd.f32 0.0, %v551
      %v553 = vpop.f32.mrb[0].mxu0
      %554 = vmatprep.mubr.f32.mxu0 0.0
      %555 = vmatmul.mubr.f32.gmra.mrb[0].mxu0 %v396
      %v556 = vpop.f32.mrb[0].mxu0
      %v557 = vadd.f32 0.0, %v556
      %v558 = vpop.f32.mrb[0].mxu0
      %559 = vmatprep.mubr.f32.mxu0 0.0
      %560 = vmatmul.mubr.f32.gmra.mrb[0].mxu0 %v398
      %v561 = vpop.f32.mrb[0].mxu0
      %v562 = vadd.f32 0.0, %v561
      %v563 = vpop.f32.mrb[0].mxu0
      %564 = vmatprep.mubr.f32.mxu0 0.0
      %565 = vmatmul.mubr.f32.gmra.mrb[0].mxu0 %v400
      %v566 = vpop.f32.mrb[0].mxu0
      %v567 = vadd.f32 0.0, %v566
      %v568 = vpop.f32.mrb[0].mxu0
      %569 = vmatprep.mubr.f32.mxu0 0.0
      %570 = vmatmul.mubr.f32.gmra.mrb[0].mxu0 %v402
      %v571 = vpop.f32.mrb[0].mxu0
      %v572 = vadd.f32 0.0, %v571
      %v573 = vpop.f32.mrb[0].mxu0
      %574 = vmatprep.mubr.f32.mxu0 0.0
      %575 = vmatmul.mubr.f32.gmra.mrb[0].mxu0 %v404
      %v576 = vpop.f32.mrb[0].mxu0
      %v577 = vadd.f32 0.0, %v576
      %v578 = vpop.f32.mrb[0].mxu0
      %579 = vmatprep.mubr.f32.mxu0 0.0
      %580 = vmatmul.mubr.f32.gmra.mrb[0].mxu0 %v406
      %v581 = vpop.f32.mrb[0].mxu0
      %v582 = vadd.f32 0.0, %v581
      %v583 = vpop.f32.mrb[0].mxu0
      %584 = vmatprep.mubr.f32.mxu0 0.0
      %585 = vmatmul.mubr.f32.gmra.mrb[0].mxu0 %v408
      %v586 = vpop.f32.mrb[0].mxu0
      %v587 = vadd.f32 0.0, %v586
      %v588 = vpop.f32.mrb[0].mxu0
      %589 = vmatprep.mubr.f32.mxu0 0.0
      %590 = vmatmul.mubr.f32.gmra.mrb[0].mxu0 %v410
      %v591 = vpop.f32.mrb[0].mxu0
      %v592 = vadd.f32 0.0, %v591
      %v593 = vpop.f32.mrb[0].mxu0
      %594 = vmatprep.mubr.f32.mxu0 0.0
      %595 = vmatmul.mubr.f32.gmra.mrb[0].mxu0 %v412
      %v596 = vpop.f32.mrb[0].mxu0
      %v597 = vadd.f32 0.0, %v596
      %v598 = vpop.f32.mrb[0].mxu0
      %599 = vmatprep.mubr.f32.mxu0 0.0
      %600 = vmatmul.mubr.f32.gmra.mrb[0].mxu0 %v414
      %v601 = vpop.f32.mrb[0].mxu0
      %v602 = vadd.f32 0.0, %v601
      %v603 = vpop.f32.mrb[0].mxu0
      %604 = vmatprep.mubr.f32.mxu0 0.0
      %605 = vmatmul.mubr.f32.gmra.mrb[0].mxu0 %v416
      %v606 = vpop.f32.mrb[0].mxu0
      %v607 = vadd.f32 0.0, %v606
      %v608 = vpop.f32.mrb[0].mxu0
      %609 = vmatprep.mubr.f32.mxu0 0.0
      %610 = vmatmul.mubr.f32.gmra.mrb[0].mxu0 %v418
      %v611 = vpop.f32.mrb[0].mxu0
      %v612 = vadd.f32 0.0, %v611
      %v613 = vpop.f32.mrb[0].mxu0
      %614 = vmatprep.mubr.f32.mxu0 0.0
      %615 = vmatmul.mubr.f32.gmra.mrb[0].mxu0 %v420
      %v616 = vpop.f32.mrb[0].mxu0
      %v617 = vadd.f32 0.0, %v616
      %v618 = vpop.f32.mrb[0].mxu0
      %619 = vmatprep.mubr.f32.mxu0 0.0
      %620 = vmatmul.mubr.f32.gmra.mrb[0].mxu0 %v422
      %v621 = vpop.f32.mrb[0].mxu0
      %v622 = vadd.f32 0.0, %v621
      %v623 = vpop.f32.mrb[0].mxu0
      %624 = vmatprep.mubr.f32.mxu0 0.0
      %625 = vmatmul.mubr.f32.gmra.mrb[0].mxu0 %v424
      %v626 = vpop.f32.mrb[0].mxu0
      %v627 = vadd.f32 0.0, %v626
      %v628 = vpop.f32.mrb[0].mxu0
      %629 = vmatprep.mubr.f32.mxu0 0.0
      %630 = vmatmul.mubr.f32.gmra.mrb[0].mxu0 %v426
      %v631 = vpop.f32.mrb[0].mxu0
      %v632 = vadd.f32 0.0, %v631
      %v633 = vpop.f32.mrb[0].mxu0
      %634 = vmatprep.mubr.f32.mxu0 0.0
      %635 = vmatmul.mubr.f32.gmra.mrb[0].mxu0 %v428
      %v636 = vpop.f32.mrb[0].mxu0
      %v637 = vadd.f32 0.0, %v636
      %v638 = vpop.f32.mrb[0].mxu0
      %639 = vmatprep.mubr.f32.mxu0 0.0
      %640 = vmatmul.mubr.f32.gmra.mrb[0].mxu0 %v430
      %v641 = vpop.f32.mrb[0].mxu0
      %v642 = vadd.f32 0.0, %v641
      %v643 = vpop.f32.mrb[0].mxu0
      %644 = vmatprep.mubr.f32.mxu0 0.0
      %645 = vmatmul.mubr.f32.gmra.mrb[0].mxu0 %v432
      %v646 = vpop.f32.mrb[0].mxu0
      %v647 = vadd.f32 0.0, %v646
      %v648 = vpop.f32.mrb[0].mxu0
      %649 = vmatprep.mubr.f32.mxu0 0.0
      %650 = vmatmul.mubr.f32.gmra.mrb[0].mxu0 %v434
      %v651 = vpop.f32.mrb[0].mxu0
      %v652 = vadd.f32 0.0, %v651
      %v653 = vpop.f32.mrb[0].mxu0
      %654 = vmatprep.mubr.f32.mxu0 0.0
      %655 = vmatmul.mubr.f32.gmra.mrb[0].mxu0 %v436
      %v656 = vpop.f32.mrb[0].mxu0
      %v657 = vadd.f32 0.0, %v656
      %v658 = vpop.f32.mrb[0].mxu0
      %659 = vmatprep.mubr.f32.mxu0 0.0
      %660 = vmatmul.mubr.f32.gmra.mrb[0].mxu0 %v438
      %v661 = vpop.f32.mrb[0].mxu0
      %v662 = vadd.f32 0.0, %v661
      %v663 = vpop.f32.mrb[0].mxu0
      %664 = vmatprep.mubr.f32.mxu0 0.0
      %665 = vmatmul.mubr.f32.gmra.mrb[0].mxu0 %v440
      %v666 = vpop.f32.mrb[0].mxu0
      %v667 = vadd.f32 0.0, %v666
      %v668 = vpop.f32.mrb[0].mxu0
      %669 = vmatprep.mubr.f32.mxu0 0.0
      %670 = vmatmul.mubr.f32.gmra.mrb[0].mxu0 %v442
      %v671 = vpop.f32.mrb[0].mxu0
      %v672 = vadd.f32 0.0, %v671
      %v673 = vpop.f32.mrb[0].mxu0
      %674 = vmatprep.mubr.f32.mxu0 0.0
      %675 = vmatmul.mubr.f32.gmra.mrb[0].mxu0 %v444
      %v676 = vpop.f32.mrb[0].mxu0
      %v677 = vadd.f32 0.0, %v676
      %v678 = vpop.f32.mrb[0].mxu0
      %679 = vmatprep.mubr.f32.mxu0 0.0
      %680 = vmatmul.mubr.f32.gmra.mrb[0].mxu0 %v446
      %v681 = vpop.f32.mrb[0].mxu0
      %v682 = vadd.f32 0.0, %v681
      %v683 = vpop.f32.mrb[0].mxu0
      %684 = vmatprep.mubr.f32.mxu0 0.0
      %685 = vmatmul.mubr.f32.gmra.mrb[0].mxu0 %v448
      %v686 = vpop.f32.mrb[0].mxu0
      %v687 = vadd.f32 0.0, %v686
      %v688 = vpop.f32.mrb[0].mxu0
      %689 = vmatprep.mubr.f32.mxu0 0.0
      %690 = vmatmul.mubr.f32.gmra.mrb[0].mxu0 %v450
      %v691 = vpop.f32.mrb[0].mxu0
      %v692 = vadd.f32 0.0, %v691
      %v693 = vpop.f32.mrb[0].mxu0
      %694 = vmatprep.mubr.f32.mxu0 0.0
      %695 = vmatmul.mubr.f32.gmra.mrb[0].mxu0 %v452
      %v696 = vpop.f32.mrb[0].mxu0
      %v697 = vadd.f32 0.0, %v696
      %v698 = vpop.f32.mrb[0].mxu0
      %699 = vmatprep.mubr.f32.mxu0 0.0
      %700 = vmatmul.mubr.f32.gmra.mrb[0].mxu0 %v454
      %v701 = vpop.f32.mrb[0].mxu0
      %v702 = vadd.f32 0.0, %v701
      %v703 = vpop.f32.mrb[0].mxu0
      %704 = vdwg.mxu0
      %v705 = vsel %vm383, %v222, 0
      %v707 = vsel %vm383, %v223, 0
      %v709 = vsel %vm383, %v224, 0
      %v711 = vsel %vm383, %v225, 0
      %v713 = vsel %vm383, %v226, 0
      %v715 = vsel %vm383, %v227, 0
      %v717 = vsel %vm383, %v228, 0
      %v719 = vsel %vm383, %v229, 0
      %v721 = vsel %vm383, %v230, 0
      %v723 = vsel %vm383, %v231, 0
      %v725 = vsel %vm383, %v232, 0
      %v727 = vsel %vm383, %v233, 0
      %v729 = vsel %vm383, %v234, 0
      %v731 = vsel %vm383, %v235, 0
      %v733 = vsel %vm383, %v236, 0
      %v735 = vsel %vm383, %v237, 0
      %v737 = vsel %vm383, %v238, 0
      %v739 = vsel %vm383, %v239, 0
      %v741 = vsel %vm383, %v240, 0
      %v743 = vsel %vm383, %v241, 0
      %v745 = vsel %vm383, %v242, 0
      %v747 = vsel %vm383, %v243, 0
      %v749 = vsel %vm383, %v244, 0
      %v751 = vsel %vm383, %v245, 0
      %v753 = vsel %vm383, %v246, 0
      %v755 = vsel %vm383, %v247, 0
      %v757 = vsel %vm383, %v248, 0
      %v759 = vsel %vm383, %v249, 0
      %v761 = vsel %vm383, %v250, 0
      %v763 = vsel %vm383, %v251, 0
      %v765 = vsel %vm383, %v252, 0
      %v767 = vsel %vm383, %v253, 0
      %v769 = vsel %vm383, %v254, 0
      %v771 = vsel %vm383, %v255, 0
      %v773 = vsel %vm383, %v256, 0
      %v775 = vsel %vm383, %v257, 0
      %v778 = vsel %vm456, %v263, 0
      %780 = vmatprep.subr.mxu0 0.0
      %781 = vmatpush1.msra.mxu0 %v778
      %782 = vmatprep.subr.mxu0 0.0
      %783 = vmatpush1.msra.mxu0 0.0
      %784 = vmatprep.subr.mxu0 0.0
      %785 = vmatpush1.msra.mxu0 0.0
      %786 = vmatprep.subr.mxu0 0.0
      %787 = vmatpush1.msra.mxu0 0.0
      %788 = vmatprep.subr.mxu0 0.0
      %789 = vmatpush1.msra.mxu0 0.0
      %790 = vmatprep.subr.mxu0 0.0
      %791 = vmatpush1.msra.mxu0 0.0
      %792 = vmatprep.subr.mxu0 0.0
      %793 = vmatpush1.msra.mxu0 0.0
      %794 = vmatprep.subr.mxu0 0.0
      %795 = vmatpush1.msra.mxu0 0.0
      %796 = vmatprep.subr.mxu0 0.0
      %797 = vmatpush1.msra.mxu0 0.0
      %798 = vmatprep.subr.mxu0 0.0
      %799 = vmatpush1.msra.mxu0 0.0
      %800 = vmatprep.subr.mxu0 0.0
      %801 = vmatpush1.msra.mxu0 0.0
      %802 = vmatprep.subr.mxu0 0.0
      %803 = vmatpush1.msra.mxu0 0.0
      %804 = vmatprep.subr.mxu0 0.0
      %805 = vmatpush1.msra.mxu0 0.0
      %806 = vmatprep.subr.mxu0 0.0
      %807 = vmatpush1.msra.mxu0 0.0
      %808 = vmatprep.subr.mxu0 0.0
      %809 = vmatpush1.msra.mxu0 0.0
      %810 = vmatprep.subr.mxu0 0.0
      %811 = vmatpush1.msra.mxu0 0.0
      %812 = vmatprep.subr.mxu0 0.0
      %813 = vmatpush1.msra.mxu0 0.0
      %814 = vmatprep.subr.mxu0 0.0
      %815 = vmatpush1.msra.mxu0 0.0
      %816 = vmatprep.subr.mxu0 0.0
      %817 = vmatpush1.msra.mxu0 0.0
      %818 = vmatprep.subr.mxu0 0.0
      %819 = vmatpush1.msra.mxu0 0.0
      %820 = vmatprep.subr.mxu0 0.0
      %821 = vmatpush1.msra.mxu0 0.0
      %822 = vmatprep.subr.mxu0 0.0
      %823 = vmatpush1.msra.mxu0 0.0
      %824 = vmatprep.subr.mxu0 0.0
      %825 = vmatpush1.msra.mxu0 0.0
      %826 = vmatprep.subr.mxu0 0.0
      %827 = vmatpush1.msra.mxu0 0.0
      %828 = vmatprep.subr.mxu0 0.0
      %829 = vmatpush1.msra.mxu0 0.0
      %830 = vmatprep.subr.mxu0 0.0
      %831 = vmatpush1.msra.mxu0 0.0
      %832 = vmatprep.subr.mxu0 0.0
      %833 = vmatpush1.msra.mxu0 0.0
      %834 = vmatprep.subr.mxu0 0.0
      %835 = vmatpush1.msra.mxu0 0.0
      %836 = vmatprep.subr.mxu0 0.0
      %837 = vmatpush1.msra.mxu0 0.0
      %838 = vmatprep.subr.mxu0 0.0
      %839 = vmatpush1.msra.mxu0 0.0
      %840 = vmatprep.subr.mxu0 0.0
      %841 = vmatpush1.msra.mxu0 0.0
      %842 = vmatprep.subr.mxu0 0.0
      %843 = vmatpush1.msra.mxu0 0.0
      %844 = vmatprep.mubr.f32.mxu0 0.0
      %845 = vmatmul.mubr.f32.gmra.mrb[0].mxu0 %v705
      %v846 = vpop.f32.mrb[0].mxu0
      %v847 = vadd.f32 %v527, %v846
      %v848 = vpop.f32.mrb[0].mxu0
      %849 = vmatprep.mubr.f32.mxu0 0.0
      %850 = vmatmul.mubr.f32.gmra.mrb[0].mxu0 %v707
      %v851 = vpop.f32.mrb[0].mxu0
      %v852 = vadd.f32 %v532, %v851
      %v853 = vpop.f32.mrb[0].mxu0
      %854 = vmatprep.mubr.f32.mxu0 0.0
      %855 = vmatmul.mubr.f32.gmra.mrb[0].mxu0 %v709
      %v856 = vpop.f32.mrb[0].mxu0
      %v857 = vadd.f32 %v537, %v856
      %v858 = vpop.f32.mrb[0].mxu0
      %859 = vmatprep.mubr.f32.mxu0 0.0
      %860 = vmatmul.mubr.f32.gmra.mrb[0].mxu0 %v711
      %v861 = vpop.f32.mrb[0].mxu0
      %v862 = vadd.f32 %v542, %v861
      %v863 = vpop.f32.mrb[0].mxu0
      %864 = vmatprep.mubr.f32.mxu0 0.0
      %865 = vmatmul.mubr.f32.gmra.mrb[0].mxu0 %v713
      %v866 = vpop.f32.mrb[0].mxu0
      %v867 = vadd.f32 %v547, %v866
      %v868 = vpop.f32.mrb[0].mxu0
      %869 = vmatprep.mubr.f32.mxu0 0.0
      %870 = vmatmul.mubr.f32.gmra.mrb[0].mxu0 %v715
      %v871 = vpop.f32.mrb[0].mxu0
      %v872 = vadd.f32 %v552, %v871
      %v873 = vpop.f32.mrb[0].mxu0
      %874 = vmatprep.mubr.f32.mxu0 0.0
      %875 = vmatmul.mubr.f32.gmra.mrb[0].mxu0 %v717
      %v876 = vpop.f32.mrb[0].mxu0
      %v877 = vadd.f32 %v557, %v876
      %v878 = vpop.f32.mrb[0].mxu0
      %879 = vmatprep.mubr.f32.mxu0 0.0
      %880 = vmatmul.mubr.f32.gmra.mrb[0].mxu0 %v719
      %v881 = vpop.f32.mrb[0].mxu0
      %v882 = vadd.f32 %v562, %v881
      %v883 = vpop.f32.mrb[0].mxu0
      %884 = vmatprep.mubr.f32.mxu0 0.0
      %885 = vmatmul.mubr.f32.gmra.mrb[0].mxu0 %v721
      %v886 = vpop.f32.mrb[0].mxu0
      %v887 = vadd.f32 %v567, %v886
      %v888 = vpop.f32.mrb[0].mxu0
      %889 = vmatprep.mubr.f32.mxu0 0.0
      %890 = vmatmul.mubr.f32.gmra.mrb[0].mxu0 %v723
      %v891 = vpop.f32.mrb[0].mxu0
      %v892 = vadd.f32 %v572, %v891
      %v893 = vpop.f32.mrb[0].mxu0
      %894 = vmatprep.mubr.f32.mxu0 0.0
      %895 = vmatmul.mubr.f32.gmra.mrb[0].mxu0 %v725
      %v896 = vpop.f32.mrb[0].mxu0
      %v897 = vadd.f32 %v577, %v896
      %v898 = vpop.f32.mrb[0].mxu0
      %899 = vmatprep.mubr.f32.mxu0 0.0
      %900 = vmatmul.mubr.f32.gmra.mrb[0].mxu0 %v727
      %v901 = vpop.f32.mrb[0].mxu0
      %v902 = vadd.f32 %v582, %v901
      %v903 = vpop.f32.mrb[0].mxu0
      %904 = vmatprep.mubr.f32.mxu0 0.0
      %905 = vmatmul.mubr.f32.gmra.mrb[0].mxu0 %v729
      %v906 = vpop.f32.mrb[0].mxu0
      %v907 = vadd.f32 %v587, %v906
      %v908 = vpop.f32.mrb[0].mxu0
      %909 = vmatprep.mubr.f32.mxu0 0.0
      %910 = vmatmul.mubr.f32.gmra.mrb[0].mxu0 %v731
      %v911 = vpop.f32.mrb[0].mxu0
      %v912 = vadd.f32 %v592, %v911
      %v913 = vpop.f32.mrb[0].mxu0
      %914 = vmatprep.mubr.f32.mxu0 0.0
      %915 = vmatmul.mubr.f32.gmra.mrb[0].mxu0 %v733
      %v916 = vpop.f32.mrb[0].mxu0
      %v917 = vadd.f32 %v597, %v916
      %v918 = vpop.f32.mrb[0].mxu0
      %919 = vmatprep.mubr.f32.mxu0 0.0
      %920 = vmatmul.mubr.f32.gmra.mrb[0].mxu0 %v735
      %v921 = vpop.f32.mrb[0].mxu0
      %v922 = vadd.f32 %v602, %v921
      %v923 = vpop.f32.mrb[0].mxu0
      %924 = vmatprep.mubr.f32.mxu0 0.0
      %925 = vmatmul.mubr.f32.gmra.mrb[0].mxu0 %v737
      %v926 = vpop.f32.mrb[0].mxu0
      %v927 = vadd.f32 %v607, %v926
      %v928 = vpop.f32.mrb[0].mxu0
      %929 = vmatprep.mubr.f32.mxu0 0.0
      %930 = vmatmul.mubr.f32.gmra.mrb[0].mxu0 %v739
      %v931 = vpop.f32.mrb[0].mxu0
      %v932 = vadd.f32 %v612, %v931
      %v933 = vpop.f32.mrb[0].mxu0
      %934 = vmatprep.mubr.f32.mxu0 0.0
      %935 = vmatmul.mubr.f32.gmra.mrb[0].mxu0 %v741
      %v936 = vpop.f32.mrb[0].mxu0
      %v937 = vadd.f32 %v617, %v936
      %v938 = vpop.f32.mrb[0].mxu0
      %939 = vmatprep.mubr.f32.mxu0 0.0
      %940 = vmatmul.mubr.f32.gmra.mrb[0].mxu0 %v743
      %v941 = vpop.f32.mrb[0].mxu0
      %v942 = vadd.f32 %v622, %v941
      %v943 = vpop.f32.mrb[0].mxu0
      %944 = vmatprep.mubr.f32.mxu0 0.0
      %945 = vmatmul.mubr.f32.gmra.mrb[0].mxu0 %v745
      %v946 = vpop.f32.mrb[0].mxu0
      %v947 = vadd.f32 %v627, %v946
      %v948 = vpop.f32.mrb[0].mxu0
      %949 = vmatprep.mubr.f32.mxu0 0.0
      %950 = vmatmul.mubr.f32.gmra.mrb[0].mxu0 %v747
      %v951 = vpop.f32.mrb[0].mxu0
      %v952 = vadd.f32 %v632, %v951
      %v953 = vpop.f32.mrb[0].mxu0
      %954 = vmatprep.mubr.f32.mxu0 0.0
      %955 = vmatmul.mubr.f32.gmra.mrb[0].mxu0 %v749
      %v956 = vpop.f32.mrb[0].mxu0
      %v957 = vadd.f32 %v637, %v956
      %v958 = vpop.f32.mrb[0].mxu0
      %959 = vmatprep.mubr.f32.mxu0 0.0
      %960 = vmatmul.mubr.f32.gmra.mrb[0].mxu0 %v751
      %v961 = vpop.f32.mrb[0].mxu0
      %v962 = vadd.f32 %v642, %v961
      %v963 = vpop.f32.mrb[0].mxu0
      %964 = vmatprep.mubr.f32.mxu0 0.0
      %965 = vmatmul.mubr.f32.gmra.mrb[0].mxu0 %v753
      %v966 = vpop.f32.mrb[0].mxu0
      %v967 = vadd.f32 %v647, %v966
      %v968 = vpop.f32.mrb[0].mxu0
      %969 = vmatprep.mubr.f32.mxu0 0.0
      %970 = vmatmul.mubr.f32.gmra.mrb[0].mxu0 %v755
      %v971 = vpop.f32.mrb[0].mxu0
      %v972 = vadd.f32 %v652, %v971
      %v973 = vpop.f32.mrb[0].mxu0
      %974 = vmatprep.mubr.f32.mxu0 0.0
      %975 = vmatmul.mubr.f32.gmra.mrb[0].mxu0 %v757
      %v976 = vpop.f32.mrb[0].mxu0
      %v977 = vadd.f32 %v657, %v976
      %v978 = vpop.f32.mrb[0].mxu0
      %979 = vmatprep.mubr.f32.mxu0 0.0
      %980 = vmatmul.mubr.f32.gmra.mrb[0].mxu0 %v759
      %v981 = vpop.f32.mrb[0].mxu0
      %v982 = vadd.f32 %v662, %v981
      %v983 = vpop.f32.mrb[0].mxu0
      %984 = vmatprep.mubr.f32.mxu0 0.0
      %985 = vmatmul.mubr.f32.gmra.mrb[0].mxu0 %v761
      %v986 = vpop.f32.mrb[0].mxu0
      %v987 = vadd.f32 %v667, %v986
      %v988 = vpop.f32.mrb[0].mxu0
      %989 = vmatprep.mubr.f32.mxu0 0.0
      %990 = vmatmul.mubr.f32.gmra.mrb[0].mxu0 %v763
      %v991 = vpop.f32.mrb[0].mxu0
      %v992 = vadd.f32 %v672, %v991
      %v993 = vpop.f32.mrb[0].mxu0
      %994 = vmatprep.mubr.f32.mxu0 0.0
      %995 = vmatmul.mubr.f32.gmra.mrb[0].mxu0 %v765
      %v996 = vpop.f32.mrb[0].mxu0
      %v997 = vadd.f32 %v677, %v996
      %v998 = vpop.f32.mrb[0].mxu0
      %999 = vmatprep.mubr.f32.mxu0 0.0
      %1000 = vmatmul.mubr.f32.gmra.mrb[0].mxu0 %v767
      %v1001 = vpop.f32.mrb[0].mxu0
      %v1002 = vadd.f32 %v682, %v1001
      %v1003 = vpop.f32.mrb[0].mxu0
      %1004 = vmatprep.mubr.f32.mxu0 0.0
      %1005 = vmatmul.mubr.f32.gmra.mrb[0].mxu0 %v769
      %v1006 = vpop.f32.mrb[0].mxu0
      %v1007 = vadd.f32 %v687, %v1006
      %v1008 = vpop.f32.mrb[0].mxu0
      %1009 = vmatprep.mubr.f32.mxu0 0.0
      %1010 = vmatmul.mubr.f32.gmra.mrb[0].mxu0 %v771
      %v1011 = vpop.f32.mrb[0].mxu0
      %v1012 = vadd.f32 %v692, %v1011
      %v1013 = vpop.f32.mrb[0].mxu0
      %1014 = vmatprep.mubr.f32.mxu0 0.0
      %1015 = vmatmul.mubr.f32.gmra.mrb[0].mxu0 %v773
      %v1016 = vpop.f32.mrb[0].mxu0
      %v1017 = vadd.f32 %v697, %v1016
      %v1018 = vpop.f32.mrb[0].mxu0
      %1019 = vmatprep.mubr.f32.mxu0 0.0
      %1020 = vmatmul.mubr.f32.gmra.mrb[0].mxu0 %v775
      %v1021 = vpop.f32.mrb[0].mxu0
      %v1022 = vadd.f32 %v702, %v1021
      %v1023 = vpop.f32.mrb[0].mxu0
      %1024 = vdwg.mxu0
      %vm1025 = vcmask 1045504
      %v1026 = vrot.slane %v222, 2
      %v1027 = vrot.slane %v223, 2
      %v1028 = vsel %vm1025, %v1026, %v1027
      %v1029 = vrot.slane %v224, 2
      %v1030 = vsel %vm1025, %v1027, %v1029
      %v1031 = vrot.slane %v225, 2
      %v1032 = vsel %vm1025, %v1029, %v1031
      %v1033 = vrot.slane %v226, 2
      %v1034 = vsel %vm1025, %v1031, %v1033
      %v1035 = vrot.slane %v227, 2
      %v1036 = vsel %vm1025, %v1033, %v1035
      %v1037 = vrot.slane %v228, 2
      %v1038 = vsel %vm1025, %v1035, %v1037
      %v1039 = vrot.slane %v229, 2
      %v1040 = vsel %vm1025, %v1037, %v1039
      %v1041 = vrot.slane %v230, 2
      %v1042 = vsel %vm1025, %v1039, %v1041
      %v1043 = vrot.slane %v231, 2
      %v1044 = vsel %vm1025, %v1041, %v1043
      %v1045 = vrot.slane %v232, 2
      %v1046 = vsel %vm1025, %v1043, %v1045
      %v1047 = vrot.slane %v233, 2
      %v1048 = vsel %vm1025, %v1045, %v1047
      %v1049 = vrot.slane %v234, 2
      %v1050 = vsel %vm1025, %v1047, %v1049
      %v1051 = vrot.slane %v235, 2
      %v1052 = vsel %vm1025, %v1049, %v1051
      %v1053 = vrot.slane %v236, 2
      %v1054 = vsel %vm1025, %v1051, %v1053
      %v1055 = vrot.slane %v237, 2
      %v1056 = vsel %vm1025, %v1053, %v1055
      %v1057 = vrot.slane %v238, 2
      %v1058 = vsel %vm1025, %v1055, %v1057
      %v1059 = vrot.slane %v239, 2
      %v1060 = vsel %vm1025, %v1057, %v1059
      %v1061 = vrot.slane %v240, 2
      %v1062 = vsel %vm1025, %v1059, %v1061
      %v1063 = vrot.slane %v241, 2
      %v1064 = vsel %vm1025, %v1061, %v1063
      %v1065 = vrot.slane %v242, 2
      %v1066 = vsel %vm1025, %v1063, %v1065
      %v1067 = vrot.slane %v243, 2
      %v1068 = vsel %vm1025, %v1065, %v1067
      %v1069 = vrot.slane %v244, 2
      %v1070 = vsel %vm1025, %v1067, %v1069
      %v1071 = vrot.slane %v245, 2
      %v1072 = vsel %vm1025, %v1069, %v1071
      %v1073 = vrot.slane %v246, 2
      %v1074 = vsel %vm1025, %v1071, %v1073
      %v1075 = vrot.slane %v247, 2
      %v1076 = vsel %vm1025, %v1073, %v1075
      %v1077 = vrot.slane %v248, 2
      %v1078 = vsel %vm1025, %v1075, %v1077
      %v1079 = vrot.slane %v249, 2
      %v1080 = vsel %vm1025, %v1077, %v1079
      %v1081 = vrot.slane %v250, 2
      %v1082 = vsel %vm1025, %v1079, %v1081
      %v1083 = vrot.slane %v251, 2
      %v1084 = vsel %vm1025, %v1081, %v1083
      %v1085 = vrot.slane %v252, 2
      %v1086 = vsel %vm1025, %v1083, %v1085
      %v1087 = vrot.slane %v253, 2
      %v1088 = vsel %vm1025, %v1085, %v1087
      %v1089 = vrot.slane %v254, 2
      %v1090 = vsel %vm1025, %v1087, %v1089
      %v1091 = vrot.slane %v255, 2
      %v1092 = vsel %vm1025, %v1089, %v1091
      %v1093 = vrot.slane %v256, 2
      %v1094 = vsel %vm1025, %v1091, %v1093
      %v1095 = vrot.slane %v257, 2
      %v1096 = vsel %vm1025, %v1093, %v1095
      %v1097 = vrot.slane %v258, 2
      %v1098 = vsel %vm1025, %v1095, %v1097
      %v1099 = vsel %vm383, %v1028, 0
      %v1101 = vsel %vm383, %v1030, 0
      %v1103 = vsel %vm383, %v1032, 0
      %v1105 = vsel %vm383, %v1034, 0
      %v1107 = vsel %vm383, %v1036, 0
      %v1109 = vsel %vm383, %v1038, 0
      %v1111 = vsel %vm383, %v1040, 0
      %v1113 = vsel %vm383, %v1042, 0
      %v1115 = vsel %vm383, %v1044, 0
      %v1117 = vsel %vm383, %v1046, 0
      %v1119 = vsel %vm383, %v1048, 0
      %v1121 = vsel %vm383, %v1050, 0
      %v1123 = vsel %vm383, %v1052, 0
      %v1125 = vsel %vm383, %v1054, 0
      %v1127 = vsel %vm383, %v1056, 0
      %v1129 = vsel %vm383, %v1058, 0
      %v1131 = vsel %vm383, %v1060, 0
      %v1133 = vsel %vm383, %v1062, 0
      %v1135 = vsel %vm383, %v1064, 0
      %v1137 = vsel %vm383, %v1066, 0
      %v1139 = vsel %vm383, %v1068, 0
      %v1141 = vsel %vm383, %v1070, 0
      %v1143 = vsel %vm383, %v1072, 0
      %v1145 = vsel %vm383, %v1074, 0
      %v1147 = vsel %vm383, %v1076, 0
      %v1149 = vsel %vm383, %v1078, 0
      %v1151 = vsel %vm383, %v1080, 0
      %v1153 = vsel %vm383, %v1082, 0
      %v1155 = vsel %vm383, %v1084, 0
      %v1157 = vsel %vm383, %v1086, 0
      %v1159 = vsel %vm383, %v1088, 0
      %v1161 = vsel %vm383, %v1090, 0
      %v1163 = vsel %vm383, %v1092, 0
      %v1165 = vsel %vm383, %v1094, 0
      %v1167 = vsel %vm383, %v1096, 0
      %v1169 = vsel %vm383, %v1098, 0
      %v1172 = vsel %vm456, %v265, 0
      %1174 = vmatprep.subr.mxu0 0.0
      %1175 = vmatpush1.msra.mxu0 %v1172
      %1176 = vmatprep.subr.mxu0 0.0
      %1177 = vmatpush1.msra.mxu0 0.0
      %1178 = vmatprep.subr.mxu0 0.0
      %1179 = vmatpush1.msra.mxu0 0.0
      %1180 = vmatprep.subr.mxu0 0.0
      %1181 = vmatpush1.msra.mxu0 0.0
      %1182 = vmatprep.subr.mxu0 0.0
      %1183 = vmatpush1.msra.mxu0 0.0
      %1184 = vmatprep.subr.mxu0 0.0
      %1185 = vmatpush1.msra.mxu0 0.0
      %1186 = vmatprep.subr.mxu0 0.0
      %1187 = vmatpush1.msra.mxu0 0.0
      %1188 = vmatprep.subr.mxu0 0.0
      %1189 = vmatpush1.msra.mxu0 0.0
      %1190 = vmatprep.subr.mxu0 0.0
      %1191 = vmatpush1.msra.mxu0 0.0
      %1192 = vmatprep.subr.mxu0 0.0
      %1193 = vmatpush1.msra.mxu0 0.0
      %1194 = vmatprep.subr.mxu0 0.0
      %1195 = vmatpush1.msra.mxu0 0.0
      %1196 = vmatprep.subr.mxu0 0.0
      %1197 = vmatpush1.msra.mxu0 0.0
      %1198 = vmatprep.subr.mxu0 0.0
      %1199 = vmatpush1.msra.mxu0 0.0
      %1200 = vmatprep.subr.mxu0 0.0
      %1201 = vmatpush1.msra.mxu0 0.0
      %1202 = vmatprep.subr.mxu0 0.0
      %1203 = vmatpush1.msra.mxu0 0.0
      %1204 = vmatprep.subr.mxu0 0.0
      %1205 = vmatpush1.msra.mxu0 0.0
      %1206 = vmatprep.subr.mxu0 0.0
      %1207 = vmatpush1.msra.mxu0 0.0
      %1208 = vmatprep.subr.mxu0 0.0
      %1209 = vmatpush1.msra.mxu0 0.0
      %1210 = vmatprep.subr.mxu0 0.0
      %1211 = vmatpush1.msra.mxu0 0.0
      %1212 = vmatprep.subr.mxu0 0.0
      %1213 = vmatpush1.msra.mxu0 0.0
      %1214 = vmatprep.subr.mxu0 0.0
      %1215 = vmatpush1.msra.mxu0 0.0
      %1216 = vmatprep.subr.mxu0 0.0
      %1217 = vmatpush1.msra.mxu0 0.0
      %1218 = vmatprep.subr.mxu0 0.0
      %1219 = vmatpush1.msra.mxu0 0.0
      %1220 = vmatprep.subr.mxu0 0.0
      %1221 = vmatpush1.msra.mxu0 0.0
      %1222 = vmatprep.subr.mxu0 0.0
      %1223 = vmatpush1.msra.mxu0 0.0
      %1224 = vmatprep.subr.mxu0 0.0
      %1225 = vmatpush1.msra.mxu0 0.0
      %1226 = vmatprep.subr.mxu0 0.0
      %1227 = vmatpush1.msra.mxu0 0.0
      %1228 = vmatprep.subr.mxu0 0.0
      %1229 = vmatpush1.msra.mxu0 0.0
      %1230 = vmatprep.subr.mxu0 0.0
      %1231 = vmatpush1.msra.mxu0 0.0
      %1232 = vmatprep.subr.mxu0 0.0
      %1233 = vmatpush1.msra.mxu0 0.0
      %1234 = vmatprep.subr.mxu0 0.0
      %1235 = vmatpush1.msra.mxu0 0.0
      %1236 = vmatprep.subr.mxu0 0.0
      %1237 = vmatpush1.msra.mxu0 0.0
      %1238 = vmatprep.mubr.f32.mxu0 0.0
      %1239 = vmatmul.mubr.f32.gmra.mrb[0].mxu0 %v1099
      %v1240 = vpop.f32.mrb[0].mxu0
      %v1241 = vadd.f32 0.0, %v1240
      %v1242 = vpop.f32.mrb[0].mxu0
      %1243 = vmatprep.mubr.f32.mxu0 0.0
      %1244 = vmatmul.mubr.f32.gmra.mrb[0].mxu0 %v1101
      %v1245 = vpop.f32.mrb[0].mxu0
      %v1246 = vadd.f32 0.0, %v1245
      %v1247 = vpop.f32.mrb[0].mxu0
      %1248 = vmatprep.mubr.f32.mxu0 0.0
      %1249 = vmatmul.mubr.f32.gmra.mrb[0].mxu0 %v1103
      %v1250 = vpop.f32.mrb[0].mxu0
      %v1251 = vadd.f32 0.0, %v1250
      %v1252 = vpop.f32.mrb[0].mxu0
      %1253 = vmatprep.mubr.f32.mxu0 0.0
      %1254 = vmatmul.mubr.f32.gmra.mrb[0].mxu0 %v1105
      %v1255 = vpop.f32.mrb[0].mxu0
      %v1256 = vadd.f32 0.0, %v1255
      %v1257 = vpop.f32.mrb[0].mxu0
      %1258 = vmatprep.mubr.f32.mxu0 0.0
      %1259 = vmatmul.mubr.f32.gmra.mrb[0].mxu0 %v1107
      %v1260 = vpop.f32.mrb[0].mxu0
      %v1261 = vadd.f32 0.0, %v1260
      %v1262 = vpop.f32.mrb[0].mxu0
      %1263 = vmatprep.mubr.f32.mxu0 0.0
      %1264 = vmatmul.mubr.f32.gmra.mrb[0].mxu0 %v1109
      %v1265 = vpop.f32.mrb[0].mxu0
      %v1266 = vadd.f32 0.0, %v1265
      %v1267 = vpop.f32.mrb[0].mxu0
      %1268 = vmatprep.mubr.f32.mxu0 0.0
      %1269 = vmatmul.mubr.f32.gmra.mrb[0].mxu0 %v1111
      %v1270 = vpop.f32.mrb[0].mxu0
      %v1271 = vadd.f32 0.0, %v1270
      %v1272 = vpop.f32.mrb[0].mxu0
      %1273 = vmatprep.mubr.f32.mxu0 0.0
      %1274 = vmatmul.mubr.f32.gmra.mrb[0].mxu0 %v1113
      %v1275 = vpop.f32.mrb[0].mxu0
      %v1276 = vadd.f32 0.0, %v1275
      %v1277 = vpop.f32.mrb[0].mxu0
      %1278 = vmatprep.mubr.f32.mxu0 0.0
      %1279 = vmatmul.mubr.f32.gmra.mrb[0].mxu0 %v1115
      %v1280 = vpop.f32.mrb[0].mxu0
      %v1281 = vadd.f32 0.0, %v1280
      %v1282 = vpop.f32.mrb[0].mxu0
      %1283 = vmatprep.mubr.f32.mxu0 0.0
      %1284 = vmatmul.mubr.f32.gmra.mrb[0].mxu0 %v1117
      %v1285 = vpop.f32.mrb[0].mxu0
      %v1286 = vadd.f32 0.0, %v1285
      %v1287 = vpop.f32.mrb[0].mxu0
      %1288 = vmatprep.mubr.f32.mxu0 0.0
      %1289 = vmatmul.mubr.f32.gmra.mrb[0].mxu0 %v1119
      %v1290 = vpop.f32.mrb[0].mxu0
      %v1291 = vadd.f32 0.0, %v1290
      %v1292 = vpop.f32.mrb[0].mxu0
      %1293 = vmatprep.mubr.f32.mxu0 0.0
      %1294 = vmatmul.mubr.f32.gmra.mrb[0].mxu0 %v1121
      %v1295 = vpop.f32.mrb[0].mxu0
      %v1296 = vadd.f32 0.0, %v1295
      %v1297 = vpop.f32.mrb[0].mxu0
      %1298 = vmatprep.mubr.f32.mxu0 0.0
      %1299 = vmatmul.mubr.f32.gmra.mrb[0].mxu0 %v1123
      %v1300 = vpop.f32.mrb[0].mxu0
      %v1301 = vadd.f32 0.0, %v1300
      %v1302 = vpop.f32.mrb[0].mxu0
      %1303 = vmatprep.mubr.f32.mxu0 0.0
      %1304 = vmatmul.mubr.f32.gmra.mrb[0].mxu0 %v1125
      %v1305 = vpop.f32.mrb[0].mxu0
      %v1306 = vadd.f32 0.0, %v1305
      %v1307 = vpop.f32.mrb[0].mxu0
      %1308 = vmatprep.mubr.f32.mxu0 0.0
      %1309 = vmatmul.mubr.f32.gmra.mrb[0].mxu0 %v1127
      %v1310 = vpop.f32.mrb[0].mxu0
      %v1311 = vadd.f32 0.0, %v1310
      %v1312 = vpop.f32.mrb[0].mxu0
      %1313 = vmatprep.mubr.f32.mxu0 0.0
      %1314 = vmatmul.mubr.f32.gmra.mrb[0].mxu0 %v1129
      %v1315 = vpop.f32.mrb[0].mxu0
      %v1316 = vadd.f32 0.0, %v1315
      %v1317 = vpop.f32.mrb[0].mxu0
      %1318 = vmatprep.mubr.f32.mxu0 0.0
      %1319 = vmatmul.mubr.f32.gmra.mrb[0].mxu0 %v1131
      %v1320 = vpop.f32.mrb[0].mxu0
      %v1321 = vadd.f32 0.0, %v1320
      %v1322 = vpop.f32.mrb[0].mxu0
      %1323 = vmatprep.mubr.f32.mxu0 0.0
      %1324 = vmatmul.mubr.f32.gmra.mrb[0].mxu0 %v1133
      %v1325 = vpop.f32.mrb[0].mxu0
      %v1326 = vadd.f32 0.0, %v1325
      %v1327 = vpop.f32.mrb[0].mxu0
      %1328 = vmatprep.mubr.f32.mxu0 0.0
      %1329 = vmatmul.mubr.f32.gmra.mrb[0].mxu0 %v1135
      %v1330 = vpop.f32.mrb[0].mxu0
      %v1331 = vadd.f32 0.0, %v1330
      %v1332 = vpop.f32.mrb[0].mxu0
      %1333 = vmatprep.mubr.f32.mxu0 0.0
      %1334 = vmatmul.mubr.f32.gmra.mrb[0].mxu0 %v1137
      %v1335 = vpop.f32.mrb[0].mxu0
      %v1336 = vadd.f32 0.0, %v1335
      %v1337 = vpop.f32.mrb[0].mxu0
      %1338 = vmatprep.mubr.f32.mxu0 0.0
      %1339 = vmatmul.mubr.f32.gmra.mrb[0].mxu0 %v1139
      %v1340 = vpop.f32.mrb[0].mxu0
      %v1341 = vadd.f32 0.0, %v1340
      %v1342 = vpop.f32.mrb[0].mxu0
      %1343 = vmatprep.mubr.f32.mxu0 0.0
      %1344 = vmatmul.mubr.f32.gmra.mrb[0].mxu0 %v1141
      %v1345 = vpop.f32.mrb[0].mxu0
      %v1346 = vadd.f32 0.0, %v1345
      %v1347 = vpop.f32.mrb[0].mxu0
      %1348 = vmatprep.mubr.f32.mxu0 0.0
      %1349 = vmatmul.mubr.f32.gmra.mrb[0].mxu0 %v1143
      %v1350 = vpop.f32.mrb[0].mxu0
      %v1351 = vadd.f32 0.0, %v1350
      %v1352 = vpop.f32.mrb[0].mxu0
      %1353 = vmatprep.mubr.f32.mxu0 0.0
      %1354 = vmatmul.mubr.f32.gmra.mrb[0].mxu0 %v1145
      %v1355 = vpop.f32.mrb[0].mxu0
      %v1356 = vadd.f32 0.0, %v1355
      %v1357 = vpop.f32.mrb[0].mxu0
      %1358 = vmatprep.mubr.f32.mxu0 0.0
      %1359 = vmatmul.mubr.f32.gmra.mrb[0].mxu0 %v1147
      %v1360 = vpop.f32.mrb[0].mxu0
      %v1361 = vadd.f32 0.0, %v1360
      %v1362 = vpop.f32.mrb[0].mxu0
      %1363 = vmatprep.mubr.f32.mxu0 0.0
      %1364 = vmatmul.mubr.f32.gmra.mrb[0].mxu0 %v1149
      %v1365 = vpop.f32.mrb[0].mxu0
      %v1366 = vadd.f32 0.0, %v1365
      %v1367 = vpop.f32.mrb[0].mxu0
      %1368 = vmatprep.mubr.f32.mxu0 0.0
      %1369 = vmatmul.mubr.f32.gmra.mrb[0].mxu0 %v1151
      %v1370 = vpop.f32.mrb[0].mxu0
      %v1371 = vadd.f32 0.0, %v1370
      %v1372 = vpop.f32.mrb[0].mxu0
      %1373 = vmatprep.mubr.f32.mxu0 0.0
      %1374 = vmatmul.mubr.f32.gmra.mrb[0].mxu0 %v1153
      %v1375 = vpop.f32.mrb[0].mxu0
      %v1376 = vadd.f32 0.0, %v1375
      %v1377 = vpop.f32.mrb[0].mxu0
      %1378 = vmatprep.mubr.f32.mxu0 0.0
      %1379 = vmatmul.mubr.f32.gmra.mrb[0].mxu0 %v1155
      %v1380 = vpop.f32.mrb[0].mxu0
      %v1381 = vadd.f32 0.0, %v1380
      %v1382 = vpop.f32.mrb[0].mxu0
      %1383 = vmatprep.mubr.f32.mxu0 0.0
      %1384 = vmatmul.mubr.f32.gmra.mrb[0].mxu0 %v1157
      %v1385 = vpop.f32.mrb[0].mxu0
      %v1386 = vadd.f32 0.0, %v1385
      %v1387 = vpop.f32.mrb[0].mxu0
      %1388 = vmatprep.mubr.f32.mxu0 0.0
      %1389 = vmatmul.mubr.f32.gmra.mrb[0].mxu0 %v1159
      %v1390 = vpop.f32.mrb[0].mxu0
      %v1391 = vadd.f32 0.0, %v1390
      %v1392 = vpop.f32.mrb[0].mxu0
      %1393 = vmatprep.mubr.f32.mxu0 0.0
      %1394 = vmatmul.mubr.f32.gmra.mrb[0].mxu0 %v1161
      %v1395 = vpop.f32.mrb[0].mxu0
      %v1396 = vadd.f32 0.0, %v1395
      %v1397 = vpop.f32.mrb[0].mxu0
      %1398 = vmatprep.mubr.f32.mxu0 0.0
      %1399 = vmatmul.mubr.f32.gmra.mrb[0].mxu0 %v1163
      %v1400 = vpop.f32.mrb[0].mxu0
      %v1401 = vadd.f32 0.0, %v1400
      %v1402 = vpop.f32.mrb[0].mxu0
      %1403 = vmatprep.mubr.f32.mxu0 0.0
      %1404 = vmatmul.mubr.f32.gmra.mrb[0].mxu0 %v1165
      %v1405 = vpop.f32.mrb[0].mxu0
      %v1406 = vadd.f32 0.0, %v1405
      %v1407 = vpop.f32.mrb[0].mxu0
      %1408 = vmatprep.mubr.f32.mxu0 0.0
      %1409 = vmatmul.mubr.f32.gmra.mrb[0].mxu0 %v1167
      %v1410 = vpop.f32.mrb[0].mxu0
      %v1411 = vadd.f32 0.0, %v1410
      %v1412 = vpop.f32.mrb[0].mxu0
      %1413 = vmatprep.mubr.f32.mxu0 0.0
      %1414 = vmatmul.mubr.f32.gmra.mrb[0].mxu0 %v1169
      %v1415 = vpop.f32.mrb[0].mxu0
      %v1416 = vadd.f32 0.0, %v1415
      %v1417 = vpop.f32.mrb[0].mxu0
      %1418 = vdwg.mxu0
      %v1419 = vadd.f32 %v847, %v1241
      %v1420 = vadd.f32 %v852, %v1246
      %v1421 = vadd.f32 %v857, %v1251
      %v1422 = vadd.f32 %v862, %v1256
      %v1423 = vadd.f32 %v867, %v1261
      %v1424 = vadd.f32 %v872, %v1266
      %v1425 = vadd.f32 %v877, %v1271
      %v1426 = vadd.f32 %v882, %v1276
      %v1427 = vadd.f32 %v887, %v1281
      %v1428 = vadd.f32 %v892, %v1286
      %v1429 = vadd.f32 %v897, %v1291
      %v1430 = vadd.f32 %v902, %v1296
      %v1431 = vadd.f32 %v907, %v1301
      %v1432 = vadd.f32 %v912, %v1306
      %v1433 = vadd.f32 %v917, %v1311
      %v1434 = vadd.f32 %v922, %v1316
      %v1435 = vadd.f32 %v927, %v1321
      %v1436 = vadd.f32 %v932, %v1326
      %v1437 = vadd.f32 %v937, %v1331
      %v1438 = vadd.f32 %v942, %v1336
      %v1439 = vadd.f32 %v947, %v1341
      %v1440 = vadd.f32 %v952, %v1346
      %v1441 = vadd.f32 %v957, %v1351
      %v1442 = vadd.f32 %v962, %v1356
      %v1443 = vadd.f32 %v967, %v1361
      %v1444 = vadd.f32 %v972, %v1366
      %v1445 = vadd.f32 %v977, %v1371
      %v1446 = vadd.f32 %v982, %v1376
      %v1447 = vadd.f32 %v987, %v1381
      %v1448 = vadd.f32 %v992, %v1386
      %v1449 = vadd.f32 %v997, %v1391
      %v1450 = vadd.f32 %v1002, %v1396
      %v1451 = vadd.f32 %v1007, %v1401
      %v1452 = vadd.f32 %v1012, %v1406
      %v1453 = vadd.f32 %v1017, %v1411
      %v1454 = vadd.f32 %v1022, %v1416
      %v1457 = vrot.slane %v259, 2
      %v1458 = vsel %vm1025, %v1097, %v1457
      %v1459 = vrot.slane %v260, 2
      %v1460 = vsel %vm1025, %v1457, %v1459
      %v1461 = vsel %vm383, %v1458, 0
      %v1463 = vsel %vm383, %v1460, 0
      %v1466 = vsel %vm456, %v266, 0
      %1468 = vmatprep.subr.mxu0 0.0
      %1469 = vmatpush1.msra.mxu0 %v1466
      %1470 = vmatprep.subr.mxu0 0.0
      %1471 = vmatpush1.msra.mxu0 0.0
      %1472 = vmatprep.subr.mxu0 0.0
      %1473 = vmatpush1.msra.mxu0 0.0
      %1474 = vmatprep.subr.mxu0 0.0
      %1475 = vmatpush1.msra.mxu0 0.0
      %1476 = vmatprep.subr.mxu0 0.0
      %1477 = vmatpush1.msra.mxu0 0.0
      %1478 = vmatprep.subr.mxu0 0.0
      %1479 = vmatpush1.msra.mxu0 0.0
      %1480 = vmatprep.subr.mxu0 0.0
      %1481 = vmatpush1.msra.mxu0 0.0
      %1482 = vmatprep.subr.mxu0 0.0
      %1483 = vmatpush1.msra.mxu0 0.0
      %1484 = vmatprep.subr.mxu0 0.0
      %1485 = vmatpush1.msra.mxu0 0.0
      %1486 = vmatprep.subr.mxu0 0.0
      %1487 = vmatpush1.msra.mxu0 0.0
      %1488 = vmatprep.subr.mxu0 0.0
      %1489 = vmatpush1.msra.mxu0 0.0
      %1490 = vmatprep.subr.mxu0 0.0
      %1491 = vmatpush1.msra.mxu0 0.0
      %1492 = vmatprep.subr.mxu0 0.0
      %1493 = vmatpush1.msra.mxu0 0.0
      %1494 = vmatprep.subr.mxu0 0.0
      %1495 = vmatpush1.msra.mxu0 0.0
      %1496 = vmatprep.subr.mxu0 0.0
      %1497 = vmatpush1.msra.mxu0 0.0
      %1498 = vmatprep.subr.mxu0 0.0
      %1499 = vmatpush1.msra.mxu0 0.0
      %1500 = vmatprep.subr.mxu0 0.0
      %1501 = vmatpush1.msra.mxu0 0.0
      %1502 = vmatprep.subr.mxu0 0.0
      %1503 = vmatpush1.msra.mxu0 0.0
      %1504 = vmatprep.subr.mxu0 0.0
      %1505 = vmatpush1.msra.mxu0 0.0
      %1506 = vmatprep.subr.mxu0 0.0
      %1507 = vmatpush1.msra.mxu0 0.0
      %1508 = vmatprep.subr.mxu0 0.0
      %1509 = vmatpush1.msra.mxu0 0.0
      %1510 = vmatprep.subr.mxu0 0.0
      %1511 = vmatpush1.msra.mxu0 0.0
      %1512 = vmatprep.subr.mxu0 0.0
      %1513 = vmatpush1.msra.mxu0 0.0
      %1514 = vmatprep.subr.mxu0 0.0
      %1515 = vmatpush1.msra.mxu0 0.0
      %1516 = vmatprep.subr.mxu0 0.0
      %1517 = vmatpush1.msra.mxu0 0.0
      %1518 = vmatprep.subr.mxu0 0.0
      %1519 = vmatpush1.msra.mxu0 0.0
      %1520 = vmatprep.subr.mxu0 0.0
      %1521 = vmatpush1.msra.mxu0 0.0
      %1522 = vmatprep.subr.mxu0 0.0
      %1523 = vmatpush1.msra.mxu0 0.0
      %1524 = vmatprep.subr.mxu0 0.0
      %1525 = vmatpush1.msra.mxu0 0.0
      %1526 = vmatprep.subr.mxu0 0.0
      %1527 = vmatpush1.msra.mxu0 0.0
      %1528 = vmatprep.subr.mxu0 0.0
      %1529 = vmatpush1.msra.mxu0 0.0
      %1530 = vmatprep.subr.mxu0 0.0
      %1531 = vmatpush1.msra.mxu0 0.0
      %1532 = vmatprep.mubr.f32.mxu0 0.0
      %1533 = vmatmul.mubr.f32.gmra.mrb[0].mxu0 %v1103
      %v1534 = vpop.f32.mrb[0].mxu0
      %v1535 = vadd.f32 0.0, %v1534
      %v1536 = vpop.f32.mrb[0].mxu0
      %1537 = vmatprep.mubr.f32.mxu0 0.0
      %1538 = vmatmul.mubr.f32.gmra.mrb[0].mxu0 %v1105
      %v1539 = vpop.f32.mrb[0].mxu0
      %v1540 = vadd.f32 0.0, %v1539
      %v1541 = vpop.f32.mrb[0].mxu0
      %1542 = vmatprep.mubr.f32.mxu0 0.0
      %1543 = vmatmul.mubr.f32.gmra.mrb[0].mxu0 %v1107
      %v1544 = vpop.f32.mrb[0].mxu0
      %v1545 = vadd.f32 0.0, %v1544
      %v1546 = vpop.f32.mrb[0].mxu0
      %1547 = vmatprep.mubr.f32.mxu0 0.0
      %1548 = vmatmul.mubr.f32.gmra.mrb[0].mxu0 %v1109
      %v1549 = vpop.f32.mrb[0].mxu0
      %v1550 = vadd.f32 0.0, %v1549
      %v1551 = vpop.f32.mrb[0].mxu0
      %1552 = vmatprep.mubr.f32.mxu0 0.0
      %1553 = vmatmul.mubr.f32.gmra.mrb[0].mxu0 %v1111
      %v1554 = vpop.f32.mrb[0].mxu0
      %v1555 = vadd.f32 0.0, %v1554
      %v1556 = vpop.f32.mrb[0].mxu0
      %1557 = vmatprep.mubr.f32.mxu0 0.0
      %1558 = vmatmul.mubr.f32.gmra.mrb[0].mxu0 %v1113
      %v1559 = vpop.f32.mrb[0].mxu0
      %v1560 = vadd.f32 0.0, %v1559
      %v1561 = vpop.f32.mrb[0].mxu0
      %1562 = vmatprep.mubr.f32.mxu0 0.0
      %1563 = vmatmul.mubr.f32.gmra.mrb[0].mxu0 %v1115
      %v1564 = vpop.f32.mrb[0].mxu0
      %v1565 = vadd.f32 0.0, %v1564
      %v1566 = vpop.f32.mrb[0].mxu0
      %1567 = vmatprep.mubr.f32.mxu0 0.0
      %1568 = vmatmul.mubr.f32.gmra.mrb[0].mxu0 %v1117
      %v1569 = vpop.f32.mrb[0].mxu0
      %v1570 = vadd.f32 0.0, %v1569
      %v1571 = vpop.f32.mrb[0].mxu0
      %1572 = vmatprep.mubr.f32.mxu0 0.0
      %1573 = vmatmul.mubr.f32.gmra.mrb[0].mxu0 %v1119
      %v1574 = vpop.f32.mrb[0].mxu0
      %v1575 = vadd.f32 0.0, %v1574
      %v1576 = vpop.f32.mrb[0].mxu0
      %1577 = vmatprep.mubr.f32.mxu0 0.0
      %1578 = vmatmul.mubr.f32.gmra.mrb[0].mxu0 %v1121
      %v1579 = vpop.f32.mrb[0].mxu0
      %v1580 = vadd.f32 0.0, %v1579
      %v1581 = vpop.f32.mrb[0].mxu0
      %1582 = vmatprep.mubr.f32.mxu0 0.0
      %1583 = vmatmul.mubr.f32.gmra.mrb[0].mxu0 %v1123
      %v1584 = vpop.f32.mrb[0].mxu0
      %v1585 = vadd.f32 0.0, %v1584
      %v1586 = vpop.f32.mrb[0].mxu0
      %1587 = vmatprep.mubr.f32.mxu0 0.0
      %1588 = vmatmul.mubr.f32.gmra.mrb[0].mxu0 %v1125
      %v1589 = vpop.f32.mrb[0].mxu0
      %v1590 = vadd.f32 0.0, %v1589
      %v1591 = vpop.f32.mrb[0].mxu0
      %1592 = vmatprep.mubr.f32.mxu0 0.0
      %1593 = vmatmul.mubr.f32.gmra.mrb[0].mxu0 %v1127
      %v1594 = vpop.f32.mrb[0].mxu0
      %v1595 = vadd.f32 0.0, %v1594
      %v1596 = vpop.f32.mrb[0].mxu0
      %1597 = vmatprep.mubr.f32.mxu0 0.0
      %1598 = vmatmul.mubr.f32.gmra.mrb[0].mxu0 %v1129
      %v1599 = vpop.f32.mrb[0].mxu0
      %v1600 = vadd.f32 0.0, %v1599
      %v1601 = vpop.f32.mrb[0].mxu0
      %1602 = vmatprep.mubr.f32.mxu0 0.0
      %1603 = vmatmul.mubr.f32.gmra.mrb[0].mxu0 %v1131
      %v1604 = vpop.f32.mrb[0].mxu0
      %v1605 = vadd.f32 0.0, %v1604
      %v1606 = vpop.f32.mrb[0].mxu0
      %1607 = vmatprep.mubr.f32.mxu0 0.0
      %1608 = vmatmul.mubr.f32.gmra.mrb[0].mxu0 %v1133
      %v1609 = vpop.f32.mrb[0].mxu0
      %v1610 = vadd.f32 0.0, %v1609
      %v1611 = vpop.f32.mrb[0].mxu0
      %1612 = vmatprep.mubr.f32.mxu0 0.0
      %1613 = vmatmul.mubr.f32.gmra.mrb[0].mxu0 %v1135
      %v1614 = vpop.f32.mrb[0].mxu0
      %v1615 = vadd.f32 0.0, %v1614
      %v1616 = vpop.f32.mrb[0].mxu0
      %1617 = vmatprep.mubr.f32.mxu0 0.0
      %1618 = vmatmul.mubr.f32.gmra.mrb[0].mxu0 %v1137
      %v1619 = vpop.f32.mrb[0].mxu0
      %v1620 = vadd.f32 0.0, %v1619
      %v1621 = vpop.f32.mrb[0].mxu0
      %1622 = vmatprep.mubr.f32.mxu0 0.0
      %1623 = vmatmul.mubr.f32.gmra.mrb[0].mxu0 %v1139
      %v1624 = vpop.f32.mrb[0].mxu0
      %v1625 = vadd.f32 0.0, %v1624
      %v1626 = vpop.f32.mrb[0].mxu0
      %1627 = vmatprep.mubr.f32.mxu0 0.0
      %1628 = vmatmul.mubr.f32.gmra.mrb[0].mxu0 %v1141
      %v1629 = vpop.f32.mrb[0].mxu0
      %v1630 = vadd.f32 0.0, %v1629
      %v1631 = vpop.f32.mrb[0].mxu0
      %1632 = vmatprep.mubr.f32.mxu0 0.0
      %1633 = vmatmul.mubr.f32.gmra.mrb[0].mxu0 %v1143
      %v1634 = vpop.f32.mrb[0].mxu0
      %v1635 = vadd.f32 0.0, %v1634
      %v1636 = vpop.f32.mrb[0].mxu0
      %1637 = vmatprep.mubr.f32.mxu0 0.0
      %1638 = vmatmul.mubr.f32.gmra.mrb[0].mxu0 %v1145
      %v1639 = vpop.f32.mrb[0].mxu0
      %v1640 = vadd.f32 0.0, %v1639
      %v1641 = vpop.f32.mrb[0].mxu0
      %1642 = vmatprep.mubr.f32.mxu0 0.0
      %1643 = vmatmul.mubr.f32.gmra.mrb[0].mxu0 %v1147
      %v1644 = vpop.f32.mrb[0].mxu0
      %v1645 = vadd.f32 0.0, %v1644
      %v1646 = vpop.f32.mrb[0].mxu0
      %1647 = vmatprep.mubr.f32.mxu0 0.0
      %1648 = vmatmul.mubr.f32.gmra.mrb[0].mxu0 %v1149
      %v1649 = vpop.f32.mrb[0].mxu0
      %v1650 = vadd.f32 0.0, %v1649
      %v1651 = vpop.f32.mrb[0].mxu0
      %1652 = vmatprep.mubr.f32.mxu0 0.0
      %1653 = vmatmul.mubr.f32.gmra.mrb[0].mxu0 %v1151
      %v1654 = vpop.f32.mrb[0].mxu0
      %v1655 = vadd.f32 0.0, %v1654
      %v1656 = vpop.f32.mrb[0].mxu0
      %1657 = vmatprep.mubr.f32.mxu0 0.0
      %1658 = vmatmul.mubr.f32.gmra.mrb[0].mxu0 %v1153
      %v1659 = vpop.f32.mrb[0].mxu0
      %v1660 = vadd.f32 0.0, %v1659
      %v1661 = vpop.f32.mrb[0].mxu0
      %1662 = vmatprep.mubr.f32.mxu0 0.0
      %1663 = vmatmul.mubr.f32.gmra.mrb[0].mxu0 %v1155
      %v1664 = vpop.f32.mrb[0].mxu0
      %v1665 = vadd.f32 0.0, %v1664
      %v1666 = vpop.f32.mrb[0].mxu0
      %1667 = vmatprep.mubr.f32.mxu0 0.0
      %1668 = vmatmul.mubr.f32.gmra.mrb[0].mxu0 %v1157
      %v1669 = vpop.f32.mrb[0].mxu0
      %v1670 = vadd.f32 0.0, %v1669
      %v1671 = vpop.f32.mrb[0].mxu0
      %1672 = vmatprep.mubr.f32.mxu0 0.0
      %1673 = vmatmul.mubr.f32.gmra.mrb[0].mxu0 %v1159
      %v1674 = vpop.f32.mrb[0].mxu0
      %v1675 = vadd.f32 0.0, %v1674
      %v1676 = vpop.f32.mrb[0].mxu0
      %1677 = vmatprep.mubr.f32.mxu0 0.0
      %1678 = vmatmul.mubr.f32.gmra.mrb[0].mxu0 %v1161
      %v1679 = vpop.f32.mrb[0].mxu0
      %v1680 = vadd.f32 0.0, %v1679
      %v1681 = vpop.f32.mrb[0].mxu0
      %1682 = vmatprep.mubr.f32.mxu0 0.0
      %1683 = vmatmul.mubr.f32.gmra.mrb[0].mxu0 %v1163
      %v1684 = vpop.f32.mrb[0].mxu0
      %v1685 = vadd.f32 0.0, %v1684
      %v1686 = vpop.f32.mrb[0].mxu0
      %1687 = vmatprep.mubr.f32.mxu0 0.0
      %1688 = vmatmul.mubr.f32.gmra.mrb[0].mxu0 %v1165
      %v1689 = vpop.f32.mrb[0].mxu0
      %v1690 = vadd.f32 0.0, %v1689
      %v1691 = vpop.f32.mrb[0].mxu0
      %1692 = vmatprep.mubr.f32.mxu0 0.0
      %1693 = vmatmul.mubr.f32.gmra.mrb[0].mxu0 %v1167
      %v1694 = vpop.f32.mrb[0].mxu0
      %v1695 = vadd.f32 0.0, %v1694
      %v1696 = vpop.f32.mrb[0].mxu0
      %1697 = vmatprep.mubr.f32.mxu0 0.0
      %1698 = vmatmul.mubr.f32.gmra.mrb[0].mxu0 %v1169
      %v1699 = vpop.f32.mrb[0].mxu0
      %v1700 = vadd.f32 0.0, %v1699
      %v1701 = vpop.f32.mrb[0].mxu0
      %1702 = vmatprep.mubr.f32.mxu0 0.0
      %1703 = vmatmul.mubr.f32.gmra.mrb[0].mxu0 %v1461
      %v1704 = vpop.f32.mrb[0].mxu0
      %v1705 = vadd.f32 0.0, %v1704
      %v1706 = vpop.f32.mrb[0].mxu0
      %1707 = vmatprep.mubr.f32.mxu0 0.0
      %1708 = vmatmul.mubr.f32.gmra.mrb[0].mxu0 %v1463
      %v1709 = vpop.f32.mrb[0].mxu0
      %v1710 = vadd.f32 0.0, %v1709
      %v1711 = vpop.f32.mrb[0].mxu0
      %1712 = vdwg.mxu0
      %v1713 = vadd.f32 %v1419, %v1535
      %v1714 = vadd.f32 %v1420, %v1540
      %v1715 = vadd.f32 %v1421, %v1545
      %v1716 = vadd.f32 %v1422, %v1550
      %v1717 = vadd.f32 %v1423, %v1555
      %v1718 = vadd.f32 %v1424, %v1560
      %v1719 = vadd.f32 %v1425, %v1565
      %v1720 = vadd.f32 %v1426, %v1570
      %v1721 = vadd.f32 %v1427, %v1575
      %v1722 = vadd.f32 %v1428, %v1580
      %v1723 = vadd.f32 %v1429, %v1585
      %v1724 = vadd.f32 %v1430, %v1590
      %v1725 = vadd.f32 %v1431, %v1595
      %v1726 = vadd.f32 %v1432, %v1600
      %v1727 = vadd.f32 %v1433, %v1605
      %v1728 = vadd.f32 %v1434, %v1610
      %v1729 = vadd.f32 %v1435, %v1615
      %v1730 = vadd.f32 %v1436, %v1620
      %v1731 = vadd.f32 %v1437, %v1625
      %v1732 = vadd.f32 %v1438, %v1630
      %v1733 = vadd.f32 %v1439, %v1635
      %v1734 = vadd.f32 %v1440, %v1640
      %v1735 = vadd.f32 %v1441, %v1645
      %v1736 = vadd.f32 %v1442, %v1650
      %v1737 = vadd.f32 %v1443, %v1655
      %v1738 = vadd.f32 %v1444, %v1660
      %v1739 = vadd.f32 %v1445, %v1665
      %v1740 = vadd.f32 %v1446, %v1670
      %v1741 = vadd.f32 %v1447, %v1675
      %v1742 = vadd.f32 %v1448, %v1680
      %v1743 = vadd.f32 %v1449, %v1685
      %v1744 = vadd.f32 %v1450, %v1690
      %v1745 = vadd.f32 %v1451, %v1695
      %v1746 = vadd.f32 %v1452, %v1700
      %v1747 = vadd.f32 %v1453, %v1705
      %v1748 = vadd.f32 %v1454, %v1710
      %vm1749 = vcmask 1044480
      %v1750 = vrot.slane %v224, 3
      %v1751 = vrot.slane %v225, 3
      %v1752 = vsel %vm1749, %v1750, %v1751
      %v1753 = vrot.slane %v226, 3
      %v1754 = vsel %vm1749, %v1751, %v1753
      %v1755 = vrot.slane %v227, 3
      %v1756 = vsel %vm1749, %v1753, %v1755
      %v1757 = vrot.slane %v228, 3
      %v1758 = vsel %vm1749, %v1755, %v1757
      %v1759 = vrot.slane %v229, 3
      %v1760 = vsel %vm1749, %v1757, %v1759
      %v1761 = vrot.slane %v230, 3
      %v1762 = vsel %vm1749, %v1759, %v1761
      %v1763 = vrot.slane %v231, 3
      %v1764 = vsel %vm1749, %v1761, %v1763
      %v1765 = vrot.slane %v232, 3
      %v1766 = vsel %vm1749, %v1763, %v1765
      %v1767 = vrot.slane %v233, 3
      %v1768 = vsel %vm1749, %v1765, %v1767
      %v1769 = vrot.slane %v234, 3
      %v1770 = vsel %vm1749, %v1767, %v1769
      %v1771 = vrot.slane %v235, 3
      %v1772 = vsel %vm1749, %v1769, %v1771
      %v1773 = vrot.slane %v236, 3
      %v1774 = vsel %vm1749, %v1771, %v1773
      %v1775 = vrot.slane %v237, 3
      %v1776 = vsel %vm1749, %v1773, %v1775
      %v1777 = vrot.slane %v238, 3
      %v1778 = vsel %vm1749, %v1775, %v1777
      %v1779 = vrot.slane %v239, 3
      %v1780 = vsel %vm1749, %v1777, %v1779
      %v1781 = vrot.slane %v240, 3
      %v1782 = vsel %vm1749, %v1779, %v1781
      %v1783 = vrot.slane %v241, 3
      %v1784 = vsel %vm1749, %v1781, %v1783
      %v1785 = vrot.slane %v242, 3
      %v1786 = vsel %vm1749, %v1783, %v1785
      %v1787 = vrot.slane %v243, 3
      %v1788 = vsel %vm1749, %v1785, %v1787
      %v1789 = vrot.slane %v244, 3
      %v1790 = vsel %vm1749, %v1787, %v1789
      %v1791 = vrot.slane %v245, 3
      %v1792 = vsel %vm1749, %v1789, %v1791
      %v1793 = vrot.slane %v246, 3
      %v1794 = vsel %vm1749, %v1791, %v1793
      %v1795 = vrot.slane %v247, 3
      %v1796 = vsel %vm1749, %v1793, %v1795
      %v1797 = vrot.slane %v248, 3
      %v1798 = vsel %vm1749, %v1795, %v1797
      %v1799 = vrot.slane %v249, 3
      %v1800 = vsel %vm1749, %v1797, %v1799
      %v1801 = vrot.slane %v250, 3
      %v1802 = vsel %vm1749, %v1799, %v1801
      %v1803 = vrot.slane %v251, 3
      %v1804 = vsel %vm1749, %v1801, %v1803
      %v1805 = vrot.slane %v252, 3
      %v1806 = vsel %vm1749, %v1803, %v1805
      %v1807 = vrot.slane %v253, 3
      %v1808 = vsel %vm1749, %v1805, %v1807
      %v1809 = vrot.slane %v254, 3
      %v1810 = vsel %vm1749, %v1807, %v1809
      %v1811 = vrot.slane %v255, 3
      %v1812 = vsel %vm1749, %v1809, %v1811
      %v1813 = vrot.slane %v256, 3
      %v1814 = vsel %vm1749, %v1811, %v1813
      %v1815 = vrot.slane %v257, 3
      %v1816 = vsel %vm1749, %v1813, %v1815
      %v1817 = vrot.slane %v258, 3
      %v1818 = vsel %vm1749, %v1815, %v1817
      %v1819 = vrot.slane %v259, 3
      %v1820 = vsel %vm1749, %v1817, %v1819
      %v1821 = vrot.slane %v260, 3
      %v1822 = vsel %vm1749, %v1819, %v1821
      %v1823 = vsel %vm383, %v1752, 0
      %v1825 = vsel %vm383, %v1754, 0
      %v1827 = vsel %vm383, %v1756, 0
      %v1829 = vsel %vm383, %v1758, 0
      %v1831 = vsel %vm383, %v1760, 0
      %v1833 = vsel %vm383, %v1762, 0
      %v1835 = vsel %vm383, %v1764, 0
      %v1837 = vsel %vm383, %v1766, 0
      %v1839 = vsel %vm383, %v1768, 0
      %v1841 = vsel %vm383, %v1770, 0
      %v1843 = vsel %vm383, %v1772, 0
      %v1845 = vsel %vm383, %v1774, 0
      %v1847 = vsel %vm383, %v1776, 0
      %v1849 = vsel %vm383, %v1778, 0
      %v1851 = vsel %vm383, %v1780, 0
      %v1853 = vsel %vm383, %v1782, 0
      %v1855 = vsel %vm383, %v1784, 0
      %v1857 = vsel %vm383, %v1786, 0
      %v1859 = vsel %vm383, %v1788, 0
      %v1861 = vsel %vm383, %v1790, 0
      %v1863 = vsel %vm383, %v1792, 0
      %v1865 = vsel %vm383, %v1794, 0
      %v1867 = vsel %vm383, %v1796, 0
      %v1869 = vsel %vm383, %v1798, 0
      %v1871 = vsel %vm383, %v1800, 0
      %v1873 = vsel %vm383, %v1802, 0
      %v1875 = vsel %vm383, %v1804, 0
      %v1877 = vsel %vm383, %v1806, 0
      %v1879 = vsel %vm383, %v1808, 0
      %v1881 = vsel %vm383, %v1810, 0
      %v1883 = vsel %vm383, %v1812, 0
      %v1885 = vsel %vm383, %v1814, 0
      %v1887 = vsel %vm383, %v1816, 0
      %v1889 = vsel %vm383, %v1818, 0
      %v1891 = vsel %vm383, %v1820, 0
      %v1893 = vsel %vm383, %v1822, 0
      %v1896 = vsel %vm456, %v267, 0
      %1898 = vmatprep.subr.mxu0 0.0
      %1899 = vmatpush1.msra.mxu0 %v1896
      %1900 = vmatprep.subr.mxu0 0.0
      %1901 = vmatpush1.msra.mxu0 0.0
      %1902 = vmatprep.subr.mxu0 0.0
      %1903 = vmatpush1.msra.mxu0 0.0
      %1904 = vmatprep.subr.mxu0 0.0
      %1905 = vmatpush1.msra.mxu0 0.0
      %1906 = vmatprep.subr.mxu0 0.0
      %1907 = vmatpush1.msra.mxu0 0.0
      %1908 = vmatprep.subr.mxu0 0.0
      %1909 = vmatpush1.msra.mxu0 0.0
      %1910 = vmatprep.subr.mxu0 0.0
      %1911 = vmatpush1.msra.mxu0 0.0
      %1912 = vmatprep.subr.mxu0 0.0
      %1913 = vmatpush1.msra.mxu0 0.0
      %1914 = vmatprep.subr.mxu0 0.0
      %1915 = vmatpush1.msra.mxu0 0.0
      %1916 = vmatprep.subr.mxu0 0.0
      %1917 = vmatpush1.msra.mxu0 0.0
      %1918 = vmatprep.subr.mxu0 0.0
      %1919 = vmatpush1.msra.mxu0 0.0
      %1920 = vmatprep.subr.mxu0 0.0
      %1921 = vmatpush1.msra.mxu0 0.0
      %1922 = vmatprep.subr.mxu0 0.0
      %1923 = vmatpush1.msra.mxu0 0.0
      %1924 = vmatprep.subr.mxu0 0.0
      %1925 = vmatpush1.msra.mxu0 0.0
      %1926 = vmatprep.subr.mxu0 0.0
      %1927 = vmatpush1.msra.mxu0 0.0
      %1928 = vmatprep.subr.mxu0 0.0
      %1929 = vmatpush1.msra.mxu0 0.0
      %1930 = vmatprep.subr.mxu0 0.0
      %1931 = vmatpush1.msra.mxu0 0.0
      %1932 = vmatprep.subr.mxu0 0.0
      %1933 = vmatpush1.msra.mxu0 0.0
      %1934 = vmatprep.subr.mxu0 0.0
      %1935 = vmatpush1.msra.mxu0 0.0
      %1936 = vmatprep.subr.mxu0 0.0
      %1937 = vmatpush1.msra.mxu0 0.0
      %1938 = vmatprep.subr.mxu0 0.0
      %1939 = vmatpush1.msra.mxu0 0.0
      %1940 = vmatprep.subr.mxu0 0.0
      %1941 = vmatpush1.msra.mxu0 0.0
      %1942 = vmatprep.subr.mxu0 0.0
      %1943 = vmatpush1.msra.mxu0 0.0
      %1944 = vmatprep.subr.mxu0 0.0
      %1945 = vmatpush1.msra.mxu0 0.0
      %1946 = vmatprep.subr.mxu0 0.0
      %1947 = vmatpush1.msra.mxu0 0.0
      %1948 = vmatprep.subr.mxu0 0.0
      %1949 = vmatpush1.msra.mxu0 0.0
      %1950 = vmatprep.subr.mxu0 0.0
      %1951 = vmatpush1.msra.mxu0 0.0
      %1952 = vmatprep.subr.mxu0 0.0
      %1953 = vmatpush1.msra.mxu0 0.0
      %1954 = vmatprep.subr.mxu0 0.0
      %1955 = vmatpush1.msra.mxu0 0.0
      %1956 = vmatprep.subr.mxu0 0.0
      %1957 = vmatpush1.msra.mxu0 0.0
      %1958 = vmatprep.subr.mxu0 0.0
      %1959 = vmatpush1.msra.mxu0 0.0
      %1960 = vmatprep.subr.mxu0 0.0
      %1961 = vmatpush1.msra.mxu0 0.0
      %1962 = vmatprep.mubr.f32.mxu0 0.0
      %1963 = vmatmul.mubr.f32.gmra.mrb[0].mxu0 %v1823
      %v1964 = vpop.f32.mrb[0].mxu0
      %v1965 = vadd.f32 0.0, %v1964
      %v1966 = vpop.f32.mrb[0].mxu0
      %1967 = vmatprep.mubr.f32.mxu0 0.0
      %1968 = vmatmul.mubr.f32.gmra.mrb[0].mxu0 %v1825
      %v1969 = vpop.f32.mrb[0].mxu0
      %v1970 = vadd.f32 0.0, %v1969
      %v1971 = vpop.f32.mrb[0].mxu0
      %1972 = vmatprep.mubr.f32.mxu0 0.0
      %1973 = vmatmul.mubr.f32.gmra.mrb[0].mxu0 %v1827
      %v1974 = vpop.f32.mrb[0].mxu0
      %v1975 = vadd.f32 0.0, %v1974
      %v1976 = vpop.f32.mrb[0].mxu0
      %1977 = vmatprep.mubr.f32.mxu0 0.0
      %1978 = vmatmul.mubr.f32.gmra.mrb[0].mxu0 %v1829
      %v1979 = vpop.f32.mrb[0].mxu0
      %v1980 = vadd.f32 0.0, %v1979
      %v1981 = vpop.f32.mrb[0].mxu0
      %1982 = vmatprep.mubr.f32.mxu0 0.0
      %1983 = vmatmul.mubr.f32.gmra.mrb[0].mxu0 %v1831
      %v1984 = vpop.f32.mrb[0].mxu0
      %v1985 = vadd.f32 0.0, %v1984
      %v1986 = vpop.f32.mrb[0].mxu0
      %1987 = vmatprep.mubr.f32.mxu0 0.0
      %1988 = vmatmul.mubr.f32.gmra.mrb[0].mxu0 %v1833
      %v1989 = vpop.f32.mrb[0].mxu0
      %v1990 = vadd.f32 0.0, %v1989
      %v1991 = vpop.f32.mrb[0].mxu0
      %1992 = vmatprep.mubr.f32.mxu0 0.0
      %1993 = vmatmul.mubr.f32.gmra.mrb[0].mxu0 %v1835
      %v1994 = vpop.f32.mrb[0].mxu0
      %v1995 = vadd.f32 0.0, %v1994
      %v1996 = vpop.f32.mrb[0].mxu0
      %1997 = vmatprep.mubr.f32.mxu0 0.0
      %1998 = vmatmul.mubr.f32.gmra.mrb[0].mxu0 %v1837
      %v1999 = vpop.f32.mrb[0].mxu0
      %v2000 = vadd.f32 0.0, %v1999
      %v2001 = vpop.f32.mrb[0].mxu0
      %2002 = vmatprep.mubr.f32.mxu0 0.0
      %2003 = vmatmul.mubr.f32.gmra.mrb[0].mxu0 %v1839
      %v2004 = vpop.f32.mrb[0].mxu0
      %v2005 = vadd.f32 0.0, %v2004
      %v2006 = vpop.f32.mrb[0].mxu0
      %2007 = vmatprep.mubr.f32.mxu0 0.0
      %2008 = vmatmul.mubr.f32.gmra.mrb[0].mxu0 %v1841
      %v2009 = vpop.f32.mrb[0].mxu0
      %v2010 = vadd.f32 0.0, %v2009
      %v2011 = vpop.f32.mrb[0].mxu0
      %2012 = vmatprep.mubr.f32.mxu0 0.0
      %2013 = vmatmul.mubr.f32.gmra.mrb[0].mxu0 %v1843
      %v2014 = vpop.f32.mrb[0].mxu0
      %v2015 = vadd.f32 0.0, %v2014
      %v2016 = vpop.f32.mrb[0].mxu0
      %2017 = vmatprep.mubr.f32.mxu0 0.0
      %2018 = vmatmul.mubr.f32.gmra.mrb[0].mxu0 %v1845
      %v2019 = vpop.f32.mrb[0].mxu0
      %v2020 = vadd.f32 0.0, %v2019
      %v2021 = vpop.f32.mrb[0].mxu0
      %2022 = vmatprep.mubr.f32.mxu0 0.0
      %2023 = vmatmul.mubr.f32.gmra.mrb[0].mxu0 %v1847
      %v2024 = vpop.f32.mrb[0].mxu0
      %v2025 = vadd.f32 0.0, %v2024
      %v2026 = vpop.f32.mrb[0].mxu0
      %2027 = vmatprep.mubr.f32.mxu0 0.0
      %2028 = vmatmul.mubr.f32.gmra.mrb[0].mxu0 %v1849
      %v2029 = vpop.f32.mrb[0].mxu0
      %v2030 = vadd.f32 0.0, %v2029
      %v2031 = vpop.f32.mrb[0].mxu0
      %2032 = vmatprep.mubr.f32.mxu0 0.0
      %2033 = vmatmul.mubr.f32.gmra.mrb[0].mxu0 %v1851
      %v2034 = vpop.f32.mrb[0].mxu0
      %v2035 = vadd.f32 0.0, %v2034
      %v2036 = vpop.f32.mrb[0].mxu0
      %2037 = vmatprep.mubr.f32.mxu0 0.0
      %2038 = vmatmul.mubr.f32.gmra.mrb[0].mxu0 %v1853
      %v2039 = vpop.f32.mrb[0].mxu0
      %v2040 = vadd.f32 0.0, %v2039
      %v2041 = vpop.f32.mrb[0].mxu0
      %2042 = vmatprep.mubr.f32.mxu0 0.0
      %2043 = vmatmul.mubr.f32.gmra.mrb[0].mxu0 %v1855
      %v2044 = vpop.f32.mrb[0].mxu0
      %v2045 = vadd.f32 0.0, %v2044
      %v2046 = vpop.f32.mrb[0].mxu0
      %2047 = vmatprep.mubr.f32.mxu0 0.0
      %2048 = vmatmul.mubr.f32.gmra.mrb[0].mxu0 %v1857
      %v2049 = vpop.f32.mrb[0].mxu0
      %v2050 = vadd.f32 0.0, %v2049
      %v2051 = vpop.f32.mrb[0].mxu0
      %2052 = vmatprep.mubr.f32.mxu0 0.0
      %2053 = vmatmul.mubr.f32.gmra.mrb[0].mxu0 %v1859
      %v2054 = vpop.f32.mrb[0].mxu0
      %v2055 = vadd.f32 0.0, %v2054
      %v2056 = vpop.f32.mrb[0].mxu0
      %2057 = vmatprep.mubr.f32.mxu0 0.0
      %2058 = vmatmul.mubr.f32.gmra.mrb[0].mxu0 %v1861
      %v2059 = vpop.f32.mrb[0].mxu0
      %v2060 = vadd.f32 0.0, %v2059
      %v2061 = vpop.f32.mrb[0].mxu0
      %2062 = vmatprep.mubr.f32.mxu0 0.0
      %2063 = vmatmul.mubr.f32.gmra.mrb[0].mxu0 %v1863
      %v2064 = vpop.f32.mrb[0].mxu0
      %v2065 = vadd.f32 0.0, %v2064
      %v2066 = vpop.f32.mrb[0].mxu0
      %2067 = vmatprep.mubr.f32.mxu0 0.0
      %2068 = vmatmul.mubr.f32.gmra.mrb[0].mxu0 %v1865
      %v2069 = vpop.f32.mrb[0].mxu0
      %v2070 = vadd.f32 0.0, %v2069
      %v2071 = vpop.f32.mrb[0].mxu0
      %2072 = vmatprep.mubr.f32.mxu0 0.0
      %2073 = vmatmul.mubr.f32.gmra.mrb[0].mxu0 %v1867
      %v2074 = vpop.f32.mrb[0].mxu0
      %v2075 = vadd.f32 0.0, %v2074
      %v2076 = vpop.f32.mrb[0].mxu0
      %2077 = vmatprep.mubr.f32.mxu0 0.0
      %2078 = vmatmul.mubr.f32.gmra.mrb[0].mxu0 %v1869
      %v2079 = vpop.f32.mrb[0].mxu0
      %v2080 = vadd.f32 0.0, %v2079
      %v2081 = vpop.f32.mrb[0].mxu0
      %2082 = vmatprep.mubr.f32.mxu0 0.0
      %2083 = vmatmul.mubr.f32.gmra.mrb[0].mxu0 %v1871
      %v2084 = vpop.f32.mrb[0].mxu0
      %v2085 = vadd.f32 0.0, %v2084
      %v2086 = vpop.f32.mrb[0].mxu0
      %2087 = vmatprep.mubr.f32.mxu0 0.0
      %2088 = vmatmul.mubr.f32.gmra.mrb[0].mxu0 %v1873
      %v2089 = vpop.f32.mrb[0].mxu0
      %v2090 = vadd.f32 0.0, %v2089
      %v2091 = vpop.f32.mrb[0].mxu0
      %2092 = vmatprep.mubr.f32.mxu0 0.0
      %2093 = vmatmul.mubr.f32.gmra.mrb[0].mxu0 %v1875
      %v2094 = vpop.f32.mrb[0].mxu0
      %v2095 = vadd.f32 0.0, %v2094
      %v2096 = vpop.f32.mrb[0].mxu0
      %2097 = vmatprep.mubr.f32.mxu0 0.0
      %2098 = vmatmul.mubr.f32.gmra.mrb[0].mxu0 %v1877
      %v2099 = vpop.f32.mrb[0].mxu0
      %v2100 = vadd.f32 0.0, %v2099
      %v2101 = vpop.f32.mrb[0].mxu0
      %2102 = vmatprep.mubr.f32.mxu0 0.0
      %2103 = vmatmul.mubr.f32.gmra.mrb[0].mxu0 %v1879
      %v2104 = vpop.f32.mrb[0].mxu0
      %v2105 = vadd.f32 0.0, %v2104
      %v2106 = vpop.f32.mrb[0].mxu0
      %2107 = vmatprep.mubr.f32.mxu0 0.0
      %2108 = vmatmul.mubr.f32.gmra.mrb[0].mxu0 %v1881
      %v2109 = vpop.f32.mrb[0].mxu0
      %v2110 = vadd.f32 0.0, %v2109
      %v2111 = vpop.f32.mrb[0].mxu0
      %2112 = vmatprep.mubr.f32.mxu0 0.0
      %2113 = vmatmul.mubr.f32.gmra.mrb[0].mxu0 %v1883
      %v2114 = vpop.f32.mrb[0].mxu0
      %v2115 = vadd.f32 0.0, %v2114
      %v2116 = vpop.f32.mrb[0].mxu0
      %2117 = vmatprep.mubr.f32.mxu0 0.0
      %2118 = vmatmul.mubr.f32.gmra.mrb[0].mxu0 %v1885
      %v2119 = vpop.f32.mrb[0].mxu0
      %v2120 = vadd.f32 0.0, %v2119
      %v2121 = vpop.f32.mrb[0].mxu0
      %2122 = vmatprep.mubr.f32.mxu0 0.0
      %2123 = vmatmul.mubr.f32.gmra.mrb[0].mxu0 %v1887
      %v2124 = vpop.f32.mrb[0].mxu0
      %v2125 = vadd.f32 0.0, %v2124
      %v2126 = vpop.f32.mrb[0].mxu0
      %2127 = vmatprep.mubr.f32.mxu0 0.0
      %2128 = vmatmul.mubr.f32.gmra.mrb[0].mxu0 %v1889
      %v2129 = vpop.f32.mrb[0].mxu0
      %v2130 = vadd.f32 0.0, %v2129
      %v2131 = vpop.f32.mrb[0].mxu0
      %2132 = vmatprep.mubr.f32.mxu0 0.0
      %2133 = vmatmul.mubr.f32.gmra.mrb[0].mxu0 %v1891
      %v2134 = vpop.f32.mrb[0].mxu0
      %v2135 = vadd.f32 0.0, %v2134
      %v2136 = vpop.f32.mrb[0].mxu0
      %2137 = vmatprep.mubr.f32.mxu0 0.0
      %2138 = vmatmul.mubr.f32.gmra.mrb[0].mxu0 %v1893
      %v2139 = vpop.f32.mrb[0].mxu0
      %v2140 = vadd.f32 0.0, %v2139
      %v2141 = vpop.f32.mrb[0].mxu0
      %2142 = vdwg.mxu0
      %v2143 = vadd.f32 %v1713, %v1965
      %v2144 = vadd.f32 %v1714, %v1970
      %v2145 = vadd.f32 %v1715, %v1975
      %v2146 = vadd.f32 %v1716, %v1980
      %v2147 = vadd.f32 %v1717, %v1985
      %v2148 = vadd.f32 %v1718, %v1990
      %v2149 = vadd.f32 %v1719, %v1995
      %v2150 = vadd.f32 %v1720, %v2000
      %v2151 = vadd.f32 %v1721, %v2005
      %v2152 = vadd.f32 %v1722, %v2010
      %v2153 = vadd.f32 %v1723, %v2015
      %v2154 = vadd.f32 %v1724, %v2020
      %v2155 = vadd.f32 %v1725, %v2025
      %v2156 = vadd.f32 %v1726, %v2030
      %v2157 = vadd.f32 %v1727, %v2035
      %v2158 = vadd.f32 %v1728, %v2040
      %v2159 = vadd.f32 %v1729, %v2045
      %v2160 = vadd.f32 %v1730, %v2050
      %v2161 = vadd.f32 %v1731, %v2055
      %v2162 = vadd.f32 %v1732, %v2060
      %v2163 = vadd.f32 %v1733, %v2065
      %v2164 = vadd.f32 %v1734, %v2070
      %v2165 = vadd.f32 %v1735, %v2075
      %v2166 = vadd.f32 %v1736, %v2080
      %v2167 = vadd.f32 %v1737, %v2085
      %v2168 = vadd.f32 %v1738, %v2090
      %v2169 = vadd.f32 %v1739, %v2095
      %v2170 = vadd.f32 %v1740, %v2100
      %v2171 = vadd.f32 %v1741, %v2105
      %v2172 = vadd.f32 %v1742, %v2110
      %v2173 = vadd.f32 %v1743, %v2115
      %v2174 = vadd.f32 %v1744, %v2120
      %v2175 = vadd.f32 %v1745, %v2125
      %v2176 = vadd.f32 %v1746, %v2130
      %v2177 = vadd.f32 %v1747, %v2135
      %v2178 = vadd.f32 %v1748, %v2140
      %v2179 = vrot.slane %v224, 4
      %v2180 = vrot.slane %v225, 4
      %v2181 = vsel %vm456, %v2179, %v2180
      %v2182 = vrot.slane %v226, 4
      %v2183 = vsel %vm456, %v2180, %v2182
      %v2184 = vrot.slane %v227, 4
      %v2185 = vsel %vm456, %v2182, %v2184
      %v2186 = vrot.slane %v228, 4
      %v2187 = vsel %vm456, %v2184, %v2186
      %v2188 = vrot.slane %v229, 4
      %v2189 = vsel %vm456, %v2186, %v2188
      %v2190 = vrot.slane %v230, 4
      %v2191 = vsel %vm456, %v2188, %v2190
      %v2192 = vrot.slane %v231, 4
      %v2193 = vsel %vm456, %v2190, %v2192
      %v2194 = vrot.slane %v232, 4
      %v2195 = vsel %vm456, %v2192, %v2194
      %v2196 = vrot.slane %v233, 4
      %v2197 = vsel %vm456, %v2194, %v2196
      %v2198 = vrot.slane %v234, 4
      %v2199 = vsel %vm456, %v2196, %v2198
      %v2200 = vrot.slane %v235, 4
      %v2201 = vsel %vm456, %v2198, %v2200
      %v2202 = vrot.slane %v236, 4
      %v2203 = vsel %vm456, %v2200, %v2202
      %v2204 = vrot.slane %v237, 4
      %v2205 = vsel %vm456, %v2202, %v2204
      %v2206 = vrot.slane %v238, 4
      %v2207 = vsel %vm456, %v2204, %v2206
      %v2208 = vrot.slane %v239, 4
      %v2209 = vsel %vm456, %v2206, %v2208
      %v2210 = vrot.slane %v240, 4
      %v2211 = vsel %vm456, %v2208, %v2210
      %v2212 = vrot.slane %v241, 4
      %v2213 = vsel %vm456, %v2210, %v2212
      %v2214 = vrot.slane %v242, 4
      %v2215 = vsel %vm456, %v2212, %v2214
      %v2216 = vrot.slane %v243, 4
      %v2217 = vsel %vm456, %v2214, %v2216
      %v2218 = vrot.slane %v244, 4
      %v2219 = vsel %vm456, %v2216, %v2218
      %v2220 = vrot.slane %v245, 4
      %v2221 = vsel %vm456, %v2218, %v2220
      %v2222 = vrot.slane %v246, 4
      %v2223 = vsel %vm456, %v2220, %v2222
      %v2224 = vrot.slane %v247, 4
      %v2225 = vsel %vm456, %v2222, %v2224
      %v2226 = vrot.slane %v248, 4
      %v2227 = vsel %vm456, %v2224, %v2226
      %v2228 = vrot.slane %v249, 4
      %v2229 = vsel %vm456, %v2226, %v2228
      %v2230 = vrot.slane %v250, 4
      %v2231 = vsel %vm456, %v2228, %v2230
      %v2232 = vrot.slane %v251, 4
      %v2233 = vsel %vm456, %v2230, %v2232
      %v2234 = vrot.slane %v252, 4
      %v2235 = vsel %vm456, %v2232, %v2234
      %v2236 = vrot.slane %v253, 4
      %v2237 = vsel %vm456, %v2234, %v2236
      %v2238 = vrot.slane %v254, 4
      %v2239 = vsel %vm456, %v2236, %v2238
      %v2240 = vrot.slane %v255, 4
      %v2241 = vsel %vm456, %v2238, %v2240
      %v2242 = vrot.slane %v256, 4
      %v2243 = vsel %vm456, %v2240, %v2242
      %v2244 = vrot.slane %v257, 4
      %v2245 = vsel %vm456, %v2242, %v2244
      %v2246 = vrot.slane %v258, 4
      %v2247 = vsel %vm456, %v2244, %v2246
      %v2248 = vrot.slane %v259, 4
      %v2249 = vsel %vm456, %v2246, %v2248
      %v2250 = vrot.slane %v260, 4
      %v2251 = vsel %vm456, %v2248, %v2250
      %v2252 = vsel %vm383, %v2181, 0
      %v2254 = vsel %vm383, %v2183, 0
      %v2256 = vsel %vm383, %v2185, 0
      %v2258 = vsel %vm383, %v2187, 0
      %v2260 = vsel %vm383, %v2189, 0
      %v2262 = vsel %vm383, %v2191, 0
      %v2264 = vsel %vm383, %v2193, 0
      %v2266 = vsel %vm383, %v2195, 0
      %v2268 = vsel %vm383, %v2197, 0
      %v2270 = vsel %vm383, %v2199, 0
      %v2272 = vsel %vm383, %v2201, 0
      %v2274 = vsel %vm383, %v2203, 0
      %v2276 = vsel %vm383, %v2205, 0
      %v2278 = vsel %vm383, %v2207, 0
      %v2280 = vsel %vm383, %v2209, 0
      %v2282 = vsel %vm383, %v2211, 0
      %v2284 = vsel %vm383, %v2213, 0
      %v2286 = vsel %vm383, %v2215, 0
      %v2288 = vsel %vm383, %v2217, 0
      %v2290 = vsel %vm383, %v2219, 0
      %v2292 = vsel %vm383, %v2221, 0
      %v2294 = vsel %vm383, %v2223, 0
      %v2296 = vsel %vm383, %v2225, 0
      %v2298 = vsel %vm383, %v2227, 0
      %v2300 = vsel %vm383, %v2229, 0
      %v2302 = vsel %vm383, %v2231, 0
      %v2304 = vsel %vm383, %v2233, 0
      %v2306 = vsel %vm383, %v2235, 0
      %v2308 = vsel %vm383, %v2237, 0
      %v2310 = vsel %vm383, %v2239, 0
      %v2312 = vsel %vm383, %v2241, 0
      %v2314 = vsel %vm383, %v2243, 0
      %v2316 = vsel %vm383, %v2245, 0
      %v2318 = vsel %vm383, %v2247, 0
      %v2320 = vsel %vm383, %v2249, 0
      %v2322 = vsel %vm383, %v2251, 0
      %v2325 = vsel %vm456, %v268, 0
      %2327 = vmatprep.subr.mxu0 0.0
      %2328 = vmatpush1.msra.mxu0 %v2325
      %2329 = vmatprep.subr.mxu0 0.0
      %2330 = vmatpush1.msra.mxu0 0.0
      %2331 = vmatprep.subr.mxu0 0.0
      %2332 = vmatpush1.msra.mxu0 0.0
      %2333 = vmatprep.subr.mxu0 0.0
      %2334 = vmatpush1.msra.mxu0 0.0
      %2335 = vmatprep.subr.mxu0 0.0
      %2336 = vmatpush1.msra.mxu0 0.0
      %2337 = vmatprep.subr.mxu0 0.0
      %2338 = vmatpush1.msra.mxu0 0.0
      %2339 = vmatprep.subr.mxu0 0.0
      %2340 = vmatpush1.msra.mxu0 0.0
      %2341 = vmatprep.subr.mxu0 0.0
      %2342 = vmatpush1.msra.mxu0 0.0
      %2343 = vmatprep.subr.mxu0 0.0
      %2344 = vmatpush1.msra.mxu0 0.0
      %2345 = vmatprep.subr.mxu0 0.0
      %2346 = vmatpush1.msra.mxu0 0.0
      %2347 = vmatprep.subr.mxu0 0.0
      %2348 = vmatpush1.msra.mxu0 0.0
      %2349 = vmatprep.subr.mxu0 0.0
      %2350 = vmatpush1.msra.mxu0 0.0
      %2351 = vmatprep.subr.mxu0 0.0
      %2352 = vmatpush1.msra.mxu0 0.0
      %2353 = vmatprep.subr.mxu0 0.0
      %2354 = vmatpush1.msra.mxu0 0.0
      %2355 = vmatprep.subr.mxu0 0.0
      %2356 = vmatpush1.msra.mxu0 0.0
      %2357 = vmatprep.subr.mxu0 0.0
      %2358 = vmatpush1.msra.mxu0 0.0
      %2359 = vmatprep.subr.mxu0 0.0
      %2360 = vmatpush1.msra.mxu0 0.0
      %2361 = vmatprep.subr.mxu0 0.0
      %2362 = vmatpush1.msra.mxu0 0.0
      %2363 = vmatprep.subr.mxu0 0.0
      %2364 = vmatpush1.msra.mxu0 0.0
      %2365 = vmatprep.subr.mxu0 0.0
      %2366 = vmatpush1.msra.mxu0 0.0
      %2367 = vmatprep.subr.mxu0 0.0
      %2368 = vmatpush1.msra.mxu0 0.0
      %2369 = vmatprep.subr.mxu0 0.0
      %2370 = vmatpush1.msra.mxu0 0.0
      %2371 = vmatprep.subr.mxu0 0.0
      %2372 = vmatpush1.msra.mxu0 0.0
      %2373 = vmatprep.subr.mxu0 0.0
      %2374 = vmatpush1.msra.mxu0 0.0
      %2375 = vmatprep.subr.mxu0 0.0
      %2376 = vmatpush1.msra.mxu0 0.0
      %2377 = vmatprep.subr.mxu0 0.0
      %2378 = vmatpush1.msra.mxu0 0.0
      %2379 = vmatprep.subr.mxu0 0.0
      %2380 = vmatpush1.msra.mxu0 0.0
      %2381 = vmatprep.subr.mxu0 0.0
      %2382 = vmatpush1.msra.mxu0 0.0
      %2383 = vmatprep.subr.mxu0 0.0
      %2384 = vmatpush1.msra.mxu0 0.0
      %2385 = vmatprep.subr.mxu0 0.0
      %2386 = vmatpush1.msra.mxu0 0.0
      %2387 = vmatprep.subr.mxu0 0.0
      %2388 = vmatpush1.msra.mxu0 0.0
      %2389 = vmatprep.subr.mxu0 0.0
      %2390 = vmatpush1.msra.mxu0 0.0
      %2391 = vmatprep.mubr.f32.mxu0 0.0
      %2392 = vmatmul.mubr.f32.gmra.mrb[0].mxu0 %v2252
      %v2393 = vpop.f32.mrb[0].mxu0
      %v2394 = vadd.f32 0.0, %v2393
      %v2395 = vpop.f32.mrb[0].mxu0
      %2396 = vmatprep.mubr.f32.mxu0 0.0
      %2397 = vmatmul.mubr.f32.gmra.mrb[0].mxu0 %v2254
      %v2398 = vpop.f32.mrb[0].mxu0
      %v2399 = vadd.f32 0.0, %v2398
      %v2400 = vpop.f32.mrb[0].mxu0
      %2401 = vmatprep.mubr.f32.mxu0 0.0
      %2402 = vmatmul.mubr.f32.gmra.mrb[0].mxu0 %v2256
      %v2403 = vpop.f32.mrb[0].mxu0
      %v2404 = vadd.f32 0.0, %v2403
      %v2405 = vpop.f32.mrb[0].mxu0
      %2406 = vmatprep.mubr.f32.mxu0 0.0
      %2407 = vmatmul.mubr.f32.gmra.mrb[0].mxu0 %v2258
      %v2408 = vpop.f32.mrb[0].mxu0
      %v2409 = vadd.f32 0.0, %v2408
      %v2410 = vpop.f32.mrb[0].mxu0
      %2411 = vmatprep.mubr.f32.mxu0 0.0
      %2412 = vmatmul.mubr.f32.gmra.mrb[0].mxu0 %v2260
      %v2413 = vpop.f32.mrb[0].mxu0
      %v2414 = vadd.f32 0.0, %v2413
      %v2415 = vpop.f32.mrb[0].mxu0
      %2416 = vmatprep.mubr.f32.mxu0 0.0
      %2417 = vmatmul.mubr.f32.gmra.mrb[0].mxu0 %v2262
      %v2418 = vpop.f32.mrb[0].mxu0
      %v2419 = vadd.f32 0.0, %v2418
      %v2420 = vpop.f32.mrb[0].mxu0
      %2421 = vmatprep.mubr.f32.mxu0 0.0
      %2422 = vmatmul.mubr.f32.gmra.mrb[0].mxu0 %v2264
      %v2423 = vpop.f32.mrb[0].mxu0
      %v2424 = vadd.f32 0.0, %v2423
      %v2425 = vpop.f32.mrb[0].mxu0
      %2426 = vmatprep.mubr.f32.mxu0 0.0
      %2427 = vmatmul.mubr.f32.gmra.mrb[0].mxu0 %v2266
      %v2428 = vpop.f32.mrb[0].mxu0
      %v2429 = vadd.f32 0.0, %v2428
      %v2430 = vpop.f32.mrb[0].mxu0
      %2431 = vmatprep.mubr.f32.mxu0 0.0
      %2432 = vmatmul.mubr.f32.gmra.mrb[0].mxu0 %v2268
      %v2433 = vpop.f32.mrb[0].mxu0
      %v2434 = vadd.f32 0.0, %v2433
      %v2435 = vpop.f32.mrb[0].mxu0
      %2436 = vmatprep.mubr.f32.mxu0 0.0
      %2437 = vmatmul.mubr.f32.gmra.mrb[0].mxu0 %v2270
      %v2438 = vpop.f32.mrb[0].mxu0
      %v2439 = vadd.f32 0.0, %v2438
      %v2440 = vpop.f32.mrb[0].mxu0
      %2441 = vmatprep.mubr.f32.mxu0 0.0
      %2442 = vmatmul.mubr.f32.gmra.mrb[0].mxu0 %v2272
      %v2443 = vpop.f32.mrb[0].mxu0
      %v2444 = vadd.f32 0.0, %v2443
      %v2445 = vpop.f32.mrb[0].mxu0
      %2446 = vmatprep.mubr.f32.mxu0 0.0
      %2447 = vmatmul.mubr.f32.gmra.mrb[0].mxu0 %v2274
      %v2448 = vpop.f32.mrb[0].mxu0
      %v2449 = vadd.f32 0.0, %v2448
      %v2450 = vpop.f32.mrb[0].mxu0
      %2451 = vmatprep.mubr.f32.mxu0 0.0
      %2452 = vmatmul.mubr.f32.gmra.mrb[0].mxu0 %v2276
      %v2453 = vpop.f32.mrb[0].mxu0
      %v2454 = vadd.f32 0.0, %v2453
      %v2455 = vpop.f32.mrb[0].mxu0
      %2456 = vmatprep.mubr.f32.mxu0 0.0
      %2457 = vmatmul.mubr.f32.gmra.mrb[0].mxu0 %v2278
      %v2458 = vpop.f32.mrb[0].mxu0
      %v2459 = vadd.f32 0.0, %v2458
      %v2460 = vpop.f32.mrb[0].mxu0
      %2461 = vmatprep.mubr.f32.mxu0 0.0
      %2462 = vmatmul.mubr.f32.gmra.mrb[0].mxu0 %v2280
      %v2463 = vpop.f32.mrb[0].mxu0
      %v2464 = vadd.f32 0.0, %v2463
      %v2465 = vpop.f32.mrb[0].mxu0
      %2466 = vmatprep.mubr.f32.mxu0 0.0
      %2467 = vmatmul.mubr.f32.gmra.mrb[0].mxu0 %v2282
      %v2468 = vpop.f32.mrb[0].mxu0
      %v2469 = vadd.f32 0.0, %v2468
      %v2470 = vpop.f32.mrb[0].mxu0
      %2471 = vmatprep.mubr.f32.mxu0 0.0
      %2472 = vmatmul.mubr.f32.gmra.mrb[0].mxu0 %v2284
      %v2473 = vpop.f32.mrb[0].mxu0
      %v2474 = vadd.f32 0.0, %v2473
      %v2475 = vpop.f32.mrb[0].mxu0
      %2476 = vmatprep.mubr.f32.mxu0 0.0
      %2477 = vmatmul.mubr.f32.gmra.mrb[0].mxu0 %v2286
      %v2478 = vpop.f32.mrb[0].mxu0
      %v2479 = vadd.f32 0.0, %v2478
      %v2480 = vpop.f32.mrb[0].mxu0
      %2481 = vmatprep.mubr.f32.mxu0 0.0
      %2482 = vmatmul.mubr.f32.gmra.mrb[0].mxu0 %v2288
      %v2483 = vpop.f32.mrb[0].mxu0
      %v2484 = vadd.f32 0.0, %v2483
      %v2485 = vpop.f32.mrb[0].mxu0
      %2486 = vmatprep.mubr.f32.mxu0 0.0
      %2487 = vmatmul.mubr.f32.gmra.mrb[0].mxu0 %v2290
      %v2488 = vpop.f32.mrb[0].mxu0
      %v2489 = vadd.f32 0.0, %v2488
      %v2490 = vpop.f32.mrb[0].mxu0
      %2491 = vmatprep.mubr.f32.mxu0 0.0
      %2492 = vmatmul.mubr.f32.gmra.mrb[0].mxu0 %v2292
      %v2493 = vpop.f32.mrb[0].mxu0
      %v2494 = vadd.f32 0.0, %v2493
      %v2495 = vpop.f32.mrb[0].mxu0
      %2496 = vmatprep.mubr.f32.mxu0 0.0
      %2497 = vmatmul.mubr.f32.gmra.mrb[0].mxu0 %v2294
      %v2498 = vpop.f32.mrb[0].mxu0
      %v2499 = vadd.f32 0.0, %v2498
      %v2500 = vpop.f32.mrb[0].mxu0
      %2501 = vmatprep.mubr.f32.mxu0 0.0
      %2502 = vmatmul.mubr.f32.gmra.mrb[0].mxu0 %v2296
      %v2503 = vpop.f32.mrb[0].mxu0
      %v2504 = vadd.f32 0.0, %v2503
      %v2505 = vpop.f32.mrb[0].mxu0
      %2506 = vmatprep.mubr.f32.mxu0 0.0
      %2507 = vmatmul.mubr.f32.gmra.mrb[0].mxu0 %v2298
      %v2508 = vpop.f32.mrb[0].mxu0
      %v2509 = vadd.f32 0.0, %v2508
      %v2510 = vpop.f32.mrb[0].mxu0
      %2511 = vmatprep.mubr.f32.mxu0 0.0
      %2512 = vmatmul.mubr.f32.gmra.mrb[0].mxu0 %v2300
      %v2513 = vpop.f32.mrb[0].mxu0
      %v2514 = vadd.f32 0.0, %v2513
      %v2515 = vpop.f32.mrb[0].mxu0
      %2516 = vmatprep.mubr.f32.mxu0 0.0
      %2517 = vmatmul.mubr.f32.gmra.mrb[0].mxu0 %v2302
      %v2518 = vpop.f32.mrb[0].mxu0
      %v2519 = vadd.f32 0.0, %v2518
      %v2520 = vpop.f32.mrb[0].mxu0
      %2521 = vmatprep.mubr.f32.mxu0 0.0
      %2522 = vmatmul.mubr.f32.gmra.mrb[0].mxu0 %v2304
      %v2523 = vpop.f32.mrb[0].mxu0
      %v2524 = vadd.f32 0.0, %v2523
      %v2525 = vpop.f32.mrb[0].mxu0
      %2526 = vmatprep.mubr.f32.mxu0 0.0
      %2527 = vmatmul.mubr.f32.gmra.mrb[0].mxu0 %v2306
      %v2528 = vpop.f32.mrb[0].mxu0
      %v2529 = vadd.f32 0.0, %v2528
      %v2530 = vpop.f32.mrb[0].mxu0
      %2531 = vmatprep.mubr.f32.mxu0 0.0
      %2532 = vmatmul.mubr.f32.gmra.mrb[0].mxu0 %v2308
      %v2533 = vpop.f32.mrb[0].mxu0
      %v2534 = vadd.f32 0.0, %v2533
      %v2535 = vpop.f32.mrb[0].mxu0
      %2536 = vmatprep.mubr.f32.mxu0 0.0
      %2537 = vmatmul.mubr.f32.gmra.mrb[0].mxu0 %v2310
      %v2538 = vpop.f32.mrb[0].mxu0
      %v2539 = vadd.f32 0.0, %v2538
      %v2540 = vpop.f32.mrb[0].mxu0
      %2541 = vmatprep.mubr.f32.mxu0 0.0
      %2542 = vmatmul.mubr.f32.gmra.mrb[0].mxu0 %v2312
      %v2543 = vpop.f32.mrb[0].mxu0
      %v2544 = vadd.f32 0.0, %v2543
      %v2545 = vpop.f32.mrb[0].mxu0
      %2546 = vmatprep.mubr.f32.mxu0 0.0
      %2547 = vmatmul.mubr.f32.gmra.mrb[0].mxu0 %v2314
      %v2548 = vpop.f32.mrb[0].mxu0
      %v2549 = vadd.f32 0.0, %v2548
      %v2550 = vpop.f32.mrb[0].mxu0
      %2551 = vmatprep.mubr.f32.mxu0 0.0
      %2552 = vmatmul.mubr.f32.gmra.mrb[0].mxu0 %v2316
      %v2553 = vpop.f32.mrb[0].mxu0
      %v2554 = vadd.f32 0.0, %v2553
      %v2555 = vpop.f32.mrb[0].mxu0
      %2556 = vmatprep.mubr.f32.mxu0 0.0
      %2557 = vmatmul.mubr.f32.gmra.mrb[0].mxu0 %v2318
      %v2558 = vpop.f32.mrb[0].mxu0
      %v2559 = vadd.f32 0.0, %v2558
      %v2560 = vpop.f32.mrb[0].mxu0
      %2561 = vmatprep.mubr.f32.mxu0 0.0
      %2562 = vmatmul.mubr.f32.gmra.mrb[0].mxu0 %v2320
      %v2563 = vpop.f32.mrb[0].mxu0
      %v2564 = vadd.f32 0.0, %v2563
      %v2565 = vpop.f32.mrb[0].mxu0
      %2566 = vmatprep.mubr.f32.mxu0 0.0
      %2567 = vmatmul.mubr.f32.gmra.mrb[0].mxu0 %v2322
      %v2568 = vpop.f32.mrb[0].mxu0
      %v2569 = vadd.f32 0.0, %v2568
      %v2570 = vpop.f32.mrb[0].mxu0
      %2571 = vdwg.mxu0
      %v2572 = vadd.f32 %v2143, %v2394
      %v2573 = vadd.f32 %v2144, %v2399
      %v2574 = vadd.f32 %v2145, %v2404
      %v2575 = vadd.f32 %v2146, %v2409
      %v2576 = vadd.f32 %v2147, %v2414
      %v2577 = vadd.f32 %v2148, %v2419
      %v2578 = vadd.f32 %v2149, %v2424
      %v2579 = vadd.f32 %v2150, %v2429
      %v2580 = vadd.f32 %v2151, %v2434
      %v2581 = vadd.f32 %v2152, %v2439
      %v2582 = vadd.f32 %v2153, %v2444
      %v2583 = vadd.f32 %v2154, %v2449
      %v2584 = vadd.f32 %v2155, %v2454
      %v2585 = vadd.f32 %v2156, %v2459
      %v2586 = vadd.f32 %v2157, %v2464
      %v2587 = vadd.f32 %v2158, %v2469
      %v2588 = vadd.f32 %v2159, %v2474
      %v2589 = vadd.f32 %v2160, %v2479
      %v2590 = vadd.f32 %v2161, %v2484
      %v2591 = vadd.f32 %v2162, %v2489
      %v2592 = vadd.f32 %v2163, %v2494
      %v2593 = vadd.f32 %v2164, %v2499
      %v2594 = vadd.f32 %v2165, %v2504
      %v2595 = vadd.f32 %v2166, %v2509
      %v2596 = vadd.f32 %v2167, %v2514
      %v2597 = vadd.f32 %v2168, %v2519
      %v2598 = vadd.f32 %v2169, %v2524
      %v2599 = vadd.f32 %v2170, %v2529
      %v2600 = vadd.f32 %v2171, %v2534
      %v2601 = vadd.f32 %v2172, %v2539
      %v2602 = vadd.f32 %v2173, %v2544
      %v2603 = vadd.f32 %v2174, %v2549
      %v2604 = vadd.f32 %v2175, %v2554
      %v2605 = vadd.f32 %v2176, %v2559
      %v2606 = vadd.f32 %v2177, %v2564
      %v2607 = vadd.f32 %v2178, %v2569
      %v2610 = vrot.slane %v261, 4
      %v2611 = vsel %vm456, %v2250, %v2610
      %v2612 = vrot.slane %v262, 4
      %v2613 = vsel %vm456, %v2610, %v2612
      %v2614 = vsel %vm383, %v2611, 0
      %v2616 = vsel %vm383, %v2613, 0
      %v2619 = vsel %vm456, %v269, 0
      %2621 = vmatprep.subr.mxu0 0.0
      %2622 = vmatpush1.msra.mxu0 %v2619
      %2623 = vmatprep.subr.mxu0 0.0
      %2624 = vmatpush1.msra.mxu0 0.0
      %2625 = vmatprep.subr.mxu0 0.0
      %2626 = vmatpush1.msra.mxu0 0.0
      %2627 = vmatprep.subr.mxu0 0.0
      %2628 = vmatpush1.msra.mxu0 0.0
      %2629 = vmatprep.subr.mxu0 0.0
      %2630 = vmatpush1.msra.mxu0 0.0
      %2631 = vmatprep.subr.mxu0 0.0
      %2632 = vmatpush1.msra.mxu0 0.0
      %2633 = vmatprep.subr.mxu0 0.0
      %2634 = vmatpush1.msra.mxu0 0.0
      %2635 = vmatprep.subr.mxu0 0.0
      %2636 = vmatpush1.msra.mxu0 0.0
      %2637 = vmatprep.subr.mxu0 0.0
      %2638 = vmatpush1.msra.mxu0 0.0
      %2639 = vmatprep.subr.mxu0 0.0
      %2640 = vmatpush1.msra.mxu0 0.0
      %2641 = vmatprep.subr.mxu0 0.0
      %2642 = vmatpush1.msra.mxu0 0.0
      %2643 = vmatprep.subr.mxu0 0.0
      %2644 = vmatpush1.msra.mxu0 0.0
      %2645 = vmatprep.subr.mxu0 0.0
      %2646 = vmatpush1.msra.mxu0 0.0
      %2647 = vmatprep.subr.mxu0 0.0
      %2648 = vmatpush1.msra.mxu0 0.0
      %2649 = vmatprep.subr.mxu0 0.0
      %2650 = vmatpush1.msra.mxu0 0.0
      %2651 = vmatprep.subr.mxu0 0.0
      %2652 = vmatpush1.msra.mxu0 0.0
      %2653 = vmatprep.subr.mxu0 0.0
      %2654 = vmatpush1.msra.mxu0 0.0
      %2655 = vmatprep.subr.mxu0 0.0
      %2656 = vmatpush1.msra.mxu0 0.0
      %2657 = vmatprep.subr.mxu0 0.0
      %2658 = vmatpush1.msra.mxu0 0.0
      %2659 = vmatprep.subr.mxu0 0.0
      %2660 = vmatpush1.msra.mxu0 0.0
      %2661 = vmatprep.subr.mxu0 0.0
      %2662 = vmatpush1.msra.mxu0 0.0
      %2663 = vmatprep.subr.mxu0 0.0
      %2664 = vmatpush1.msra.mxu0 0.0
      %2665 = vmatprep.subr.mxu0 0.0
      %2666 = vmatpush1.msra.mxu0 0.0
      %2667 = vmatprep.subr.mxu0 0.0
      %2668 = vmatpush1.msra.mxu0 0.0
      %2669 = vmatprep.subr.mxu0 0.0
      %2670 = vmatpush1.msra.mxu0 0.0
      %2671 = vmatprep.subr.mxu0 0.0
      %2672 = vmatpush1.msra.mxu0 0.0
      %2673 = vmatprep.subr.mxu0 0.0
      %2674 = vmatpush1.msra.mxu0 0.0
      %2675 = vmatprep.subr.mxu0 0.0
      %2676 = vmatpush1.msra.mxu0 0.0
      %2677 = vmatprep.subr.mxu0 0.0
      %2678 = vmatpush1.msra.mxu0 0.0
      %2679 = vmatprep.subr.mxu0 0.0
      %2680 = vmatpush1.msra.mxu0 0.0
      %2681 = vmatprep.subr.mxu0 0.0
      %2682 = vmatpush1.msra.mxu0 0.0
      %2683 = vmatprep.subr.mxu0 0.0
      %2684 = vmatpush1.msra.mxu0 0.0
      %2685 = vmatprep.mubr.f32.mxu0 0.0
      %2686 = vmatmul.mubr.f32.gmra.mrb[0].mxu0 %v2256
      %v2687 = vpop.f32.mrb[0].mxu0
      %v2688 = vadd.f32 0.0, %v2687
      %v2689 = vpop.f32.mrb[0].mxu0
      %2690 = vmatprep.mubr.f32.mxu0 0.0
      %2691 = vmatmul.mubr.f32.gmra.mrb[0].mxu0 %v2258
      %v2692 = vpop.f32.mrb[0].mxu0
      %v2693 = vadd.f32 0.0, %v2692
      %v2694 = vpop.f32.mrb[0].mxu0
      %2695 = vmatprep.mubr.f32.mxu0 0.0
      %2696 = vmatmul.mubr.f32.gmra.mrb[0].mxu0 %v2260
      %v2697 = vpop.f32.mrb[0].mxu0
      %v2698 = vadd.f32 0.0, %v2697
      %v2699 = vpop.f32.mrb[0].mxu0
      %2700 = vmatprep.mubr.f32.mxu0 0.0
      %2701 = vmatmul.mubr.f32.gmra.mrb[0].mxu0 %v2262
      %v2702 = vpop.f32.mrb[0].mxu0
      %v2703 = vadd.f32 0.0, %v2702
      %v2704 = vpop.f32.mrb[0].mxu0
      %2705 = vmatprep.mubr.f32.mxu0 0.0
      %2706 = vmatmul.mubr.f32.gmra.mrb[0].mxu0 %v2264
      %v2707 = vpop.f32.mrb[0].mxu0
      %v2708 = vadd.f32 0.0, %v2707
      %v2709 = vpop.f32.mrb[0].mxu0
      %2710 = vmatprep.mubr.f32.mxu0 0.0
      %2711 = vmatmul.mubr.f32.gmra.mrb[0].mxu0 %v2266
      %v2712 = vpop.f32.mrb[0].mxu0
      %v2713 = vadd.f32 0.0, %v2712
      %v2714 = vpop.f32.mrb[0].mxu0
      %2715 = vmatprep.mubr.f32.mxu0 0.0
      %2716 = vmatmul.mubr.f32.gmra.mrb[0].mxu0 %v2268
      %v2717 = vpop.f32.mrb[0].mxu0
      %v2718 = vadd.f32 0.0, %v2717
      %v2719 = vpop.f32.mrb[0].mxu0
      %2720 = vmatprep.mubr.f32.mxu0 0.0
      %2721 = vmatmul.mubr.f32.gmra.mrb[0].mxu0 %v2270
      %v2722 = vpop.f32.mrb[0].mxu0
      %v2723 = vadd.f32 0.0, %v2722
      %v2724 = vpop.f32.mrb[0].mxu0
      %2725 = vmatprep.mubr.f32.mxu0 0.0
      %2726 = vmatmul.mubr.f32.gmra.mrb[0].mxu0 %v2272
      %v2727 = vpop.f32.mrb[0].mxu0
      %v2728 = vadd.f32 0.0, %v2727
      %v2729 = vpop.f32.mrb[0].mxu0
      %2730 = vmatprep.mubr.f32.mxu0 0.0
      %2731 = vmatmul.mubr.f32.gmra.mrb[0].mxu0 %v2274
      %v2732 = vpop.f32.mrb[0].mxu0
      %v2733 = vadd.f32 0.0, %v2732
      %v2734 = vpop.f32.mrb[0].mxu0
      %2735 = vmatprep.mubr.f32.mxu0 0.0
      %2736 = vmatmul.mubr.f32.gmra.mrb[0].mxu0 %v2276
      %v2737 = vpop.f32.mrb[0].mxu0
      %v2738 = vadd.f32 0.0, %v2737
      %v2739 = vpop.f32.mrb[0].mxu0
      %2740 = vmatprep.mubr.f32.mxu0 0.0
      %2741 = vmatmul.mubr.f32.gmra.mrb[0].mxu0 %v2278
      %v2742 = vpop.f32.mrb[0].mxu0
      %v2743 = vadd.f32 0.0, %v2742
      %v2744 = vpop.f32.mrb[0].mxu0
      %2745 = vmatprep.mubr.f32.mxu0 0.0
      %2746 = vmatmul.mubr.f32.gmra.mrb[0].mxu0 %v2280
      %v2747 = vpop.f32.mrb[0].mxu0
      %v2748 = vadd.f32 0.0, %v2747
      %v2749 = vpop.f32.mrb[0].mxu0
      %2750 = vmatprep.mubr.f32.mxu0 0.0
      %2751 = vmatmul.mubr.f32.gmra.mrb[0].mxu0 %v2282
      %v2752 = vpop.f32.mrb[0].mxu0
      %v2753 = vadd.f32 0.0, %v2752
      %v2754 = vpop.f32.mrb[0].mxu0
      %2755 = vmatprep.mubr.f32.mxu0 0.0
      %2756 = vmatmul.mubr.f32.gmra.mrb[0].mxu0 %v2284
      %v2757 = vpop.f32.mrb[0].mxu0
      %v2758 = vadd.f32 0.0, %v2757
      %v2759 = vpop.f32.mrb[0].mxu0
      %2760 = vmatprep.mubr.f32.mxu0 0.0
      %2761 = vmatmul.mubr.f32.gmra.mrb[0].mxu0 %v2286
      %v2762 = vpop.f32.mrb[0].mxu0
      %v2763 = vadd.f32 0.0, %v2762
      %v2764 = vpop.f32.mrb[0].mxu0
      %2765 = vmatprep.mubr.f32.mxu0 0.0
      %2766 = vmatmul.mubr.f32.gmra.mrb[0].mxu0 %v2288
      %v2767 = vpop.f32.mrb[0].mxu0
      %v2768 = vadd.f32 0.0, %v2767
      %v2769 = vpop.f32.mrb[0].mxu0
      %2770 = vmatprep.mubr.f32.mxu0 0.0
      %2771 = vmatmul.mubr.f32.gmra.mrb[0].mxu0 %v2290
      %v2772 = vpop.f32.mrb[0].mxu0
      %v2773 = vadd.f32 0.0, %v2772
      %v2774 = vpop.f32.mrb[0].mxu0
      %2775 = vmatprep.mubr.f32.mxu0 0.0
      %2776 = vmatmul.mubr.f32.gmra.mrb[0].mxu0 %v2292
      %v2777 = vpop.f32.mrb[0].mxu0
      %v2778 = vadd.f32 0.0, %v2777
      %v2779 = vpop.f32.mrb[0].mxu0
      %2780 = vmatprep.mubr.f32.mxu0 0.0
      %2781 = vmatmul.mubr.f32.gmra.mrb[0].mxu0 %v2294
      %v2782 = vpop.f32.mrb[0].mxu0
      %v2783 = vadd.f32 0.0, %v2782
      %v2784 = vpop.f32.mrb[0].mxu0
      %2785 = vmatprep.mubr.f32.mxu0 0.0
      %2786 = vmatmul.mubr.f32.gmra.mrb[0].mxu0 %v2296
      %v2787 = vpop.f32.mrb[0].mxu0
      %v2788 = vadd.f32 0.0, %v2787
      %v2789 = vpop.f32.mrb[0].mxu0
      %2790 = vmatprep.mubr.f32.mxu0 0.0
      %2791 = vmatmul.mubr.f32.gmra.mrb[0].mxu0 %v2298
      %v2792 = vpop.f32.mrb[0].mxu0
      %v2793 = vadd.f32 0.0, %v2792
      %v2794 = vpop.f32.mrb[0].mxu0
      %2795 = vmatprep.mubr.f32.mxu0 0.0
      %2796 = vmatmul.mubr.f32.gmra.mrb[0].mxu0 %v2300
      %v2797 = vpop.f32.mrb[0].mxu0
      %v2798 = vadd.f32 0.0, %v2797
      %v2799 = vpop.f32.mrb[0].mxu0
      %2800 = vmatprep.mubr.f32.mxu0 0.0
      %2801 = vmatmul.mubr.f32.gmra.mrb[0].mxu0 %v2302
      %v2802 = vpop.f32.mrb[0].mxu0
      %v2803 = vadd.f32 0.0, %v2802
      %v2804 = vpop.f32.mrb[0].mxu0
      %2805 = vmatprep.mubr.f32.mxu0 0.0
      %2806 = vmatmul.mubr.f32.gmra.mrb[0].mxu0 %v2304
      %v2807 = vpop.f32.mrb[0].mxu0
      %v2808 = vadd.f32 0.0, %v2807
      %v2809 = vpop.f32.mrb[0].mxu0
      %2810 = vmatprep.mubr.f32.mxu0 0.0
      %2811 = vmatmul.mubr.f32.gmra.mrb[0].mxu0 %v2306
      %v2812 = vpop.f32.mrb[0].mxu0
      %v2813 = vadd.f32 0.0, %v2812
      %v2814 = vpop.f32.mrb[0].mxu0
      %2815 = vmatprep.mubr.f32.mxu0 0.0
      %2816 = vmatmul.mubr.f32.gmra.mrb[0].mxu0 %v2308
      %v2817 = vpop.f32.mrb[0].mxu0
      %v2818 = vadd.f32 0.0, %v2817
      %v2819 = vpop.f32.mrb[0].mxu0
      %2820 = vmatprep.mubr.f32.mxu0 0.0
      %2821 = vmatmul.mubr.f32.gmra.mrb[0].mxu0 %v2310
      %v2822 = vpop.f32.mrb[0].mxu0
      %v2823 = vadd.f32 0.0, %v2822
      %v2824 = vpop.f32.mrb[0].mxu0
      %2825 = vmatprep.mubr.f32.mxu0 0.0
      %2826 = vmatmul.mubr.f32.gmra.mrb[0].mxu0 %v2312
      %v2827 = vpop.f32.mrb[0].mxu0
      %v2828 = vadd.f32 0.0, %v2827
      %v2829 = vpop.f32.mrb[0].mxu0
      %2830 = vmatprep.mubr.f32.mxu0 0.0
      %2831 = vmatmul.mubr.f32.gmra.mrb[0].mxu0 %v2314
      %v2832 = vpop.f32.mrb[0].mxu0
      %v2833 = vadd.f32 0.0, %v2832
      %v2834 = vpop.f32.mrb[0].mxu0
      %2835 = vmatprep.mubr.f32.mxu0 0.0
      %2836 = vmatmul.mubr.f32.gmra.mrb[0].mxu0 %v2316
      %v2837 = vpop.f32.mrb[0].mxu0
      %v2838 = vadd.f32 0.0, %v2837
      %v2839 = vpop.f32.mrb[0].mxu0
      %2840 = vmatprep.mubr.f32.mxu0 0.0
      %2841 = vmatmul.mubr.f32.gmra.mrb[0].mxu0 %v2318
      %v2842 = vpop.f32.mrb[0].mxu0
      %v2843 = vadd.f32 0.0, %v2842
      %v2844 = vpop.f32.mrb[0].mxu0
      %2845 = vmatprep.mubr.f32.mxu0 0.0
      %2846 = vmatmul.mubr.f32.gmra.mrb[0].mxu0 %v2320
      %v2847 = vpop.f32.mrb[0].mxu0
      %v2848 = vadd.f32 0.0, %v2847
      %v2849 = vpop.f32.mrb[0].mxu0
      %2850 = vmatprep.mubr.f32.mxu0 0.0
      %2851 = vmatmul.mubr.f32.gmra.mrb[0].mxu0 %v2322
      %v2852 = vpop.f32.mrb[0].mxu0
      %v2853 = vadd.f32 0.0, %v2852
      %v2854 = vpop.f32.mrb[0].mxu0
      %2855 = vmatprep.mubr.f32.mxu0 0.0
      %2856 = vmatmul.mubr.f32.gmra.mrb[0].mxu0 %v2614
      %v2857 = vpop.f32.mrb[0].mxu0
      %v2858 = vadd.f32 0.0, %v2857
      %v2859 = vpop.f32.mrb[0].mxu0
      %2860 = vmatprep.mubr.f32.mxu0 0.0
      %2861 = vmatmul.mubr.f32.gmra.mrb[0].mxu0 %v2616
      %v2862 = vpop.f32.mrb[0].mxu0
      %v2863 = vadd.f32 0.0, %v2862
      %v2864 = vpop.f32.mrb[0].mxu0
      %2865 = vdwg.mxu0
      %v2866 = vadd.f32 %v2572, %v2688
      %v2867 = vadd.f32 %v2573, %v2693
      %v2868 = vadd.f32 %v2574, %v2698
      %v2869 = vadd.f32 %v2575, %v2703
      %v2870 = vadd.f32 %v2576, %v2708
      %v2871 = vadd.f32 %v2577, %v2713
      %v2872 = vadd.f32 %v2578, %v2718
      %v2873 = vadd.f32 %v2579, %v2723
      %v2874 = vadd.f32 %v2580, %v2728
      %v2875 = vadd.f32 %v2581, %v2733
      %v2876 = vadd.f32 %v2582, %v2738
      %v2877 = vadd.f32 %v2583, %v2743
      %v2878 = vadd.f32 %v2584, %v2748
      %v2879 = vadd.f32 %v2585, %v2753
      %v2880 = vadd.f32 %v2586, %v2758
      %v2881 = vadd.f32 %v2587, %v2763
      %v2882 = vadd.f32 %v2588, %v2768
      %v2883 = vadd.f32 %v2589, %v2773
      %v2884 = vadd.f32 %v2590, %v2778
      %v2885 = vadd.f32 %v2591, %v2783
      %v2886 = vadd.f32 %v2592, %v2788
      %v2887 = vadd.f32 %v2593, %v2793
      %v2888 = vadd.f32 %v2594, %v2798
      %v2889 = vadd.f32 %v2595, %v2803
      %v2890 = vadd.f32 %v2596, %v2808
      %v2891 = vadd.f32 %v2597, %v2813
      %v2892 = vadd.f32 %v2598, %v2818
      %v2893 = vadd.f32 %v2599, %v2823
      %v2894 = vadd.f32 %v2600, %v2828
      %v2895 = vadd.f32 %v2601, %v2833
      %v2896 = vadd.f32 %v2602, %v2838
      %v2897 = vadd.f32 %v2603, %v2843
      %v2898 = vadd.f32 %v2604, %v2848
      %v2899 = vadd.f32 %v2605, %v2853
      %v2900 = vadd.f32 %v2606, %v2858
      %v2901 = vadd.f32 %v2607, %v2863
      %vm2902 = vcmask 1042432
      %v2903 = vrot.slane %v226, 5
      %v2904 = vrot.slane %v227, 5
      %v2905 = vsel %vm2902, %v2903, %v2904
      %v2906 = vrot.slane %v228, 5
      %v2907 = vsel %vm2902, %v2904, %v2906
      %v2908 = vrot.slane %v229, 5
      %v2909 = vsel %vm2902, %v2906, %v2908
      %v2910 = vrot.slane %v230, 5
      %v2911 = vsel %vm2902, %v2908, %v2910
      %v2912 = vrot.slane %v231, 5
      %v2913 = vsel %vm2902, %v2910, %v2912
      %v2914 = vrot.slane %v232, 5
      %v2915 = vsel %vm2902, %v2912, %v2914
      %v2916 = vrot.slane %v233, 5
      %v2917 = vsel %vm2902, %v2914, %v2916
      %v2918 = vrot.slane %v234, 5
      %v2919 = vsel %vm2902, %v2916, %v2918
      %v2920 = vrot.slane %v235, 5
      %v2921 = vsel %vm2902, %v2918, %v2920
      %v2922 = vrot.slane %v236, 5
      %v2923 = vsel %vm2902, %v2920, %v2922
      %v2924 = vrot.slane %v237, 5
      %v2925 = vsel %vm2902, %v2922, %v2924
      %v2926 = vrot.slane %v238, 5
      %v2927 = vsel %vm2902, %v2924, %v2926
      %v2928 = vrot.slane %v239, 5
      %v2929 = vsel %vm2902, %v2926, %v2928
      %v2930 = vrot.slane %v240, 5
      %v2931 = vsel %vm2902, %v2928, %v2930
      %v2932 = vrot.slane %v241, 5
      %v2933 = vsel %vm2902, %v2930, %v2932
      %v2934 = vrot.slane %v242, 5
      %v2935 = vsel %vm2902, %v2932, %v2934
      %v2936 = vrot.slane %v243, 5
      %v2937 = vsel %vm2902, %v2934, %v2936
      %v2938 = vrot.slane %v244, 5
      %v2939 = vsel %vm2902, %v2936, %v2938
      %v2940 = vrot.slane %v245, 5
      %v2941 = vsel %vm2902, %v2938, %v2940
      %v2942 = vrot.slane %v246, 5
      %v2943 = vsel %vm2902, %v2940, %v2942
      %v2944 = vrot.slane %v247, 5
      %v2945 = vsel %vm2902, %v2942, %v2944
      %v2946 = vrot.slane %v248, 5
      %v2947 = vsel %vm2902, %v2944, %v2946
      %v2948 = vrot.slane %v249, 5
      %v2949 = vsel %vm2902, %v2946, %v2948
      %v2950 = vrot.slane %v250, 5
      %v2951 = vsel %vm2902, %v2948, %v2950
      %v2952 = vrot.slane %v251, 5
      %v2953 = vsel %vm2902, %v2950, %v2952
      %v2954 = vrot.slane %v252, 5
      %v2955 = vsel %vm2902, %v2952, %v2954
      %v2956 = vrot.slane %v253, 5
      %v2957 = vsel %vm2902, %v2954, %v2956
      %v2958 = vrot.slane %v254, 5
      %v2959 = vsel %vm2902, %v2956, %v2958
      %v2960 = vrot.slane %v255, 5
      %v2961 = vsel %vm2902, %v2958, %v2960
      %v2962 = vrot.slane %v256, 5
      %v2963 = vsel %vm2902, %v2960, %v2962
      %v2964 = vrot.slane %v257, 5
      %v2965 = vsel %vm2902, %v2962, %v2964
      %v2966 = vrot.slane %v258, 5
      %v2967 = vsel %vm2902, %v2964, %v2966
      %v2968 = vrot.slane %v259, 5
      %v2969 = vsel %vm2902, %v2966, %v2968
      %v2970 = vrot.slane %v260, 5
      %v2971 = vsel %vm2902, %v2968, %v2970
      %v2972 = vrot.slane %v261, 5
      %v2973 = vsel %vm2902, %v2970, %v2972
      %v2974 = vrot.slane %v262, 5
      %v2975 = vsel %vm2902, %v2972, %v2974
      %v2976 = vsel %vm383, %v2905, 0
      %v2978 = vsel %vm383, %v2907, 0
      %v2980 = vsel %vm383, %v2909, 0
      %v2982 = vsel %vm383, %v2911, 0
      %v2984 = vsel %vm383, %v2913, 0
      %v2986 = vsel %vm383, %v2915, 0
      %v2988 = vsel %vm383, %v2917, 0
      %v2990 = vsel %vm383, %v2919, 0
      %v2992 = vsel %vm383, %v2921, 0
      %v2994 = vsel %vm383, %v2923, 0
      %v2996 = vsel %vm383, %v2925, 0
      %v2998 = vsel %vm383, %v2927, 0
      %v3000 = vsel %vm383, %v2929, 0
      %v3002 = vsel %vm383, %v2931, 0
      %v3004 = vsel %vm383, %v2933, 0
      %v3006 = vsel %vm383, %v2935, 0
      %v3008 = vsel %vm383, %v2937, 0
      %v3010 = vsel %vm383, %v2939, 0
      %v3012 = vsel %vm383, %v2941, 0
      %v3014 = vsel %vm383, %v2943, 0
      %v3016 = vsel %vm383, %v2945, 0
      %v3018 = vsel %vm383, %v2947, 0
      %v3020 = vsel %vm383, %v2949, 0
      %v3022 = vsel %vm383, %v2951, 0
      %v3024 = vsel %vm383, %v2953, 0
      %v3026 = vsel %vm383, %v2955, 0
      %v3028 = vsel %vm383, %v2957, 0
      %v3030 = vsel %vm383, %v2959, 0
      %v3032 = vsel %vm383, %v2961, 0
      %v3034 = vsel %vm383, %v2963, 0
      %v3036 = vsel %vm383, %v2965, 0
      %v3038 = vsel %vm383, %v2967, 0
      %v3040 = vsel %vm383, %v2969, 0
      %v3042 = vsel %vm383, %v2971, 0
      %v3044 = vsel %vm383, %v2973, 0
      %v3046 = vsel %vm383, %v2975, 0
      %v3049 = vsel %vm456, %v270, 0
      %3051 = vmatprep.subr.mxu0 0.0
      %3052 = vmatpush1.msra.mxu0 %v3049
      %3053 = vmatprep.subr.mxu0 0.0
      %3054 = vmatpush1.msra.mxu0 0.0
      %3055 = vmatprep.subr.mxu0 0.0
      %3056 = vmatpush1.msra.mxu0 0.0
      %3057 = vmatprep.subr.mxu0 0.0
      %3058 = vmatpush1.msra.mxu0 0.0
      %3059 = vmatprep.subr.mxu0 0.0
      %3060 = vmatpush1.msra.mxu0 0.0
      %3061 = vmatprep.subr.mxu0 0.0
      %3062 = vmatpush1.msra.mxu0 0.0
      %3063 = vmatprep.subr.mxu0 0.0
      %3064 = vmatpush1.msra.mxu0 0.0
      %3065 = vmatprep.subr.mxu0 0.0
      %3066 = vmatpush1.msra.mxu0 0.0
      %3067 = vmatprep.subr.mxu0 0.0
      %3068 = vmatpush1.msra.mxu0 0.0
      %3069 = vmatprep.subr.mxu0 0.0
      %3070 = vmatpush1.msra.mxu0 0.0
      %3071 = vmatprep.subr.mxu0 0.0
      %3072 = vmatpush1.msra.mxu0 0.0
      %3073 = vmatprep.subr.mxu0 0.0
      %3074 = vmatpush1.msra.mxu0 0.0
      %3075 = vmatprep.subr.mxu0 0.0
      %3076 = vmatpush1.msra.mxu0 0.0
      %3077 = vmatprep.subr.mxu0 0.0
      %3078 = vmatpush1.msra.mxu0 0.0
      %3079 = vmatprep.subr.mxu0 0.0
      %3080 = vmatpush1.msra.mxu0 0.0
      %3081 = vmatprep.subr.mxu0 0.0
      %3082 = vmatpush1.msra.mxu0 0.0
      %3083 = vmatprep.subr.mxu0 0.0
      %3084 = vmatpush1.msra.mxu0 0.0
      %3085 = vmatprep.subr.mxu0 0.0
      %3086 = vmatpush1.msra.mxu0 0.0
      %3087 = vmatprep.subr.mxu0 0.0
      %3088 = vmatpush1.msra.mxu0 0.0
      %3089 = vmatprep.subr.mxu0 0.0
      %3090 = vmatpush1.msra.mxu0 0.0
      %3091 = vmatprep.subr.mxu0 0.0
      %3092 = vmatpush1.msra.mxu0 0.0
      %3093 = vmatprep.subr.mxu0 0.0
      %3094 = vmatpush1.msra.mxu0 0.0
      %3095 = vmatprep.subr.mxu0 0.0
      %3096 = vmatpush1.msra.mxu0 0.0
      %3097 = vmatprep.subr.mxu0 0.0
      %3098 = vmatpush1.msra.mxu0 0.0
      %3099 = vmatprep.subr.mxu0 0.0
      %3100 = vmatpush1.msra.mxu0 0.0
      %3101 = vmatprep.subr.mxu0 0.0
      %3102 = vmatpush1.msra.mxu0 0.0
      %3103 = vmatprep.subr.mxu0 0.0
      %3104 = vmatpush1.msra.mxu0 0.0
      %3105 = vmatprep.subr.mxu0 0.0
      %3106 = vmatpush1.msra.mxu0 0.0
      %3107 = vmatprep.subr.mxu0 0.0
      %3108 = vmatpush1.msra.mxu0 0.0
      %3109 = vmatprep.subr.mxu0 0.0
      %3110 = vmatpush1.msra.mxu0 0.0
      %3111 = vmatprep.subr.mxu0 0.0
      %3112 = vmatpush1.msra.mxu0 0.0
      %3113 = vmatprep.subr.mxu0 0.0
      %3114 = vmatpush1.msra.mxu0 0.0
      %3115 = vmatprep.mubr.f32.mxu0 0.0
      %3116 = vmatmul.mubr.f32.gmra.mrb[0].mxu0 %v2976
      %v3117 = vpop.f32.mrb[0].mxu0
      %v3118 = vadd.f32 0.0, %v3117
      %v3119 = vpop.f32.mrb[0].mxu0
      %3120 = vmatprep.mubr.f32.mxu0 0.0
      %3121 = vmatmul.mubr.f32.gmra.mrb[0].mxu0 %v2978
      %v3122 = vpop.f32.mrb[0].mxu0
      %v3123 = vadd.f32 0.0, %v3122
      %v3124 = vpop.f32.mrb[0].mxu0
      %3125 = vmatprep.mubr.f32.mxu0 0.0
      %3126 = vmatmul.mubr.f32.gmra.mrb[0].mxu0 %v2980
      %v3127 = vpop.f32.mrb[0].mxu0
      %v3128 = vadd.f32 0.0, %v3127
      %v3129 = vpop.f32.mrb[0].mxu0
      %3130 = vmatprep.mubr.f32.mxu0 0.0
      %3131 = vmatmul.mubr.f32.gmra.mrb[0].mxu0 %v2982
      %v3132 = vpop.f32.mrb[0].mxu0
      %v3133 = vadd.f32 0.0, %v3132
      %v3134 = vpop.f32.mrb[0].mxu0
      %3135 = vmatprep.mubr.f32.mxu0 0.0
      %3136 = vmatmul.mubr.f32.gmra.mrb[0].mxu0 %v2984
      %v3137 = vpop.f32.mrb[0].mxu0
      %v3138 = vadd.f32 0.0, %v3137
      %v3139 = vpop.f32.mrb[0].mxu0
      %3140 = vmatprep.mubr.f32.mxu0 0.0
      %3141 = vmatmul.mubr.f32.gmra.mrb[0].mxu0 %v2986
      %v3142 = vpop.f32.mrb[0].mxu0
      %v3143 = vadd.f32 0.0, %v3142
      %v3144 = vpop.f32.mrb[0].mxu0
      %3145 = vmatprep.mubr.f32.mxu0 0.0
      %3146 = vmatmul.mubr.f32.gmra.mrb[0].mxu0 %v2988
      %v3147 = vpop.f32.mrb[0].mxu0
      %v3148 = vadd.f32 0.0, %v3147
      %v3149 = vpop.f32.mrb[0].mxu0
      %3150 = vmatprep.mubr.f32.mxu0 0.0
      %3151 = vmatmul.mubr.f32.gmra.mrb[0].mxu0 %v2990
      %v3152 = vpop.f32.mrb[0].mxu0
      %v3153 = vadd.f32 0.0, %v3152
      %v3154 = vpop.f32.mrb[0].mxu0
      %3155 = vmatprep.mubr.f32.mxu0 0.0
      %3156 = vmatmul.mubr.f32.gmra.mrb[0].mxu0 %v2992
      %v3157 = vpop.f32.mrb[0].mxu0
      %v3158 = vadd.f32 0.0, %v3157
      %v3159 = vpop.f32.mrb[0].mxu0
      %3160 = vmatprep.mubr.f32.mxu0 0.0
      %3161 = vmatmul.mubr.f32.gmra.mrb[0].mxu0 %v2994
      %v3162 = vpop.f32.mrb[0].mxu0
      %v3163 = vadd.f32 0.0, %v3162
      %v3164 = vpop.f32.mrb[0].mxu0
      %3165 = vmatprep.mubr.f32.mxu0 0.0
      %3166 = vmatmul.mubr.f32.gmra.mrb[0].mxu0 %v2996
      %v3167 = vpop.f32.mrb[0].mxu0
      %v3168 = vadd.f32 0.0, %v3167
      %v3169 = vpop.f32.mrb[0].mxu0
      %3170 = vmatprep.mubr.f32.mxu0 0.0
      %3171 = vmatmul.mubr.f32.gmra.mrb[0].mxu0 %v2998
      %v3172 = vpop.f32.mrb[0].mxu0
      %v3173 = vadd.f32 0.0, %v3172
      %v3174 = vpop.f32.mrb[0].mxu0
      %3175 = vmatprep.mubr.f32.mxu0 0.0
      %3176 = vmatmul.mubr.f32.gmra.mrb[0].mxu0 %v3000
      %v3177 = vpop.f32.mrb[0].mxu0
      %v3178 = vadd.f32 0.0, %v3177
      %v3179 = vpop.f32.mrb[0].mxu0
      %3180 = vmatprep.mubr.f32.mxu0 0.0
      %3181 = vmatmul.mubr.f32.gmra.mrb[0].mxu0 %v3002
      %v3182 = vpop.f32.mrb[0].mxu0
      %v3183 = vadd.f32 0.0, %v3182
      %v3184 = vpop.f32.mrb[0].mxu0
      %3185 = vmatprep.mubr.f32.mxu0 0.0
      %3186 = vmatmul.mubr.f32.gmra.mrb[0].mxu0 %v3004
      %v3187 = vpop.f32.mrb[0].mxu0
      %v3188 = vadd.f32 0.0, %v3187
      %v3189 = vpop.f32.mrb[0].mxu0
      %3190 = vmatprep.mubr.f32.mxu0 0.0
      %3191 = vmatmul.mubr.f32.gmra.mrb[0].mxu0 %v3006
      %v3192 = vpop.f32.mrb[0].mxu0
      %v3193 = vadd.f32 0.0, %v3192
      %v3194 = vpop.f32.mrb[0].mxu0
      %3195 = vmatprep.mubr.f32.mxu0 0.0
      %3196 = vmatmul.mubr.f32.gmra.mrb[0].mxu0 %v3008
      %v3197 = vpop.f32.mrb[0].mxu0
      %v3198 = vadd.f32 0.0, %v3197
      %v3199 = vpop.f32.mrb[0].mxu0
      %3200 = vmatprep.mubr.f32.mxu0 0.0
      %3201 = vmatmul.mubr.f32.gmra.mrb[0].mxu0 %v3010
      %v3202 = vpop.f32.mrb[0].mxu0
      %v3203 = vadd.f32 0.0, %v3202
      %v3204 = vpop.f32.mrb[0].mxu0
      %3205 = vmatprep.mubr.f32.mxu0 0.0
      %3206 = vmatmul.mubr.f32.gmra.mrb[0].mxu0 %v3012
      %v3207 = vpop.f32.mrb[0].mxu0
      %v3208 = vadd.f32 0.0, %v3207
      %v3209 = vpop.f32.mrb[0].mxu0
      %3210 = vmatprep.mubr.f32.mxu0 0.0
      %3211 = vmatmul.mubr.f32.gmra.mrb[0].mxu0 %v3014
      %v3212 = vpop.f32.mrb[0].mxu0
      %v3213 = vadd.f32 0.0, %v3212
      %v3214 = vpop.f32.mrb[0].mxu0
      %3215 = vmatprep.mubr.f32.mxu0 0.0
      %3216 = vmatmul.mubr.f32.gmra.mrb[0].mxu0 %v3016
      %v3217 = vpop.f32.mrb[0].mxu0
      %v3218 = vadd.f32 0.0, %v3217
      %v3219 = vpop.f32.mrb[0].mxu0
      %3220 = vmatprep.mubr.f32.mxu0 0.0
      %3221 = vmatmul.mubr.f32.gmra.mrb[0].mxu0 %v3018
      %v3222 = vpop.f32.mrb[0].mxu0
      %v3223 = vadd.f32 0.0, %v3222
      %v3224 = vpop.f32.mrb[0].mxu0
      %3225 = vmatprep.mubr.f32.mxu0 0.0
      %3226 = vmatmul.mubr.f32.gmra.mrb[0].mxu0 %v3020
      %v3227 = vpop.f32.mrb[0].mxu0
      %v3228 = vadd.f32 0.0, %v3227
      %v3229 = vpop.f32.mrb[0].mxu0
      %3230 = vmatprep.mubr.f32.mxu0 0.0
      %3231 = vmatmul.mubr.f32.gmra.mrb[0].mxu0 %v3022
      %v3232 = vpop.f32.mrb[0].mxu0
      %v3233 = vadd.f32 0.0, %v3232
      %v3234 = vpop.f32.mrb[0].mxu0
      %3235 = vmatprep.mubr.f32.mxu0 0.0
      %3236 = vmatmul.mubr.f32.gmra.mrb[0].mxu0 %v3024
      %v3237 = vpop.f32.mrb[0].mxu0
      %v3238 = vadd.f32 0.0, %v3237
      %v3239 = vpop.f32.mrb[0].mxu0
      %3240 = vmatprep.mubr.f32.mxu0 0.0
      %3241 = vmatmul.mubr.f32.gmra.mrb[0].mxu0 %v3026
      %v3242 = vpop.f32.mrb[0].mxu0
      %v3243 = vadd.f32 0.0, %v3242
      %v3244 = vpop.f32.mrb[0].mxu0
      %3245 = vmatprep.mubr.f32.mxu0 0.0
      %3246 = vmatmul.mubr.f32.gmra.mrb[0].mxu0 %v3028
      %v3247 = vpop.f32.mrb[0].mxu0
      %v3248 = vadd.f32 0.0, %v3247
      %v3249 = vpop.f32.mrb[0].mxu0
      %3250 = vmatprep.mubr.f32.mxu0 0.0
      %3251 = vmatmul.mubr.f32.gmra.mrb[0].mxu0 %v3030
      %v3252 = vpop.f32.mrb[0].mxu0
      %v3253 = vadd.f32 0.0, %v3252
      %v3254 = vpop.f32.mrb[0].mxu0
      %3255 = vmatprep.mubr.f32.mxu0 0.0
      %3256 = vmatmul.mubr.f32.gmra.mrb[0].mxu0 %v3032
      %v3257 = vpop.f32.mrb[0].mxu0
      %v3258 = vadd.f32 0.0, %v3257
      %v3259 = vpop.f32.mrb[0].mxu0
      %3260 = vmatprep.mubr.f32.mxu0 0.0
      %3261 = vmatmul.mubr.f32.gmra.mrb[0].mxu0 %v3034
      %v3262 = vpop.f32.mrb[0].mxu0
      %v3263 = vadd.f32 0.0, %v3262
      %v3264 = vpop.f32.mrb[0].mxu0
      %3265 = vmatprep.mubr.f32.mxu0 0.0
      %3266 = vmatmul.mubr.f32.gmra.mrb[0].mxu0 %v3036
      %v3267 = vpop.f32.mrb[0].mxu0
      %v3268 = vadd.f32 0.0, %v3267
      %v3269 = vpop.f32.mrb[0].mxu0
      %3270 = vmatprep.mubr.f32.mxu0 0.0
      %3271 = vmatmul.mubr.f32.gmra.mrb[0].mxu0 %v3038
      %v3272 = vpop.f32.mrb[0].mxu0
      %v3273 = vadd.f32 0.0, %v3272
      %v3274 = vpop.f32.mrb[0].mxu0
      %3275 = vmatprep.mubr.f32.mxu0 0.0
      %3276 = vmatmul.mubr.f32.gmra.mrb[0].mxu0 %v3040
      %v3277 = vpop.f32.mrb[0].mxu0
      %v3278 = vadd.f32 0.0, %v3277
      %v3279 = vpop.f32.mrb[0].mxu0
      %3280 = vmatprep.mubr.f32.mxu0 0.0
      %3281 = vmatmul.mubr.f32.gmra.mrb[0].mxu0 %v3042
      %v3282 = vpop.f32.mrb[0].mxu0
      %v3283 = vadd.f32 0.0, %v3282
      %v3284 = vpop.f32.mrb[0].mxu0
      %3285 = vmatprep.mubr.f32.mxu0 0.0
      %3286 = vmatmul.mubr.f32.gmra.mrb[0].mxu0 %v3044
      %v3287 = vpop.f32.mrb[0].mxu0
      %v3288 = vadd.f32 0.0, %v3287
      %v3289 = vpop.f32.mrb[0].mxu0
      %3290 = vmatprep.mubr.f32.mxu0 0.0
      %3291 = vmatmul.mubr.f32.gmra.mrb[0].mxu0 %v3046
      %v3292 = vpop.f32.mrb[0].mxu0
      %v3293 = vadd.f32 0.0, %v3292
      %v3294 = vpop.f32.mrb[0].mxu0
      %3295 = vdwg.mxu0
      %v3296 = vadd.f32 %v2866, %v3118
      %v3297 = vadd.f32 %v2867, %v3123
      %v3298 = vadd.f32 %v2868, %v3128
      %v3299 = vadd.f32 %v2869, %v3133
      %v3300 = vadd.f32 %v2870, %v3138
      %v3301 = vadd.f32 %v2871, %v3143
      %v3302 = vadd.f32 %v2872, %v3148
      %v3303 = vadd.f32 %v2873, %v3153
      %v3304 = vadd.f32 %v2874, %v3158
      %v3305 = vadd.f32 %v2875, %v3163
      %v3306 = vadd.f32 %v2876, %v3168
      %v3307 = vadd.f32 %v2877, %v3173
      %v3308 = vadd.f32 %v2878, %v3178
      %v3309 = vadd.f32 %v2879, %v3183
      %v3310 = vadd.f32 %v2880, %v3188
      %v3311 = vadd.f32 %v2881, %v3193
      %v3312 = vadd.f32 %v2882, %v3198
      %v3313 = vadd.f32 %v2883, %v3203
      %v3314 = vadd.f32 %v2884, %v3208
      %v3315 = vadd.f32 %v2885, %v3213
      %v3316 = vadd.f32 %v2886, %v3218
      %v3317 = vadd.f32 %v2887, %v3223
      %v3318 = vadd.f32 %v2888, %v3228
      %v3319 = vadd.f32 %v2889, %v3233
      %v3320 = vadd.f32 %v2890, %v3238
      %v3321 = vadd.f32 %v2891, %v3243
      %v3322 = vadd.f32 %v2892, %v3248
      %v3323 = vadd.f32 %v2893, %v3253
      %v3324 = vadd.f32 %v2894, %v3258
      %v3325 = vadd.f32 %v2895, %v3263
      %v3326 = vadd.f32 %v2896, %v3268
      %v3327 = vadd.f32 %v2897, %v3273
      %v3328 = vadd.f32 %v2898, %v3278
      %v3329 = vadd.f32 %v2899, %v3283
      %v3330 = vadd.f32 %v2900, %v3288
      %v3331 = vadd.f32 %v2901, %v3293
      %vm3332 = vcmask 1041408
      %v3333 = vrot.slane %v226, 6
      %v3334 = vrot.slane %v227, 6
      %v3335 = vsel %vm3332, %v3333, %v3334
      %v3336 = vrot.slane %v228, 6
      %v3337 = vsel %vm3332, %v3334, %v3336
      %v3338 = vrot.slane %v229, 6
      %v3339 = vsel %vm3332, %v3336, %v3338
      %v3340 = vrot.slane %v230, 6
      %v3341 = vsel %vm3332, %v3338, %v3340
      %v3342 = vrot.slane %v231, 6
      %v3343 = vsel %vm3332, %v3340, %v3342
      %v3344 = vrot.slane %v232, 6
      %v3345 = vsel %vm3332, %v3342, %v3344
      %v3346 = vrot.slane %v233, 6
      %v3347 = vsel %vm3332, %v3344, %v3346
      %v3348 = vrot.slane %v234, 6
      %v3349 = vsel %vm3332, %v3346, %v3348
      %v3350 = vrot.slane %v235, 6
      %v3351 = vsel %vm3332, %v3348, %v3350
      %v3352 = vrot.slane %v236, 6
      %v3353 = vsel %vm3332, %v3350, %v3352
      %v3354 = vrot.slane %v237, 6
      %v3355 = vsel %vm3332, %v3352, %v3354
      %v3356 = vrot.slane %v238, 6
      %v3357 = vsel %vm3332, %v3354, %v3356
      %v3358 = vrot.slane %v239, 6
      %v3359 = vsel %vm3332, %v3356, %v3358
      %v3360 = vrot.slane %v240, 6
      %v3361 = vsel %vm3332, %v3358, %v3360
      %v3362 = vrot.slane %v241, 6
      %v3363 = vsel %vm3332, %v3360, %v3362
      %v3364 = vrot.slane %v242, 6
      %v3365 = vsel %vm3332, %v3362, %v3364
      %v3366 = vrot.slane %v243, 6
      %v3367 = vsel %vm3332, %v3364, %v3366
      %v3368 = vrot.slane %v244, 6
      %v3369 = vsel %vm3332, %v3366, %v3368
      %v3370 = vrot.slane %v245, 6
      %v3371 = vsel %vm3332, %v3368, %v3370
      %v3372 = vrot.slane %v246, 6
      %v3373 = vsel %vm3332, %v3370, %v3372
      %v3374 = vrot.slane %v247, 6
      %v3375 = vsel %vm3332, %v3372, %v3374
      %v3376 = vrot.slane %v248, 6
      %v3377 = vsel %vm3332, %v3374, %v3376
      %v3378 = vrot.slane %v249, 6
      %v3379 = vsel %vm3332, %v3376, %v3378
      %v3380 = vrot.slane %v250, 6
      %v3381 = vsel %vm3332, %v3378, %v3380
      %v3382 = vrot.slane %v251, 6
      %v3383 = vsel %vm3332, %v3380, %v3382
      %v3384 = vrot.slane %v252, 6
      %v3385 = vsel %vm3332, %v3382, %v3384
      %v3386 = vrot.slane %v253, 6
      %v3387 = vsel %vm3332, %v3384, %v3386
      %v3388 = vrot.slane %v254, 6
      %v3389 = vsel %vm3332, %v3386, %v3388
      %v3390 = vrot.slane %v255, 6
      %v3391 = vsel %vm3332, %v3388, %v3390
      %v3392 = vrot.slane %v256, 6
      %v3393 = vsel %vm3332, %v3390, %v3392
      %v3394 = vrot.slane %v257, 6
      %v3395 = vsel %vm3332, %v3392, %v3394
      %v3396 = vrot.slane %v258, 6
      %v3397 = vsel %vm3332, %v3394, %v3396
      %v3398 = vrot.slane %v259, 6
      %v3399 = vsel %vm3332, %v3396, %v3398
      %v3400 = vrot.slane %v260, 6
      %v3401 = vsel %vm3332, %v3398, %v3400
      %v3402 = vrot.slane %v261, 6
      %v3403 = vsel %vm3332, %v3400, %v3402
      %v3404 = vrot.slane %v262, 6
      %v3405 = vsel %vm3332, %v3402, %v3404
      %v3406 = vsel %vm383, %v3335, 0
      %v3408 = vsel %vm383, %v3337, 0
      %v3410 = vsel %vm383, %v3339, 0
      %v3412 = vsel %vm383, %v3341, 0
      %v3414 = vsel %vm383, %v3343, 0
      %v3416 = vsel %vm383, %v3345, 0
      %v3418 = vsel %vm383, %v3347, 0
      %v3420 = vsel %vm383, %v3349, 0
      %v3422 = vsel %vm383, %v3351, 0
      %v3424 = vsel %vm383, %v3353, 0
      %v3426 = vsel %vm383, %v3355, 0
      %v3428 = vsel %vm383, %v3357, 0
      %v3430 = vsel %vm383, %v3359, 0
      %v3432 = vsel %vm383, %v3361, 0
      %v3434 = vsel %vm383, %v3363, 0
      %v3436 = vsel %vm383, %v3365, 0
      %v3438 = vsel %vm383, %v3367, 0
      %v3440 = vsel %vm383, %v3369, 0
      %v3442 = vsel %vm383, %v3371, 0
      %v3444 = vsel %vm383, %v3373, 0
      %v3446 = vsel %vm383, %v3375, 0
      %v3448 = vsel %vm383, %v3377, 0
      %v3450 = vsel %vm383, %v3379, 0
      %v3452 = vsel %vm383, %v3381, 0
      %v3454 = vsel %vm383, %v3383, 0
      %v3456 = vsel %vm383, %v3385, 0
      %v3458 = vsel %vm383, %v3387, 0
      %v3460 = vsel %vm383, %v3389, 0
      %v3462 = vsel %vm383, %v3391, 0
      %v3464 = vsel %vm383, %v3393, 0
      %v3466 = vsel %vm383, %v3395, 0
      %v3468 = vsel %vm383, %v3397, 0
      %v3470 = vsel %vm383, %v3399, 0
      %v3472 = vsel %vm383, %v3401, 0
      %v3474 = vsel %vm383, %v3403, 0
      %v3476 = vsel %vm383, %v3405, 0
      %v3479 = vsel %vm456, %v271, 0
      %3481 = vmatprep.subr.mxu0 0.0
      %3482 = vmatpush1.msra.mxu0 %v3479
      %3483 = vmatprep.subr.mxu0 0.0
      %3484 = vmatpush1.msra.mxu0 0.0
      %3485 = vmatprep.subr.mxu0 0.0
      %3486 = vmatpush1.msra.mxu0 0.0
      %3487 = vmatprep.subr.mxu0 0.0
      %3488 = vmatpush1.msra.mxu0 0.0
      %3489 = vmatprep.subr.mxu0 0.0
      %3490 = vmatpush1.msra.mxu0 0.0
      %3491 = vmatprep.subr.mxu0 0.0
      %3492 = vmatpush1.msra.mxu0 0.0
      %3493 = vmatprep.subr.mxu0 0.0
      %3494 = vmatpush1.msra.mxu0 0.0
      %3495 = vmatprep.subr.mxu0 0.0
      %3496 = vmatpush1.msra.mxu0 0.0
      %3497 = vmatprep.subr.mxu0 0.0
      %3498 = vmatpush1.msra.mxu0 0.0
      %3499 = vmatprep.subr.mxu0 0.0
      %3500 = vmatpush1.msra.mxu0 0.0
      %3501 = vmatprep.subr.mxu0 0.0
      %3502 = vmatpush1.msra.mxu0 0.0
      %3503 = vmatprep.subr.mxu0 0.0
      %3504 = vmatpush1.msra.mxu0 0.0
      %3505 = vmatprep.subr.mxu0 0.0
      %3506 = vmatpush1.msra.mxu0 0.0
      %3507 = vmatprep.subr.mxu0 0.0
      %3508 = vmatpush1.msra.mxu0 0.0
      %3509 = vmatprep.subr.mxu0 0.0
      %3510 = vmatpush1.msra.mxu0 0.0
      %3511 = vmatprep.subr.mxu0 0.0
      %3512 = vmatpush1.msra.mxu0 0.0
      %3513 = vmatprep.subr.mxu0 0.0
      %3514 = vmatpush1.msra.mxu0 0.0
      %3515 = vmatprep.subr.mxu0 0.0
      %3516 = vmatpush1.msra.mxu0 0.0
      %3517 = vmatprep.subr.mxu0 0.0
      %3518 = vmatpush1.msra.mxu0 0.0
      %3519 = vmatprep.subr.mxu0 0.0
      %3520 = vmatpush1.msra.mxu0 0.0
      %3521 = vmatprep.subr.mxu0 0.0
      %3522 = vmatpush1.msra.mxu0 0.0
      %3523 = vmatprep.subr.mxu0 0.0
      %3524 = vmatpush1.msra.mxu0 0.0
      %3525 = vmatprep.subr.mxu0 0.0
      %3526 = vmatpush1.msra.mxu0 0.0
      %3527 = vmatprep.subr.mxu0 0.0
      %3528 = vmatpush1.msra.mxu0 0.0
      %3529 = vmatprep.subr.mxu0 0.0
      %3530 = vmatpush1.msra.mxu0 0.0
      %3531 = vmatprep.subr.mxu0 0.0
      %3532 = vmatpush1.msra.mxu0 0.0
      %3533 = vmatprep.subr.mxu0 0.0
      %3534 = vmatpush1.msra.mxu0 0.0
      %3535 = vmatprep.subr.mxu0 0.0
      %3536 = vmatpush1.msra.mxu0 0.0
      %3537 = vmatprep.subr.mxu0 0.0
      %3538 = vmatpush1.msra.mxu0 0.0
      %3539 = vmatprep.subr.mxu0 0.0
      %3540 = vmatpush1.msra.mxu0 0.0
      %3541 = vmatprep.subr.mxu0 0.0
      %3542 = vmatpush1.msra.mxu0 0.0
      %3543 = vmatprep.subr.mxu0 0.0
      %3544 = vmatpush1.msra.mxu0 0.0
      %3545 = vmatprep.mubr.f32.mxu0 0.0
      %3546 = vmatmul.mubr.f32.gmra.mrb[0].mxu0 %v3406
      %v3547 = vpop.f32.mrb[0].mxu0
      %v3548 = vadd.f32 0.0, %v3547
      %v3549 = vpop.f32.mrb[0].mxu0
      %3550 = vmatprep.mubr.f32.mxu0 0.0
      %3551 = vmatmul.mubr.f32.gmra.mrb[0].mxu0 %v3408
      %v3552 = vpop.f32.mrb[0].mxu0
      %v3553 = vadd.f32 0.0, %v3552
      %v3554 = vpop.f32.mrb[0].mxu0
      %3555 = vmatprep.mubr.f32.mxu0 0.0
      %3556 = vmatmul.mubr.f32.gmra.mrb[0].mxu0 %v3410
      %v3557 = vpop.f32.mrb[0].mxu0
      %v3558 = vadd.f32 0.0, %v3557
      %v3559 = vpop.f32.mrb[0].mxu0
      %3560 = vmatprep.mubr.f32.mxu0 0.0
      %3561 = vmatmul.mubr.f32.gmra.mrb[0].mxu0 %v3412
      %v3562 = vpop.f32.mrb[0].mxu0
      %v3563 = vadd.f32 0.0, %v3562
      %v3564 = vpop.f32.mrb[0].mxu0
      %3565 = vmatprep.mubr.f32.mxu0 0.0
      %3566 = vmatmul.mubr.f32.gmra.mrb[0].mxu0 %v3414
      %v3567 = vpop.f32.mrb[0].mxu0
      %v3568 = vadd.f32 0.0, %v3567
      %v3569 = vpop.f32.mrb[0].mxu0
      %3570 = vmatprep.mubr.f32.mxu0 0.0
      %3571 = vmatmul.mubr.f32.gmra.mrb[0].mxu0 %v3416
      %v3572 = vpop.f32.mrb[0].mxu0
      %v3573 = vadd.f32 0.0, %v3572
      %v3574 = vpop.f32.mrb[0].mxu0
      %3575 = vmatprep.mubr.f32.mxu0 0.0
      %3576 = vmatmul.mubr.f32.gmra.mrb[0].mxu0 %v3418
      %v3577 = vpop.f32.mrb[0].mxu0
      %v3578 = vadd.f32 0.0, %v3577
      %v3579 = vpop.f32.mrb[0].mxu0
      %3580 = vmatprep.mubr.f32.mxu0 0.0
      %3581 = vmatmul.mubr.f32.gmra.mrb[0].mxu0 %v3420
      %v3582 = vpop.f32.mrb[0].mxu0
      %v3583 = vadd.f32 0.0, %v3582
      %v3584 = vpop.f32.mrb[0].mxu0
      %3585 = vmatprep.mubr.f32.mxu0 0.0
      %3586 = vmatmul.mubr.f32.gmra.mrb[0].mxu0 %v3422
      %v3587 = vpop.f32.mrb[0].mxu0
      %v3588 = vadd.f32 0.0, %v3587
      %v3589 = vpop.f32.mrb[0].mxu0
      %3590 = vmatprep.mubr.f32.mxu0 0.0
      %3591 = vmatmul.mubr.f32.gmra.mrb[0].mxu0 %v3424
      %v3592 = vpop.f32.mrb[0].mxu0
      %v3593 = vadd.f32 0.0, %v3592
      %v3594 = vpop.f32.mrb[0].mxu0
      %3595 = vmatprep.mubr.f32.mxu0 0.0
      %3596 = vmatmul.mubr.f32.gmra.mrb[0].mxu0 %v3426
      %v3597 = vpop.f32.mrb[0].mxu0
      %v3598 = vadd.f32 0.0, %v3597
      %v3599 = vpop.f32.mrb[0].mxu0
      %3600 = vmatprep.mubr.f32.mxu0 0.0
      %3601 = vmatmul.mubr.f32.gmra.mrb[0].mxu0 %v3428
      %v3602 = vpop.f32.mrb[0].mxu0
      %v3603 = vadd.f32 0.0, %v3602
      %v3604 = vpop.f32.mrb[0].mxu0
      %3605 = vmatprep.mubr.f32.mxu0 0.0
      %3606 = vmatmul.mubr.f32.gmra.mrb[0].mxu0 %v3430
      %v3607 = vpop.f32.mrb[0].mxu0
      %v3608 = vadd.f32 0.0, %v3607
      %v3609 = vpop.f32.mrb[0].mxu0
      %3610 = vmatprep.mubr.f32.mxu0 0.0
      %3611 = vmatmul.mubr.f32.gmra.mrb[0].mxu0 %v3432
      %v3612 = vpop.f32.mrb[0].mxu0
      %v3613 = vadd.f32 0.0, %v3612
      %v3614 = vpop.f32.mrb[0].mxu0
      %3615 = vmatprep.mubr.f32.mxu0 0.0
      %3616 = vmatmul.mubr.f32.gmra.mrb[0].mxu0 %v3434
      %v3617 = vpop.f32.mrb[0].mxu0
      %v3618 = vadd.f32 0.0, %v3617
      %v3619 = vpop.f32.mrb[0].mxu0
      %3620 = vmatprep.mubr.f32.mxu0 0.0
      %3621 = vmatmul.mubr.f32.gmra.mrb[0].mxu0 %v3436
      %v3622 = vpop.f32.mrb[0].mxu0
      %v3623 = vadd.f32 0.0, %v3622
      %v3624 = vpop.f32.mrb[0].mxu0
      %3625 = vmatprep.mubr.f32.mxu0 0.0
      %3626 = vmatmul.mubr.f32.gmra.mrb[0].mxu0 %v3438
      %v3627 = vpop.f32.mrb[0].mxu0
      %v3628 = vadd.f32 0.0, %v3627
      %v3629 = vpop.f32.mrb[0].mxu0
      %3630 = vmatprep.mubr.f32.mxu0 0.0
      %3631 = vmatmul.mubr.f32.gmra.mrb[0].mxu0 %v3440
      %v3632 = vpop.f32.mrb[0].mxu0
      %v3633 = vadd.f32 0.0, %v3632
      %v3634 = vpop.f32.mrb[0].mxu0
      %3635 = vmatprep.mubr.f32.mxu0 0.0
      %3636 = vmatmul.mubr.f32.gmra.mrb[0].mxu0 %v3442
      %v3637 = vpop.f32.mrb[0].mxu0
      %v3638 = vadd.f32 0.0, %v3637
      %v3639 = vpop.f32.mrb[0].mxu0
      %3640 = vmatprep.mubr.f32.mxu0 0.0
      %3641 = vmatmul.mubr.f32.gmra.mrb[0].mxu0 %v3444
      %v3642 = vpop.f32.mrb[0].mxu0
      %v3643 = vadd.f32 0.0, %v3642
      %v3644 = vpop.f32.mrb[0].mxu0
      %3645 = vmatprep.mubr.f32.mxu0 0.0
      %3646 = vmatmul.mubr.f32.gmra.mrb[0].mxu0 %v3446
      %v3647 = vpop.f32.mrb[0].mxu0
      %v3648 = vadd.f32 0.0, %v3647
      %v3649 = vpop.f32.mrb[0].mxu0
      %3650 = vmatprep.mubr.f32.mxu0 0.0
      %3651 = vmatmul.mubr.f32.gmra.mrb[0].mxu0 %v3448
      %v3652 = vpop.f32.mrb[0].mxu0
      %v3653 = vadd.f32 0.0, %v3652
      %v3654 = vpop.f32.mrb[0].mxu0
      %3655 = vmatprep.mubr.f32.mxu0 0.0
      %3656 = vmatmul.mubr.f32.gmra.mrb[0].mxu0 %v3450
      %v3657 = vpop.f32.mrb[0].mxu0
      %v3658 = vadd.f32 0.0, %v3657
      %v3659 = vpop.f32.mrb[0].mxu0
      %3660 = vmatprep.mubr.f32.mxu0 0.0
      %3661 = vmatmul.mubr.f32.gmra.mrb[0].mxu0 %v3452
      %v3662 = vpop.f32.mrb[0].mxu0
      %v3663 = vadd.f32 0.0, %v3662
      %v3664 = vpop.f32.mrb[0].mxu0
      %3665 = vmatprep.mubr.f32.mxu0 0.0
      %3666 = vmatmul.mubr.f32.gmra.mrb[0].mxu0 %v3454
      %v3667 = vpop.f32.mrb[0].mxu0
      %v3668 = vadd.f32 0.0, %v3667
      %v3669 = vpop.f32.mrb[0].mxu0
      %3670 = vmatprep.mubr.f32.mxu0 0.0
      %3671 = vmatmul.mubr.f32.gmra.mrb[0].mxu0 %v3456
      %v3672 = vpop.f32.mrb[0].mxu0
      %v3673 = vadd.f32 0.0, %v3672
      %v3674 = vpop.f32.mrb[0].mxu0
      %3675 = vmatprep.mubr.f32.mxu0 0.0
      %3676 = vmatmul.mubr.f32.gmra.mrb[0].mxu0 %v3458
      %v3677 = vpop.f32.mrb[0].mxu0
      %v3678 = vadd.f32 0.0, %v3677
      %v3679 = vpop.f32.mrb[0].mxu0
      %3680 = vmatprep.mubr.f32.mxu0 0.0
      %3681 = vmatmul.mubr.f32.gmra.mrb[0].mxu0 %v3460
      %v3682 = vpop.f32.mrb[0].mxu0
      %v3683 = vadd.f32 0.0, %v3682
      %v3684 = vpop.f32.mrb[0].mxu0
      %3685 = vmatprep.mubr.f32.mxu0 0.0
      %3686 = vmatmul.mubr.f32.gmra.mrb[0].mxu0 %v3462
      %v3687 = vpop.f32.mrb[0].mxu0
      %v3688 = vadd.f32 0.0, %v3687
      %v3689 = vpop.f32.mrb[0].mxu0
      %3690 = vmatprep.mubr.f32.mxu0 0.0
      %3691 = vmatmul.mubr.f32.gmra.mrb[0].mxu0 %v3464
      %v3692 = vpop.f32.mrb[0].mxu0
      %v3693 = vadd.f32 0.0, %v3692
      %v3694 = vpop.f32.mrb[0].mxu0
      %3695 = vmatprep.mubr.f32.mxu0 0.0
      %3696 = vmatmul.mubr.f32.gmra.mrb[0].mxu0 %v3466
      %v3697 = vpop.f32.mrb[0].mxu0
      %v3698 = vadd.f32 0.0, %v3697
      %v3699 = vpop.f32.mrb[0].mxu0
      %3700 = vmatprep.mubr.f32.mxu0 0.0
      %3701 = vmatmul.mubr.f32.gmra.mrb[0].mxu0 %v3468
      %v3702 = vpop.f32.mrb[0].mxu0
      %v3703 = vadd.f32 0.0, %v3702
      %v3704 = vpop.f32.mrb[0].mxu0
      %3705 = vmatprep.mubr.f32.mxu0 0.0
      %3706 = vmatmul.mubr.f32.gmra.mrb[0].mxu0 %v3470
      %v3707 = vpop.f32.mrb[0].mxu0
      %v3708 = vadd.f32 0.0, %v3707
      %v3709 = vpop.f32.mrb[0].mxu0
      %3710 = vmatprep.mubr.f32.mxu0 0.0
      %3711 = vmatmul.mubr.f32.gmra.mrb[0].mxu0 %v3472
      %v3712 = vpop.f32.mrb[0].mxu0
      %v3713 = vadd.f32 0.0, %v3712
      %v3714 = vpop.f32.mrb[0].mxu0
      %3715 = vmatprep.mubr.f32.mxu0 0.0
      %3716 = vmatmul.mubr.f32.gmra.mrb[0].mxu0 %v3474
      %v3717 = vpop.f32.mrb[0].mxu0
      %v3718 = vadd.f32 0.0, %v3717
      %v3719 = vpop.f32.mrb[0].mxu0
      %3720 = vmatprep.mubr.f32.mxu0 0.0
      %3721 = vmatmul.mubr.f32.gmra.mrb[0].mxu0 %v3476
      %v3722 = vpop.f32.mrb[0].mxu0
      %v3723 = vadd.f32 0.0, %v3722
      %v3724 = vpop.f32.mrb[0].mxu0
      %3725 = vdwg.mxu0
      %v3726 = vadd.f32 %v3296, %v3548
      %v3727 = vadd.f32 %v3297, %v3553
      %v3728 = vadd.f32 %v3298, %v3558
      %v3729 = vadd.f32 %v3299, %v3563
      %v3730 = vadd.f32 %v3300, %v3568
      %v3731 = vadd.f32 %v3301, %v3573
      %v3732 = vadd.f32 %v3302, %v3578
      %v3733 = vadd.f32 %v3303, %v3583
      %v3734 = vadd.f32 %v3304, %v3588
      %v3735 = vadd.f32 %v3305, %v3593
      %v3736 = vadd.f32 %v3306, %v3598
      %v3737 = vadd.f32 %v3307, %v3603
      %v3738 = vadd.f32 %v3308, %v3608
      %v3739 = vadd.f32 %v3309, %v3613
      %v3740 = vadd.f32 %v3310, %v3618
      %v3741 = vadd.f32 %v3311, %v3623
      %v3742 = vadd.f32 %v3312, %v3628
      %v3743 = vadd.f32 %v3313, %v3633
      %v3744 = vadd.f32 %v3314, %v3638
      %v3745 = vadd.f32 %v3315, %v3643
      %v3746 = vadd.f32 %v3316, %v3648
      %v3747 = vadd.f32 %v3317, %v3653
      %v3748 = vadd.f32 %v3318, %v3658
      %v3749 = vadd.f32 %v3319, %v3663
      %v3750 = vadd.f32 %v3320, %v3668
      %v3751 = vadd.f32 %v3321, %v3673
      %v3752 = vadd.f32 %v3322, %v3678
      %v3753 = vadd.f32 %v3323, %v3683
      %v3754 = vadd.f32 %v3324, %v3688
      %v3755 = vadd.f32 %v3325, %v3693
      %v3756 = vadd.f32 %v3326, %v3698
      %v3757 = vadd.f32 %v3327, %v3703
      %v3758 = vadd.f32 %v3328, %v3708
      %v3759 = vadd.f32 %v3329, %v3713
      %v3760 = vadd.f32 %v3330, %v3718
      %v3761 = vadd.f32 %v3331, %v3723
      %v3762 = vld [vmem:[%s213] sm:$0x1]
      %v3764 = vlaneseq
      %v3765 = vshrl.u32 %v3764, 7
      %v3766 = vsub.s32 0, %v3765
      %v3767 = vrot.slane %v3762, %v3766
      %v3769 = vadd.f32 %v3726, %v3767
      %v3770 = vadd.f32 %v3727, %v3767
      %v3771 = vadd.f32 %v3728, %v3767
      %v3772 = vadd.f32 %v3729, %v3767
      %v3773 = vadd.f32 %v3730, %v3767
      %v3774 = vadd.f32 %v3731, %v3767
      %v3775 = vadd.f32 %v3732, %v3767
      %v3776 = vadd.f32 %v3733, %v3767
      %v3777 = vadd.f32 %v3734, %v3767
      %v3778 = vadd.f32 %v3735, %v3767
      %v3779 = vadd.f32 %v3736, %v3767
      %v3780 = vadd.f32 %v3737, %v3767
      %v3781 = vadd.f32 %v3738, %v3767
      %v3782 = vadd.f32 %v3739, %v3767
      %v3783 = vadd.f32 %v3740, %v3767
      %v3784 = vadd.f32 %v3741, %v3767
      %v3785 = vadd.f32 %v3742, %v3767
      %v3786 = vadd.f32 %v3743, %v3767
      %v3787 = vadd.f32 %v3744, %v3767
      %v3788 = vadd.f32 %v3745, %v3767
      %v3789 = vadd.f32 %v3746, %v3767
      %v3790 = vadd.f32 %v3747, %v3767
      %v3791 = vadd.f32 %v3748, %v3767
      %v3792 = vadd.f32 %v3749, %v3767
      %v3793 = vadd.f32 %v3750, %v3767
      %v3794 = vadd.f32 %v3751, %v3767
      %v3795 = vadd.f32 %v3752, %v3767
      %v3796 = vadd.f32 %v3753, %v3767
      %v3797 = vadd.f32 %v3754, %v3767
      %v3798 = vadd.f32 %v3755, %v3767
      %v3799 = vadd.f32 %v3756, %v3767
      %v3800 = vadd.f32 %v3757, %v3767
      %v3801 = vadd.f32 %v3758, %v3767
      %v3802 = vadd.f32 %v3759, %v3767
      %v3803 = vadd.f32 %v3760, %v3767
      %v3804 = vadd.f32 %v3761, %v3767
      %v3805 = vmax.f32 %v3769, 0.0
      %v3806 = vmax.f32 %v3770, 0.0
      %v3807 = vmax.f32 %v3771, 0.0
      %v3808 = vmax.f32 %v3772, 0.0
      %v3809 = vmax.f32 %v3773, 0.0
      %v3810 = vmax.f32 %v3774, 0.0
      %v3811 = vmax.f32 %v3775, 0.0
      %v3812 = vmax.f32 %v3776, 0.0
      %v3813 = vmax.f32 %v3777, 0.0
      %v3814 = vmax.f32 %v3778, 0.0
      %v3815 = vmax.f32 %v3779, 0.0
      %v3816 = vmax.f32 %v3780, 0.0
      %v3817 = vmax.f32 %v3781, 0.0
      %v3818 = vmax.f32 %v3782, 0.0
      %v3819 = vmax.f32 %v3783, 0.0
      %v3820 = vmax.f32 %v3784, 0.0
      %v3821 = vmax.f32 %v3785, 0.0
      %v3822 = vmax.f32 %v3786, 0.0
      %v3823 = vmax.f32 %v3787, 0.0
      %v3824 = vmax.f32 %v3788, 0.0
      %v3825 = vmax.f32 %v3789, 0.0
      %v3826 = vmax.f32 %v3790, 0.0
      %v3827 = vmax.f32 %v3791, 0.0
      %v3828 = vmax.f32 %v3792, 0.0
      %v3829 = vmax.f32 %v3793, 0.0
      %v3830 = vmax.f32 %v3794, 0.0
      %v3831 = vmax.f32 %v3795, 0.0
      %v3832 = vmax.f32 %v3796, 0.0
      %v3833 = vmax.f32 %v3797, 0.0
      %v3834 = vmax.f32 %v3798, 0.0
      %v3835 = vmax.f32 %v3799, 0.0
      %v3836 = vmax.f32 %v3800, 0.0
      %v3837 = vmax.f32 %v3801, 0.0
      %v3838 = vmax.f32 %v3802, 0.0
      %v3839 = vmax.f32 %v3803, 0.0
      %v3840 = vmax.f32 %v3804, 0.0
      %3841 = vst [vmem:[%s221] sm:$0xff] %v3805
      %3842 = vst [vmem:[%s221 + $0x8] sm:$0xff] %v3806
      %3843 = vst [vmem:[%s221 + $0x10] sm:$0xff] %v3807
      %3844 = vst [vmem:[%s221 + $0x18] sm:$0xff] %v3808
      %3845 = vst [vmem:[%s221 + $0x20] sm:$0xff] %v3809
      %3846 = vst [vmem:[%s221 + $0x28] sm:$0xff] %v3810
      %3847 = vst [vmem:[%s221 + $0x30] sm:$0xff] %v3811
      %3848 = vst [vmem:[%s221 + $0x38] sm:$0xff] %v3812
      %3849 = vst [vmem:[%s221 + $0x40] sm:$0xff] %v3813
      %3850 = vst [vmem:[%s221 + $0x48] sm:$0xff] %v3814
      %3851 = vst [vmem:[%s221 + $0x50] sm:$0xff] %v3815
      %3852 = vst [vmem:[%s221 + $0x58] sm:$0xff] %v3816
      %3853 = vst [vmem:[%s221 + $0x60] sm:$0xff] %v3817
      %3854 = vst [vmem:[%s221 + $0x68] sm:$0xff] %v3818
      %3855 = vst [vmem:[%s221 + $0x70] sm:$0xff] %v3819
      %3856 = vst [vmem:[%s221 + $0x78] sm:$0xff] %v3820
      %3857 = vst [vmem:[%s221 + $0x80] sm:$0xff] %v3821
      %3858 = vst [vmem:[%s221 + $0x88] sm:$0xff] %v3822
      %3859 = vst [vmem:[%s221 + $0x90] sm:$0xff] %v3823
      %3860 = vst [vmem:[%s221 + $0x98] sm:$0xff] %v3824
      %3861 = vst [vmem:[%s221 + $0xa0] sm:$0xff] %v3825
      %3862 = vst [vmem:[%s221 + $0xa8] sm:$0xff] %v3826
      %3863 = vst [vmem:[%s221 + $0xb0] sm:$0xff] %v3827
      %3864 = vst [vmem:[%s221 + $0xb8] sm:$0xff] %v3828
      %3865 = vst [vmem:[%s221 + $0xc0] sm:$0xff] %v3829
      %3866 = vst [vmem:[%s221 + $0xc8] sm:$0xff] %v3830
      %3867 = vst [vmem:[%s221 + $0xd0] sm:$0xff] %v3831
      %3868 = vst [vmem:[%s221 + $0xd8] sm:$0xff] %v3832
      %3869 = vst [vmem:[%s221 + $0xe0] sm:$0xff] %v3833
      %3870 = vst [vmem:[%s221 + $0xe8] sm:$0xff] %v3834
      %3871 = vst [vmem:[%s221 + $0xf0] sm:$0xff] %v3835
      %3872 = vst [vmem:[%s221 + $0xf8] sm:$0xff] %v3836
      %3873 = vst [vmem:[%s221 + $0x100] sm:$0xff] %v3837
      %3874 = vst [vmem:[%s221 + $0x108] sm:$0xff] %v3838
      %3875 = vst [vmem:[%s221 + $0x110] sm:$0xff] %v3839
      %3876 = vst [vmem:[%s221 + $0x118] sm:$0xff] %v3840
      %p3877 = scmp.lt.s32.totalorder %s19, 1
      %s3878 = scalar_select %p3877, %s19, 1
      %p3879 = scmp.lt.s32.totalorder %s18, 0
      %s3880 = scalar_select %p3879, %s18, 0
      %s3881 = smul.addr %s3878, 36
      %s3882 = sadd.s32 %s3880, %s3881
      %s3883 = smul.addr %s3882, 8
      %s3884 = scalar_lea.vmem %s3, %s3883
      // Predicated region
      $region33: #{_block_forward_nhwc.1} parent=31 // pred_check
        %p3885 = pneg %p124
      $region34: #{_block_forward_nhwc.1} parent=31 // pred_check_branch
        %3887 = sbr.rel (%p3885) target = $region36
      $region35: #{_block_forward_nhwc.1} parent=31 // pred_region
        _
      $region36: #{_block_forward_nhwc.1} parent=31 // pred_fallthru
        _
    $region32: #{_block_forward_nhwc.1} parent=5 // pred_fallthru
      _
    %p3888 = scmp.le.s32.totalorder 2, %s9
    // Predicated region
    $region37: #{_block_forward_nhwc.1} parent=5 // pred_check
      %p3889 = pneg %p3888
    $region38: #{_block_forward_nhwc.1} parent=5 // pred_check_branch
      %3891 = sbr.rel (%p3889) target = $region40
    $region39: #{_block_forward_nhwc.1} parent=5 // pred_region
      %s3892 = ssub.s32 %s9, 2
      // Predicated region
      $region41: #{_block_forward_nhwc.1} parent=39 // pred_check
        %p3893 = pneg %p130
      $region42: #{_block_forward_nhwc.1} parent=39 // pred_check_branch
        %3895 = sbr.rel (%p3893) target = $region44
      $region43: #{_block_forward_nhwc.1} parent=39 // pred_region
        %p3896 = scmp.lt.s32.totalorder %s21, 1
        %s3897 = scalar_select %p3896, %s21, 1
        %p3898 = scmp.lt.s32.totalorder %s20, 0
        %s3899 = scalar_select %p3898, %s20, 0
        %s3900 = smul.addr %s3897, 36
        %s3901 = sadd.s32 %s3899, %s3900
        %s3902 = smul.addr %s3901, 8
        %s3903 = scalar_lea.vmem %s3, %s3902
      $region44: #{_block_forward_nhwc.1} parent=39 // pred_fallthru
        _
    $region40: #{_block_forward_nhwc.1} parent=5 // pred_fallthru
      _
  $region6: #{_block_forward_nhwc.1} parent=0 // loop_footer
    %s13 = sadd.s32 1, %s9
  $region7: #{_block_forward_nhwc.1} parent=0 // loop_footer_branch
    %8 = sbr.rel target = $region3
  $region8: #{_block_forward_nhwc.1} parent=0 // loop_exit
    _

</llo_original>
